<compile_context>
chip_gen: v7x
topology: tpu7x:2x2x1
jax: 0.10.0
libtpu: 0.0.40
codegen_flags: <defaults>
</compile_context>

<pallas_src>
import jax
import jax.numpy as jnp
from jax.experimental import pallas as pl
from jax.experimental.pallas import tpu as pltpu


# ---------------------------------------------------------------------------
# Kernel
# ---------------------------------------------------------------------------
def _upsample_conv_kernel(body_ref, halo_ref, w_ref, b_ref, o_ref,
                          xwin_ref, acc0_ref, acc1_ref):
    """One (batch n, row-tile t) grid step.

    body_ref : (1, TH, W+2, C)    padded-original rows [t*TH, t*TH + TH)
    halo_ref : (1, 2,  W+2, C)    padded-original rows [t*TH + TH, t*TH + TH + 2)
    w_ref    : (18, C, 2C)        folded weights, index dy*9 + r0*3 + c0
    b_ref    : (1, 2C)            bias tiled over the two dx phases (f32)
    o_ref    : (1, TH, 2, W, 2C)  output tile, (dy, j, dx*C + c) minor layout
    xwin_ref : (TH+2, W+2, C)     VMEM scratch: halo'd input window
    acc*_ref : (TH*W, 2C) f32     VMEM scratch accumulators for dy = 0 / 1
    """
    TH, Wp, C = body_ref.shape[1], body_ref.shape[2], body_ref.shape[3]
    W = Wp - 2
    cdt = w_ref.dtype  # matmul compute dtype (f32, or bf16 on v6e/v7x)

    # Assemble the halo'd window once; the 9 shifted taps below are just small
    # slices of this single VMEM buffer (no full-image shifted copies).
    xwin_ref[0:TH] = body_ref[0]
    xwin_ref[TH:TH + 2] = halo_ref[0]

    # Accumulators live in VMEM scratch; initialise with the bias.
    bias_init = jnp.broadcast_to(b_ref[...], (TH * W, 2 * C)).astype(jnp.float32)
    acc0_ref[...] = bias_init
    acc1_ref[...] = bias_init

    # Subpixel identity: output phase (dy, dx) is a 2x2 conv on the original
    # image.  Tap slab (r0, c0) of the window feeds the dy=0 accumulator when
    # r0 in {0, 1} and the dy=1 accumulator when r0 in {1, 2}; each matmul's
    # (C, 2C) weight covers both dx phases at once -> 9 slabs, 12 matmuls.
    for r0 in range(3):
        for c0 in range(3):
            slab = xwin_ref[r0:r0 + TH, c0:c0 + W, :]
            slab = slab.reshape(TH * W, C).astype(cdt)
            if r0 <= 1:
                acc0_ref[...] += jnp.dot(slab, w_ref[r0 * 3 + c0],
                                         preferred_element_type=jnp.float32)
            if r0 >= 1:
                acc1_ref[...] += jnp.dot(slab, w_ref[9 + r0 * 3 + c0],
                                         preferred_element_type=jnp.float32)

    # One store per dy phase, already in final NHWC memory order.
    o_ref[0, :, 0, :, :] = acc0_ref[...].reshape(TH, W, 2 * C).astype(o_ref.dtype)
    o_ref[0, :, 1, :, :] = acc1_ref[...].reshape(TH, W, 2 * C).astype(o_ref.dtype)


# ---------------------------------------------------------------------------
# Weight folding (wrapper-side, negligible cost)
# ---------------------------------------------------------------------------
def _fold_weights(w_oihw):
    """PyTorch OIHW 3x3 conv weights -> 18 matrices of shape (Cin, 2*Cout).

    Matrix dy*9 + r0*3 + c0 maps tap slab (r0, c0) of the zero-padded ORIGINAL
    image to the (dx=0 | dx=1) halves of output row-phase dy.
    """
    c_out, c_in = w_oihw.shape[0], w_oihw.shape[1]
    w = jnp.transpose(w_oihw, (2, 3, 1, 0))            # (3, 3, Cin, Cout) HWIO
    zeros = jnp.zeros((c_in, c_out), w.dtype)

    # Collapse the 3x3 taps (on the upsampled image) into per-phase 2x2 taps
    # (on the original image):  a = floor((d + k - 1) / 2) - d + 1.
    K = {}
    for dy in range(2):
        for dx in range(2):
            acc = [[zeros, zeros], [zeros, zeros]]
            for ky in range(3):
                a = (dy + ky - 1) // 2 - dy + 1
                for kx in range(3):
                    b = (dx + kx - 1) // 2 - dx + 1
                    acc[a][b] = acc[a][b] + w[ky, kx]
            K[(dy, dx)] = acc

    mats = []
    for dy in range(2):
        for r0 in range(3):
            for c0 in range(3):
                halves = []
                for dx in range(2):
                    a, b = r0 - dy, c0 - dx
                    ok = (0 <= a <= 1) and (0 <= b <= 1)
                    halves.append(K[(dy, dx)][a][b] if ok else zeros)
                mats.append(jnp.concatenate(halves, axis=1))    # (Cin, 2*Cout)
    return jnp.stack(mats, axis=0)                              # (18, Cin, 2*Cout)


# ---------------------------------------------------------------------------
# Tile-size heuristic (VMEM-safe on v5e / v6e / v7x)
# ---------------------------------------------------------------------------
def _pick_tile_rows(H, W, C, itemsize):
    """Largest even divisor of H whose per-step working set fits a conservative
    VMEM budget, preferring >= 2 row tiles so the grid pipelines and can be
    sharded across TensorCores."""
    budget = 8 * 1024 * 1024   # well below the scoped-VMEM limit on every gen

    def step_bytes(th):
        body = th * (W + 2) * C * itemsize
        halo = 2 * (W + 2) * C * itemsize
        out = th * 2 * W * 2 * C * itemsize
        win = (th + 2) * (W + 2) * C * itemsize
        acc = 2 * th * W * 2 * C * 4
        return 2 * (body + halo + out) + win + acc    # double-buffered io + scratch

    cands = [d for d in range(H, 0, -1) if H % d == 0 and d % 2 == 0]
    for th in cands:
        if th > max(8, H // 2):     # keep at least two row tiles when possible
            continue
        if step_bytes(th) <= budget:
            return th
    return cands[-1]


# ---------------------------------------------------------------------------
# Wrapper
# ---------------------------------------------------------------------------
def upsample_forward(x_nchw, w_oihw, bias, *, compute_dtype=None):
    """nearest-2x upsample + Conv2d(C, C, 3, padding=1); NCHW in / NCHW out.

    x_nchw: (N, C, H, W)   w_oihw: (C, C, 3, 3) (PyTorch layout)   bias: (C,)
    compute_dtype: optional matmul dtype (e.g. jnp.bfloat16 on v6e/v7x for
        large C); accumulation is always f32.
    """
    N, C, H, W = x_nchw.shape
    if H % 2 != 0:
        raise ValueError("upsample_forward requires an even input height")

    # NCHW -> NHWC on the small ORIGINAL image + 1-px zero halo.  This replaces
    # the previous repeat()+pad() of the 2x-upsampled image (~4x less HBM
    # traffic feeding the kernel); the zero halo reproduces the conv's
    # padding=1 on the UPSAMPLED image exactly.
    x_nhwc = jnp.transpose(x_nchw, (0, 2, 3, 1))
    xp = jnp.pad(x_nhwc, ((0, 0), (1, 1), (1, 1), (0, 0)))

    wk = _fold_weights(w_oihw)                        # (18, C, 2C)
    if compute_dtype is not None:
        wk = wk.astype(compute_dtype)
    b2 = jnp.concatenate([bias, bias]).reshape(1, 2 * C).astype(jnp.float32)

    TH = _pick_tile_rows(H, W, C, x_nchw.dtype.itemsize)
    T = H // TH
    Wp = W + 2

    grid_spec = pltpu.PrefetchScalarGridSpec(
        num_scalar_prefetch=0,
        grid=(N, T),
        in_specs=[
            # Body rows of the halo'd window: padded rows [t*TH, t*TH + TH).
            pl.BlockSpec((1, TH, Wp, C), lambda n, t: (n, t, 0, 0)),
            # 2-row halo: padded rows [t*TH + TH, t*TH + TH + 2).
            pl.BlockSpec((1, 2, Wp, C),
                         lambda n, t: (n, (t + 1) * (TH // 2), 0, 0)),
            pl.BlockSpec((18, C, 2 * C), lambda n, t: (0, 0, 0)),
            pl.BlockSpec((1, 2 * C), lambda n, t: (0, 0)),
        ],
        # Output viewed as (N, H, dy, W, dx*C + c): a free reshape of NHWC.
        out_specs=pl.BlockSpec((1, TH, 2, W, 2 * C),
                               lambda n, t: (n, t, 0, 0, 0)),
        scratch_shapes=[
            pltpu.VMEM((TH + 2, Wp, C), x_nchw.dtype),
            pltpu.VMEM((TH * W, 2 * C), jnp.float32),
            pltpu.VMEM((TH * W, 2 * C), jnp.float32),
        ],
    )

    cost = pl.CostEstimate(
        flops=2 * 12 * H * W * C * 2 * C * N,
        transcendentals=0,
        bytes_accessed=(xp.size + wk.size + N * 4 * H * W * C)
        * x_nchw.dtype.itemsize,
    )

    out = pl.pallas_call(
        _upsample_conv_kernel,
        out_shape=jax.ShapeDtypeStruct((N, H, 2, W, 2 * C), x_nchw.dtype),
        grid_spec=grid_spec,
        compiler_params=pltpu.CompilerParams(
            dimension_semantics=("parallel", "parallel"),
            vmem_limit_bytes=32 * 1024 * 1024,
        ),
        cost_estimate=cost,
    )(xp, xp, wk, b2)

    out_nhwc = out.reshape(N, 2 * H, 2 * W, C)        # contiguous view, free
    # NOTE: if the surrounding model keeps NHWC, this transpose (and the input
    # one above) disappears entirely.
    return jnp.transpose(out_nhwc, (0, 3, 1, 2))


# ---------------------------------------------------------------------------
# Pure-JAX reference (PyTorch semantics) and self-test
# ---------------------------------------------------------------------------
def _reference(x_nchw, w_oihw, bias):
    """F.interpolate(scale_factor=2, mode='nearest') + Conv2d(3x3, padding=1)."""
    up = jnp.repeat(jnp.repeat(x_nchw, 2, axis=2), 2, axis=3)
    out = jax.lax.conv_general_dilated(
        up, w_oihw, window_strides=(1, 1), padding=((1, 1), (1, 1)),
        dimension_numbers=("NCHW", "OIHW", "NCHW"),
        precision=jax.lax.Precision.HIGHEST)
    return out + bias[None, :, None, None]


if __name__ == "__main__":
    key = jax.random.PRNGKey(0)
    k_x, k_w, k_b = jax.random.split(key, 3)

    N, C, H, W = 2, 4, 16, 16
    x = jax.random.normal(k_x, (N, C, H, W), dtype=jnp.float32)

    # PyTorch-style Conv2d(C, C, 3, padding=1) init, kept in OIHW layout.
    fan_in = C * 3 * 3
    bound = 1.0 / (fan_in ** 0.5)
    w = jax.random.uniform(k_w, (C, C, 3, 3), jnp.float32, -bound, bound)
    b = jax.random.uniform(k_b, (C,), jnp.float32, -bound, bound)

    fwd = jax.jit(upsample_forward)
    out = jax.block_until_ready(fwd(x, w, b))
    assert out.shape == (N, C, 2 * H, 2 * W), out.shape

    ref = jax.block_until_ready(_reference(x, w, b))
    max_err = float(jnp.max(jnp.abs(out - ref)))
    assert max_err < 1e-4, max_err

    print("KERNEL_OK")
</pallas_src>

<mosaic_0001>
module attributes {stable_mosaic.version = 11 : i64} {
  func.func @_upsample_conv_kernel(%arg0: i32, %arg1: i32, %arg2: memref<1x8x18x4xf32, #tpu.memory_space<vmem>>, %arg3: memref<1x2x18x4xf32, #tpu.memory_space<vmem>>, %arg4: memref<18x4x8xf32, #tpu.memory_space<vmem>>, %arg5: memref<1x8xf32, #tpu.memory_space<vmem>>, %arg6: memref<1x8x2x16x8xf32, #tpu.memory_space<vmem>>, %arg7: memref<10x18x4xf32, #tpu.memory_space<vmem>>, %arg8: memref<128x8xf32, #tpu.memory_space<vmem>>, %arg9: memref<128x8xf32, #tpu.memory_space<vmem>>) attributes {dimension_semantics = [#tpu.dimension_semantics<parallel>, #tpu.dimension_semantics<parallel>], iteration_bounds = array<i64: 2, 2>, scalar_prefetch = 0 : i64, scratch_operands = 3 : i64, tpu.core_type = #tpu.core_type<tc>, window_params = [{transform_indices = @transform_0, window_bounds = array<i64: 1, 8, 18, 4>}, {transform_indices = @transform_1, window_bounds = array<i64: 1, 2, 18, 4>}, {pipeline_mode = #tpu.pipeline_mode<synchronous>, transform_indices = @transform_2, window_bounds = array<i64: 18, 4, 8>}, {pipeline_mode = #tpu.pipeline_mode<synchronous>, transform_indices = @transform_3, window_bounds = array<i64: 1, 8>}, {transform_indices = @transform_4, window_bounds = array<i64: 1, 8, 2, 16, 8>}]} {
    %c0 = arith.constant 0 : index
    %c0_0 = arith.constant 0 : index
    %c0_1 = arith.constant 0 : index
    %c0_2 = arith.constant 0 : index
    %0 = vector.load %arg2[%c0, %c0_0, %c0_1, %c0_2] : memref<1x8x18x4xf32, #tpu.memory_space<vmem>>, vector<1x8x18x4xf32>
    %1 = vector.shape_cast %0 : vector<1x8x18x4xf32> to vector<8x18x4xf32>
    %c0_3 = arith.constant 0 : index
    %c0_4 = arith.constant 0 : index
    %c0_5 = arith.constant 0 : index
    %2 = vector.load %arg7[%c0_3, %c0_4, %c0_5] : memref<10x18x4xf32, #tpu.memory_space<vmem>>, vector<8x18x4xf32>
    tpu.vector_store %arg7[%c0_3, %c0_4, %c0_5], %1 {strides = array<i32>} : memref<10x18x4xf32, #tpu.memory_space<vmem>>, vector<8x18x4xf32>,
    %c0_6 = arith.constant 0 : index
    %c0_7 = arith.constant 0 : index
    %c0_8 = arith.constant 0 : index
    %c0_9 = arith.constant 0 : index
    %3 = vector.load %arg3[%c0_6, %c0_7, %c0_8, %c0_9] : memref<1x2x18x4xf32, #tpu.memory_space<vmem>>, vector<1x2x18x4xf32>
    %4 = vector.shape_cast %3 : vector<1x2x18x4xf32> to vector<2x18x4xf32>
    %c8 = arith.constant 8 : index
    %c0_10 = arith.constant 0 : index
    %c0_11 = arith.constant 0 : index
    %5 = vector.load %arg7[%c8, %c0_10, %c0_11] : memref<10x18x4xf32, #tpu.memory_space<vmem>>, vector<2x18x4xf32>
    tpu.vector_store %arg7[%c8, %c0_10, %c0_11], %4 {strides = array<i32>} : memref<10x18x4xf32, #tpu.memory_space<vmem>>, vector<2x18x4xf32>,
    %c0_12 = arith.constant 0 : index
    %c0_13 = arith.constant 0 : index
    %6 = vector.load %arg5[%c0_12, %c0_13] : memref<1x8xf32, #tpu.memory_space<vmem>>, vector<1x8xf32>
    %7 = vector.shape_cast %6 : vector<1x8xf32> to vector<1x8xf32>
    %8 = vector.broadcast %7 : vector<1x8xf32> to vector<128x8xf32>
    %c0_14 = arith.constant 0 : index
    %c0_15 = arith.constant 0 : index
    %9 = vector.load %arg8[%c0_14, %c0_15] : memref<128x8xf32, #tpu.memory_space<vmem>>, vector<128x8xf32>
    tpu.vector_store %arg8[%c0_14, %c0_15], %8 {strides = array<i32>} : memref<128x8xf32, #tpu.memory_space<vmem>>, vector<128x8xf32>,
    %c0_16 = arith.constant 0 : index
    %c0_17 = arith.constant 0 : index
    %10 = vector.load %arg9[%c0_16, %c0_17] : memref<128x8xf32, #tpu.memory_space<vmem>>, vector<128x8xf32>
    tpu.vector_store %arg9[%c0_16, %c0_17], %8 {strides = array<i32>} : memref<128x8xf32, #tpu.memory_space<vmem>>, vector<128x8xf32>,
    %c0_18 = arith.constant 0 : index
    %c0_19 = arith.constant 0 : index
    %c0_20 = arith.constant 0 : index
    %11 = vector.load %arg7[%c0_18, %c0_19, %c0_20] : memref<10x18x4xf32, #tpu.memory_space<vmem>>, vector<8x16x4xf32>
    %12 = vector.shape_cast %11 : vector<8x16x4xf32> to vector<128x4xf32>
    %c0_21 = arith.constant 0 : index
    %c0_22 = arith.constant 0 : index
    %13 = vector.load %arg8[%c0_21, %c0_22] : memref<128x8xf32, #tpu.memory_space<vmem>>, vector<128x8xf32>
    %c0_23 = arith.constant 0 : index
    %c0_24 = arith.constant 0 : index
    %c0_25 = arith.constant 0 : index
    %14 = vector.load %arg4[%c0_23, %c0_24, %c0_25] : memref<18x4x8xf32, #tpu.memory_space<vmem>>, vector<1x4x8xf32>
    %15 = vector.shape_cast %14 : vector<1x4x8xf32> to vector<4x8xf32>
    %cst = arith.constant dense<0.000000e+00> : vector<128x8xf32>
    %16 = tpu.matmul %12, %15, %cst {dimension_numbers = #tpu.dot_dimension_numbers<[1], [0], [0], [1], [0, 0, 1, 1], [], []>} : vector<128x4xf32>, vector<4x8xf32>, vector<128x8xf32> -> vector<128x8xf32>
    %17 = arith.addf %13, %16 : vector<128x8xf32>
    %c0_26 = arith.constant 0 : index
    %c0_27 = arith.constant 0 : index
    %18 = vector.load %arg8[%c0_26, %c0_27] : memref<128x8xf32, #tpu.memory_space<vmem>>, vector<128x8xf32>
    tpu.vector_store %arg8[%c0_26, %c0_27], %17 {strides = array<i32>} : memref<128x8xf32, #tpu.memory_space<vmem>>, vector<128x8xf32>,
    %c0_28 = arith.constant 0 : index
    %c1 = arith.constant 1 : index
    %c0_29 = arith.constant 0 : index
    %19 = vector.load %arg7[%c0_28, %c1, %c0_29] : memref<10x18x4xf32, #tpu.memory_space<vmem>>, vector<8x16x4xf32>
    %20 = vector.shape_cast %19 : vector<8x16x4xf32> to vector<128x4xf32>
    %c0_30 = arith.constant 0 : index
    %c0_31 = arith.constant 0 : index
    %21 = vector.load %arg8[%c0_30, %c0_31] : memref<128x8xf32, #tpu.memory_space<vmem>>, vector<128x8xf32>
    %c1_32 = arith.constant 1 : index
    %c0_33 = arith.constant 0 : index
    %c0_34 = arith.constant 0 : index
    %22 = vector.load %arg4[%c1_32, %c0_33, %c0_34] : memref<18x4x8xf32, #tpu.memory_space<vmem>>, vector<1x4x8xf32>
    %23 = vector.shape_cast %22 : vector<1x4x8xf32> to vector<4x8xf32>
    %cst_35 = arith.constant dense<0.000000e+00> : vector<128x8xf32>
    %24 = tpu.matmul %20, %23, %cst_35 {dimension_numbers = #tpu.dot_dimension_numbers<[1], [0], [0], [1], [0, 0, 1, 1], [], []>} : vector<128x4xf32>, vector<4x8xf32>, vector<128x8xf32> -> vector<128x8xf32>
    %25 = arith.addf %21, %24 : vector<128x8xf32>
    %c0_36 = arith.constant 0 : index
    %c0_37 = arith.constant 0 : index
    %26 = vector.load %arg8[%c0_36, %c0_37] : memref<128x8xf32, #tpu.memory_space<vmem>>, vector<128x8xf32>
    tpu.vector_store %arg8[%c0_36, %c0_37], %25 {strides = array<i32>} : memref<128x8xf32, #tpu.memory_space<vmem>>, vector<128x8xf32>,
    %c0_38 = arith.constant 0 : index
    %c2 = arith.constant 2 : index
    %c0_39 = arith.constant 0 : index
    %27 = vector.load %arg7[%c0_38, %c2, %c0_39] : memref<10x18x4xf32, #tpu.memory_space<vmem>>, vector<8x16x4xf32>
    %28 = vector.shape_cast %27 : vector<8x16x4xf32> to vector<128x4xf32>
    %c0_40 = arith.constant 0 : index
    %c0_41 = arith.constant 0 : index
    %29 = vector.load %arg8[%c0_40, %c0_41] : memref<128x8xf32, #tpu.memory_space<vmem>>, vector<128x8xf32>
    %c2_42 = arith.constant 2 : index
    %c0_43 = arith.constant 0 : index
    %c0_44 = arith.constant 0 : index
    %30 = vector.load %arg4[%c2_42, %c0_43, %c0_44] : memref<18x4x8xf32, #tpu.memory_space<vmem>>, vector<1x4x8xf32>
    %31 = vector.shape_cast %30 : vector<1x4x8xf32> to vector<4x8xf32>
    %cst_45 = arith.constant dense<0.000000e+00> : vector<128x8xf32>
    %32 = tpu.matmul %28, %31, %cst_45 {dimension_numbers = #tpu.dot_dimension_numbers<[1], [0], [0], [1], [0, 0, 1, 1], [], []>} : vector<128x4xf32>, vector<4x8xf32>, vector<128x8xf32> -> vector<128x8xf32>
    %33 = arith.addf %29, %32 : vector<128x8xf32>
    %c0_46 = arith.constant 0 : index
    %c0_47 = arith.constant 0 : index
    %34 = vector.load %arg8[%c0_46, %c0_47] : memref<128x8xf32, #tpu.memory_space<vmem>>, vector<128x8xf32>
    tpu.vector_store %arg8[%c0_46, %c0_47], %33 {strides = array<i32>} : memref<128x8xf32, #tpu.memory_space<vmem>>, vector<128x8xf32>,
    %c1_48 = arith.constant 1 : index
    %c0_49 = arith.constant 0 : index
    %c0_50 = arith.constant 0 : index
    %35 = vector.load %arg7[%c1_48, %c0_49, %c0_50] : memref<10x18x4xf32, #tpu.memory_space<vmem>>, vector<8x16x4xf32>
    %36 = vector.shape_cast %35 : vector<8x16x4xf32> to vector<128x4xf32>
    %c0_51 = arith.constant 0 : index
    %c0_52 = arith.constant 0 : index
    %37 = vector.load %arg8[%c0_51, %c0_52] : memref<128x8xf32, #tpu.memory_space<vmem>>, vector<128x8xf32>
    %c3 = arith.constant 3 : index
    %c0_53 = arith.constant 0 : index
    %c0_54 = arith.constant 0 : index
    %38 = vector.load %arg4[%c3, %c0_53, %c0_54] : memref<18x4x8xf32, #tpu.memory_space<vmem>>, vector<1x4x8xf32>
    %39 = vector.shape_cast %38 : vector<1x4x8xf32> to vector<4x8xf32>
    %cst_55 = arith.constant dense<0.000000e+00> : vector<128x8xf32>
    %40 = tpu.matmul %36, %39, %cst_55 {dimension_numbers = #tpu.dot_dimension_numbers<[1], [0], [0], [1], [0, 0, 1, 1], [], []>} : vector<128x4xf32>, vector<4x8xf32>, vector<128x8xf32> -> vector<128x8xf32>
    %41 = arith.addf %37, %40 : vector<128x8xf32>
    %c0_56 = arith.constant 0 : index
    %c0_57 = arith.constant 0 : index
    %42 = vector.load %arg8[%c0_56, %c0_57] : memref<128x8xf32, #tpu.memory_space<vmem>>, vector<128x8xf32>
    tpu.vector_store %arg8[%c0_56, %c0_57], %41 {strides = array<i32>} : memref<128x8xf32, #tpu.memory_space<vmem>>, vector<128x8xf32>,
    %c0_58 = arith.constant 0 : index
    %c0_59 = arith.constant 0 : index
    %43 = vector.load %arg9[%c0_58, %c0_59] : memref<128x8xf32, #tpu.memory_space<vmem>>, vector<128x8xf32>
    %c12 = arith.constant 12 : index
    %c0_60 = arith.constant 0 : index
    %c0_61 = arith.constant 0 : index
    %44 = vector.load %arg4[%c12, %c0_60, %c0_61] : memref<18x4x8xf32, #tpu.memory_space<vmem>>, vector<1x4x8xf32>
    %45 = vector.shape_cast %44 : vector<1x4x8xf32> to vector<4x8xf32>
    %cst_62 = arith.constant dense<0.000000e+00> : vector<128x8xf32>
    %46 = tpu.matmul %36, %45, %cst_62 {dimension_numbers = #tpu.dot_dimension_numbers<[1], [0], [0], [1], [0, 0, 1, 1], [], []>} : vector<128x4xf32>, vector<4x8xf32>, vector<128x8xf32> -> vector<128x8xf32>
    %47 = arith.addf %43, %46 : vector<128x8xf32>
    %c0_63 = arith.constant 0 : index
    %c0_64 = arith.constant 0 : index
    %48 = vector.load %arg9[%c0_63, %c0_64] : memref<128x8xf32, #tpu.memory_space<vmem>>, vector<128x8xf32>
    tpu.vector_store %arg9[%c0_63, %c0_64], %47 {strides = array<i32>} : memref<128x8xf32, #tpu.memory_space<vmem>>, vector<128x8xf32>,
    %c1_65 = arith.constant 1 : index
    %c1_66 = arith.constant 1 : index
    %c0_67 = arith.constant 0 : index
    %49 = vector.load %arg7[%c1_65, %c1_66, %c0_67] : memref<10x18x4xf32, #tpu.memory_space<vmem>>, vector<8x16x4xf32>
    %50 = vector.shape_cast %49 : vector<8x16x4xf32> to vector<128x4xf32>
    %c0_68 = arith.constant 0 : index
    %c0_69 = arith.constant 0 : index
    %51 = vector.load %arg8[%c0_68, %c0_69] : memref<128x8xf32, #tpu.memory_space<vmem>>, vector<128x8xf32>
    %c4 = arith.constant 4 : index
    %c0_70 = arith.constant 0 : index
    %c0_71 = arith.constant 0 : index
    %52 = vector.load %arg4[%c4, %c0_70, %c0_71] : memref<18x4x8xf32, #tpu.memory_space<vmem>>, vector<1x4x8xf32>
    %53 = vector.shape_cast %52 : vector<1x4x8xf32> to vector<4x8xf32>
    %cst_72 = arith.constant dense<0.000000e+00> : vector<128x8xf32>
    %54 = tpu.matmul %50, %53, %cst_72 {dimension_numbers = #tpu.dot_dimension_numbers<[1], [0], [0], [1], [0, 0, 1, 1], [], []>} : vector<128x4xf32>, vector<4x8xf32>, vector<128x8xf32> -> vector<128x8xf32>
    %55 = arith.addf %51, %54 : vector<128x8xf32>
    %c0_73 = arith.constant 0 : index
    %c0_74 = arith.constant 0 : index
    %56 = vector.load %arg8[%c0_73, %c0_74] : memref<128x8xf32, #tpu.memory_space<vmem>>, vector<128x8xf32>
    tpu.vector_store %arg8[%c0_73, %c0_74], %55 {strides = array<i32>} : memref<128x8xf32, #tpu.memory_space<vmem>>, vector<128x8xf32>,
    %c0_75 = arith.constant 0 : index
    %c0_76 = arith.constant 0 : index
    %57 = vector.load %arg9[%c0_75, %c0_76] : memref<128x8xf32, #tpu.memory_space<vmem>>, vector<128x8xf32>
    %c13 = arith.constant 13 : index
    %c0_77 = arith.constant 0 : index
    %c0_78 = arith.constant 0 : index
    %58 = vector.load %arg4[%c13, %c0_77, %c0_78] : memref<18x4x8xf32, #tpu.memory_space<vmem>>, vector<1x4x8xf32>
    %59 = vector.shape_cast %58 : vector<1x4x8xf32> to vector<4x8xf32>
    %cst_79 = arith.constant dense<0.000000e+00> : vector<128x8xf32>
    %60 = tpu.matmul %50, %59, %cst_79 {dimension_numbers = #tpu.dot_dimension_numbers<[1], [0], [0], [1], [0, 0, 1, 1], [], []>} : vector<128x4xf32>, vector<4x8xf32>, vector<128x8xf32> -> vector<128x8xf32>
    %61 = arith.addf %57, %60 : vector<128x8xf32>
    %c0_80 = arith.constant 0 : index
    %c0_81 = arith.constant 0 : index
    %62 = vector.load %arg9[%c0_80, %c0_81] : memref<128x8xf32, #tpu.memory_space<vmem>>, vector<128x8xf32>
    tpu.vector_store %arg9[%c0_80, %c0_81], %61 {strides = array<i32>} : memref<128x8xf32, #tpu.memory_space<vmem>>, vector<128x8xf32>,
    %c1_82 = arith.constant 1 : index
    %c2_83 = arith.constant 2 : index
    %c0_84 = arith.constant 0 : index
    %63 = vector.load %arg7[%c1_82, %c2_83, %c0_84] : memref<10x18x4xf32, #tpu.memory_space<vmem>>, vector<8x16x4xf32>
    %64 = vector.shape_cast %63 : vector<8x16x4xf32> to vector<128x4xf32>
    %c0_85 = arith.constant 0 : index
    %c0_86 = arith.constant 0 : index
    %65 = vector.load %arg8[%c0_85, %c0_86] : memref<128x8xf32, #tpu.memory_space<vmem>>, vector<128x8xf32>
    %c5 = arith.constant 5 : index
    %c0_87 = arith.constant 0 : index
    %c0_88 = arith.constant 0 : index
    %66 = vector.load %arg4[%c5, %c0_87, %c0_88] : memref<18x4x8xf32, #tpu.memory_space<vmem>>, vector<1x4x8xf32>
    %67 = vector.shape_cast %66 : vector<1x4x8xf32> to vector<4x8xf32>
    %cst_89 = arith.constant dense<0.000000e+00> : vector<128x8xf32>
    %68 = tpu.matmul %64, %67, %cst_89 {dimension_numbers = #tpu.dot_dimension_numbers<[1], [0], [0], [1], [0, 0, 1, 1], [], []>} : vector<128x4xf32>, vector<4x8xf32>, vector<128x8xf32> -> vector<128x8xf32>
    %69 = arith.addf %65, %68 : vector<128x8xf32>
    %c0_90 = arith.constant 0 : index
    %c0_91 = arith.constant 0 : index
    %70 = vector.load %arg8[%c0_90, %c0_91] : memref<128x8xf32, #tpu.memory_space<vmem>>, vector<128x8xf32>
    tpu.vector_store %arg8[%c0_90, %c0_91], %69 {strides = array<i32>} : memref<128x8xf32, #tpu.memory_space<vmem>>, vector<128x8xf32>,
    %c0_92 = arith.constant 0 : index
    %c0_93 = arith.constant 0 : index
    %71 = vector.load %arg9[%c0_92, %c0_93] : memref<128x8xf32, #tpu.memory_space<vmem>>, vector<128x8xf32>
    %c14 = arith.constant 14 : index
    %c0_94 = arith.constant 0 : index
    %c0_95 = arith.constant 0 : index
    %72 = vector.load %arg4[%c14, %c0_94, %c0_95] : memref<18x4x8xf32, #tpu.memory_space<vmem>>, vector<1x4x8xf32>
    %73 = vector.shape_cast %72 : vector<1x4x8xf32> to vector<4x8xf32>
    %cst_96 = arith.constant dense<0.000000e+00> : vector<128x8xf32>
    %74 = tpu.matmul %64, %73, %cst_96 {dimension_numbers = #tpu.dot_dimension_numbers<[1], [0], [0], [1], [0, 0, 1, 1], [], []>} : vector<128x4xf32>, vector<4x8xf32>, vector<128x8xf32> -> vector<128x8xf32>
    %75 = arith.addf %71, %74 : vector<128x8xf32>
    %c0_97 = arith.constant 0 : index
    %c0_98 = arith.constant 0 : index
    %76 = vector.load %arg9[%c0_97, %c0_98] : memref<128x8xf32, #tpu.memory_space<vmem>>, vector<128x8xf32>
    tpu.vector_store %arg9[%c0_97, %c0_98], %75 {strides = array<i32>} : memref<128x8xf32, #tpu.memory_space<vmem>>, vector<128x8xf32>,
    %c2_99 = arith.constant 2 : index
    %c0_100 = arith.constant 0 : index
    %c0_101 = arith.constant 0 : index
    %77 = vector.load %arg7[%c2_99, %c0_100, %c0_101] : memref<10x18x4xf32, #tpu.memory_space<vmem>>, vector<8x16x4xf32>
    %78 = vector.shape_cast %77 : vector<8x16x4xf32> to vector<128x4xf32>
    %c0_102 = arith.constant 0 : index
    %c0_103 = arith.constant 0 : index
    %79 = vector.load %arg9[%c0_102, %c0_103] : memref<128x8xf32, #tpu.memory_space<vmem>>, vector<128x8xf32>
    %c15 = arith.constant 15 : index
    %c0_104 = arith.constant 0 : index
    %c0_105 = arith.constant 0 : index
    %80 = vector.load %arg4[%c15, %c0_104, %c0_105] : memref<18x4x8xf32, #tpu.memory_space<vmem>>, vector<1x4x8xf32>
    %81 = vector.shape_cast %80 : vector<1x4x8xf32> to vector<4x8xf32>
    %cst_106 = arith.constant dense<0.000000e+00> : vector<128x8xf32>
    %82 = tpu.matmul %78, %81, %cst_106 {dimension_numbers = #tpu.dot_dimension_numbers<[1], [0], [0], [1], [0, 0, 1, 1], [], []>} : vector<128x4xf32>, vector<4x8xf32>, vector<128x8xf32> -> vector<128x8xf32>
    %83 = arith.addf %79, %82 : vector<128x8xf32>
    %c0_107 = arith.constant 0 : index
    %c0_108 = arith.constant 0 : index
    %84 = vector.load %arg9[%c0_107, %c0_108] : memref<128x8xf32, #tpu.memory_space<vmem>>, vector<128x8xf32>
    tpu.vector_store %arg9[%c0_107, %c0_108], %83 {strides = array<i32>} : memref<128x8xf32, #tpu.memory_space<vmem>>, vector<128x8xf32>,
    %c2_109 = arith.constant 2 : index
    %c1_110 = arith.constant 1 : index
    %c0_111 = arith.constant 0 : index
    %85 = vector.load %arg7[%c2_109, %c1_110, %c0_111] : memref<10x18x4xf32, #tpu.memory_space<vmem>>, vector<8x16x4xf32>
    %86 = vector.shape_cast %85 : vector<8x16x4xf32> to vector<128x4xf32>
    %c0_112 = arith.constant 0 : index
    %c0_113 = arith.constant 0 : index
    %87 = vector.load %arg9[%c0_112, %c0_113] : memref<128x8xf32, #tpu.memory_space<vmem>>, vector<128x8xf32>
    %c16 = arith.constant 16 : index
    %c0_114 = arith.constant 0 : index
    %c0_115 = arith.constant 0 : index
    %88 = vector.load %arg4[%c16, %c0_114, %c0_115] : memref<18x4x8xf32, #tpu.memory_space<vmem>>, vector<1x4x8xf32>
    %89 = vector.shape_cast %88 : vector<1x4x8xf32> to vector<4x8xf32>
    %cst_116 = arith.constant dense<0.000000e+00> : vector<128x8xf32>
    %90 = tpu.matmul %86, %89, %cst_116 {dimension_numbers = #tpu.dot_dimension_numbers<[1], [0], [0], [1], [0, 0, 1, 1], [], []>} : vector<128x4xf32>, vector<4x8xf32>, vector<128x8xf32> -> vector<128x8xf32>
    %91 = arith.addf %87, %90 : vector<128x8xf32>
    %c0_117 = arith.constant 0 : index
    %c0_118 = arith.constant 0 : index
    %92 = vector.load %arg9[%c0_117, %c0_118] : memref<128x8xf32, #tpu.memory_space<vmem>>, vector<128x8xf32>
    tpu.vector_store %arg9[%c0_117, %c0_118], %91 {strides = array<i32>} : memref<128x8xf32, #tpu.memory_space<vmem>>, vector<128x8xf32>,
    %c2_119 = arith.constant 2 : index
    %c2_120 = arith.constant 2 : index
    %c0_121 = arith.constant 0 : index
    %93 = vector.load %arg7[%c2_119, %c2_120, %c0_121] : memref<10x18x4xf32, #tpu.memory_space<vmem>>, vector<8x16x4xf32>
    %94 = vector.shape_cast %93 : vector<8x16x4xf32> to vector<128x4xf32>
    %c0_122 = arith.constant 0 : index
    %c0_123 = arith.constant 0 : index
    %95 = vector.load %arg9[%c0_122, %c0_123] : memref<128x8xf32, #tpu.memory_space<vmem>>, vector<128x8xf32>
    %c17 = arith.constant 17 : index
    %c0_124 = arith.constant 0 : index
    %c0_125 = arith.constant 0 : index
    %96 = vector.load %arg4[%c17, %c0_124, %c0_125] : memref<18x4x8xf32, #tpu.memory_space<vmem>>, vector<1x4x8xf32>
    %97 = vector.shape_cast %96 : vector<1x4x8xf32> to vector<4x8xf32>
    %cst_126 = arith.constant dense<0.000000e+00> : vector<128x8xf32>
    %98 = tpu.matmul %94, %97, %cst_126 {dimension_numbers = #tpu.dot_dimension_numbers<[1], [0], [0], [1], [0, 0, 1, 1], [], []>} : vector<128x4xf32>, vector<4x8xf32>, vector<128x8xf32> -> vector<128x8xf32>
    %99 = arith.addf %95, %98 : vector<128x8xf32>
    %c0_127 = arith.constant 0 : index
    %c0_128 = arith.constant 0 : index
    %100 = vector.load %arg9[%c0_127, %c0_128] : memref<128x8xf32, #tpu.memory_space<vmem>>, vector<128x8xf32>
    tpu.vector_store %arg9[%c0_127, %c0_128], %99 {strides = array<i32>} : memref<128x8xf32, #tpu.memory_space<vmem>>, vector<128x8xf32>,
    %c0_129 = arith.constant 0 : index
    %c0_130 = arith.constant 0 : index
    %101 = vector.load %arg8[%c0_129, %c0_130] : memref<128x8xf32, #tpu.memory_space<vmem>>, vector<128x8xf32>
    %102 = vector.shape_cast %101 : vector<128x8xf32> to vector<8x16x8xf32>
    %c0_131 = arith.constant 0 : index
    %c0_132 = arith.constant 0 : index
    %c0_133 = arith.constant 0 : index
    %c0_134 = arith.constant 0 : index
    %c0_135 = arith.constant 0 : index
    %103 = vector.load %arg6[%c0_131, %c0_132, %c0_133, %c0_134, %c0_135] : memref<1x8x2x16x8xf32, #tpu.memory_space<vmem>>, vector<1x8x1x16x8xf32>
    %104 = vector.shape_cast %103 : vector<1x8x1x16x8xf32> to vector<8x16x8xf32>
    %105 = vector.shape_cast %102 : vector<8x16x8xf32> to vector<1x8x1x16x8xf32>
    tpu.vector_store %arg6[%c0_131, %c0_132, %c0_133, %c0_134, %c0_135], %105 {strides = array<i32>} : memref<1x8x2x16x8xf32, #tpu.memory_space<vmem>>, vector<1x8x1x16x8xf32>,
    %c0_136 = arith.constant 0 : index
    %c0_137 = arith.constant 0 : index
    %106 = vector.load %arg9[%c0_136, %c0_137] : memref<128x8xf32, #tpu.memory_space<vmem>>, vector<128x8xf32>
    %107 = vector.shape_cast %106 : vector<128x8xf32> to vector<8x16x8xf32>
    %c0_138 = arith.constant 0 : index
    %c0_139 = arith.constant 0 : index
    %c1_140 = arith.constant 1 : index
    %c0_141 = arith.constant 0 : index
    %c0_142 = arith.constant 0 : index
    %108 = vector.load %arg6[%c0_138, %c0_139, %c1_140, %c0_141, %c0_142] : memref<1x8x2x16x8xf32, #tpu.memory_space<vmem>>, vector<1x8x1x16x8xf32>
    %109 = vector.shape_cast %108 : vector<1x8x1x16x8xf32> to vector<8x16x8xf32>
    %110 = vector.shape_cast %107 : vector<8x16x8xf32> to vector<1x8x1x16x8xf32>
    tpu.vector_store %arg6[%c0_138, %c0_139, %c1_140, %c0_141, %c0_142], %110 {strides = array<i32>} : memref<1x8x2x16x8xf32, #tpu.memory_space<vmem>>, vector<1x8x1x16x8xf32>,
    return
  }
  func.func @transform_0(%arg0: i32, %arg1: i32) -> (i32, i32, i32, i32) {
    %c0_i32 = arith.constant 0 : i32
    %c0_i32_0 = arith.constant 0 : i32
    %c0_i32_1 = arith.constant 0 : i32
    return %arg0, %arg1, %c0_i32, %c0_i32_0 : i32, i32, i32, i32
  }
  func.func @transform_1(%arg0: i32, %arg1: i32) -> (i32, i32, i32, i32) {
    %c1_i32 = arith.constant 1 : i32
    %0 = arith.addi %arg1, %c1_i32 : i32
    %c4_i32 = arith.constant 4 : i32
    %1 = arith.muli %0, %c4_i32 : i32
    %c0_i32 = arith.constant 0 : i32
    %c0_i32_0 = arith.constant 0 : i32
    %c0_i32_1 = arith.constant 0 : i32
    return %arg0, %1, %c0_i32, %c0_i32_0 : i32, i32, i32, i32
  }
  func.func @transform_2(%arg0: i32, %arg1: i32) -> (i32, i32, i32) {
    %c0_i32 = arith.constant 0 : i32
    %c0_i32_0 = arith.constant 0 : i32
    %c0_i32_1 = arith.constant 0 : i32
    %c0_i32_2 = arith.constant 0 : i32
    return %c0_i32, %c0_i32_0, %c0_i32_1 : i32, i32, i32
  }
  func.func @transform_3(%arg0: i32, %arg1: i32) -> (i32, i32) {
    %c0_i32 = arith.constant 0 : i32
    %c0_i32_0 = arith.constant 0 : i32
    %c0_i32_1 = arith.constant 0 : i32
    return %c0_i32, %c0_i32_0 : i32, i32
  }
  func.func @transform_4(%arg0: i32, %arg1: i32) -> (i32, i32, i32, i32, i32) {
    %c0_i32 = arith.constant 0 : i32
    %c0_i32_0 = arith.constant 0 : i32
    %c0_i32_1 = arith.constant 0 : i32
    %c0_i32_2 = arith.constant 0 : i32
    return %arg0, %arg1, %c0_i32, %c0_i32_0, %c0_i32_1 : i32, i32, i32, i32, i32
  }
}

</mosaic_0001>

<llo_original>
// kernel: upsample_forward.1
$region0: #{upsample_forward.1}
  #allocation0 [shape = 'u32[]', space=smem, size = 0x4, offset = 0x4, fixed_abs, tag = 'smem constant byte address 0x4 - core index']
  #allocation1 [shape = 'u32[144,128]{1,0:T(1,128)}', space=vmem, size = 0x12000, scoped, tag = 'internal scratch']
  #allocation2 [shape = 'f32[10,18,4]{2,1,0:T(8,128)}', space=vmem, size = 0x1e000, scoped, tag = 'scratch operand']
  #allocation3 [shape = 'f32[128,8]{1,0:T(8,128)}', space=vmem, size = 0x10000, scoped, tag = 'scratch operand']
  #allocation4 [shape = 'f32[128,8]{1,0:T(8,128)}', space=vmem, size = 0x10000, scoped, tag = 'scratch operand']
  %s0 = inlined_call_operand.vmem [shape: f32[2,18,18,4], index: 0, kind: input, shape index: {}, may-alias: {0,1}]
  %s1 = inlined_call_operand.vmem [shape: f32[2,18,18,4], index: 1, kind: input, shape index: {}, may-alias: {0,1}]
  %s2 = inlined_call_operand.vmem [shape: f32[18,4,8], index: 2, kind: input, shape index: {}]
  %s3 = inlined_call_operand.vmem [shape: f32[1,8], index: 3, kind: input, shape index: {}]
  %s4 = inlined_call_operand.vmem [shape: f32[2,16,2,16,8], index: 4, kind: output, shape index: {}]
  %s5 = sld [smem:[#allocation0]]
  $region49: #{upsample_forward.1} parent=0
    _
  %s7 = ssub.s32 1, %s5
  %s8 = scalar_select 0, %s7, %s5
  loop: start=0, step=1, limit=6
  $region2: #{upsample_forward.1} parent=0 // loop_pre_header
    _
  $region3: #{upsample_forward.1} parent=0 // loop_header
    %s10 = sphi 0, %s14
    %p11 = scmp.ge.s32.totalorder %s10, 6
    %s17 = sphi 0, %s29
    %s18 = sphi 0, %s25
    %s19 = sphi 0, %s17
    %s20 = sphi 0, %s18
    %s21 = sphi 0, %s19
    %s22 = sphi 0, %s20
    %s34 = sphi 0, %s36
    %s37 = sphi 0, %s34
    %s38 = sphi 0, %s37
    %s54 = sphi 0, %s38
    %s66 = sphi 0, %s68
    %s69 = sphi 0, %s66
    %s70 = sphi 0, %s69
    %s86 = sphi 0, %s70
    %s90 = sphi 0, %s90
    %s92 = sphi 0, %s90
    %s93 = sphi 0, %s92
    %s107 = sphi 0, %s93
    %s111 = sphi 0, %s111
    %s113 = sphi 0, %s111
    %s114 = sphi 0, %s113
    %s128 = sphi 0, %s114
    %s136 = sphi 0, %s138
    %s139 = sphi 0, %s136
    %s140 = sphi 0, %s139
    %s156 = sphi 0, %s140
  $region4: #{upsample_forward.1} parent=0 // loop_header_branch
    %13 = sbr.rel (%p11) target = $region8
  $region5: #{upsample_forward.1} parent=0 // loop_body
    %s15 = ssub.s32 %s10, 1
    %s16 = ssub.s32 %s10, 2
    %s23 = sadd.s32 1, %s18
    %p24 = scmp.ge.s32.totalorder %s23, 2
    %s25 = scalar_select %p24, 0, %s23
    %s26 = sadd.s32 1, %s17
    %s27 = scalar_select %p24, %s26, %s17
    %p28 = scmp.ge.s32.totalorder %s27, 2
    %s29 = scalar_select %p28, 0, %s27
    %s30 = ssub.s32 %s17, %s29
    %s31 = ssub.s32 %s18, %s25
    %s32 = sor.u32 %s30, %s31
    %p33 = scmp.eq.s32.totalorder %s32, 0
    %s35 = sadd.s32 %s34, 1
    %s36 = scalar_select %p33, %s34, %s35
    %p39 = pneg %p33
    %p40 = scmp.eq.s32.totalorder %s10, 3
    %p41 = por %p39, %p40
    %p42 = scmp.ne.s32.totalorder %s34, %s37
    %p43 = scmp.eq.s32.totalorder %s10, 0
    %p44 = por %p42, %p43
    %p45 = scmp.ne.s32.totalorder %s34, %s37
    %p46 = scmp.eq.s32.totalorder %s15, 3
    %p47 = por %p45, %p46
    %p48 = scmp.ne.s32.totalorder %s37, %s38
    %p49 = scmp.eq.s32.totalorder %s15, 0
    %p50 = por %p48, %p49
    %p51 = scmp.ne.s32.totalorder %s37, %s38
    %p52 = scmp.eq.s32.totalorder %s16, 3
    %p53 = por %p51, %p52
    %p55 = scmp.ne.s32.totalorder %s38, %s54
    %p56 = scmp.eq.s32.totalorder %s16, 0
    %p57 = por %p55, %p56
    %s58 = sadd.s32 %s18, 1
    %s59 = smul.u32 %s58, 4
    %s60 = sadd.s32 %s25, 1
    %s61 = smul.u32 %s60, 4
    %s62 = ssub.s32 %s17, %s29
    %s63 = ssub.s32 %s59, %s61
    %s64 = sor.u32 %s62, %s63
    %p65 = scmp.eq.s32.totalorder %s64, 0
    %s67 = sadd.s32 %s66, 1
    %s68 = scalar_select %p65, %s66, %s67
    %p71 = pneg %p65
    %p72 = scmp.eq.s32.totalorder %s10, 3
    %p73 = por %p71, %p72
    %p74 = scmp.ne.s32.totalorder %s66, %s69
    %p75 = scmp.eq.s32.totalorder %s10, 0
    %p76 = por %p74, %p75
    %p77 = scmp.ne.s32.totalorder %s66, %s69
    %p78 = scmp.eq.s32.totalorder %s15, 3
    %p79 = por %p77, %p78
    %p80 = scmp.ne.s32.totalorder %s69, %s70
    %p81 = scmp.eq.s32.totalorder %s15, 0
    %p82 = por %p80, %p81
    %p83 = scmp.ne.s32.totalorder %s69, %s70
    %p84 = scmp.eq.s32.totalorder %s16, 3
    %p85 = por %p83, %p84
    %p87 = scmp.ne.s32.totalorder %s70, %s86
    %p88 = scmp.eq.s32.totalorder %s16, 0
    %p89 = por %p87, %p88
    %s91 = sadd.s32 %s90, 1
    %p94 = scmp.eq.s32.totalorder %s10, 3
    %p95 = scmp.ne.s32.totalorder %s90, %s92
    %p96 = scmp.eq.s32.totalorder %s10, 0
    %p97 = por %p95, %p96
    %p98 = scmp.ne.s32.totalorder %s90, %s92
    %p99 = scmp.eq.s32.totalorder %s15, 3
    %p100 = por %p98, %p99
    %p101 = scmp.ne.s32.totalorder %s92, %s93
    %p102 = scmp.eq.s32.totalorder %s15, 0
    %p103 = por %p101, %p102
    %p104 = scmp.ne.s32.totalorder %s92, %s93
    %p105 = scmp.eq.s32.totalorder %s16, 3
    %p106 = por %p104, %p105
    %p108 = scmp.ne.s32.totalorder %s93, %s107
    %p109 = scmp.eq.s32.totalorder %s16, 0
    %p110 = por %p108, %p109
    %s112 = sadd.s32 %s111, 1
    %p115 = scmp.eq.s32.totalorder %s10, 3
    %p116 = scmp.ne.s32.totalorder %s111, %s113
    %p117 = scmp.eq.s32.totalorder %s10, 0
    %p118 = por %p116, %p117
    %p119 = scmp.ne.s32.totalorder %s111, %s113
    %p120 = scmp.eq.s32.totalorder %s15, 3
    %p121 = por %p119, %p120
    %p122 = scmp.ne.s32.totalorder %s113, %s114
    %p123 = scmp.eq.s32.totalorder %s15, 0
    %p124 = por %p122, %p123
    %p125 = scmp.ne.s32.totalorder %s113, %s114
    %p126 = scmp.eq.s32.totalorder %s16, 3
    %p127 = por %p125, %p126
    %p129 = scmp.ne.s32.totalorder %s114, %s128
    %p130 = scmp.eq.s32.totalorder %s16, 0
    %p131 = por %p129, %p130
    %s132 = ssub.s32 %s17, %s29
    %s133 = ssub.s32 %s18, %s25
    %s134 = sor.u32 %s132, %s133
    %p135 = scmp.eq.s32.totalorder %s134, 0
    %s137 = sadd.s32 %s136, 1
    %s138 = scalar_select %p135, %s136, %s137
    %p141 = pneg %p135
    %p142 = scmp.eq.s32.totalorder %s10, 3
    %p143 = por %p141, %p142
    %p144 = scmp.ne.s32.totalorder %s136, %s139
    %p145 = scmp.eq.s32.totalorder %s10, 0
    %p146 = por %p144, %p145
    %p147 = scmp.ne.s32.totalorder %s136, %s139
    %p148 = scmp.eq.s32.totalorder %s15, 3
    %p149 = por %p147, %p148
    %p150 = scmp.ne.s32.totalorder %s139, %s140
    %p151 = scmp.eq.s32.totalorder %s15, 0
    %p152 = por %p150, %p151
    %p153 = scmp.ne.s32.totalorder %s139, %s140
    %p154 = scmp.eq.s32.totalorder %s16, 3
    %p155 = por %p153, %p154
    %p157 = scmp.ne.s32.totalorder %s140, %s156
    %p158 = scmp.eq.s32.totalorder %s16, 0
    %p159 = por %p157, %p158
    %p160 = scmp.le.s32.totalorder 1, %s10
    %p161 = scmp.lt.s32.totalorder %s10, 5
    %p162 = pnand %p160, %p161
    %p163 = pneg %p162
    // Predicated region
    $region9: #{upsample_forward.1} parent=5 // pred_check
      _
    $region10: #{upsample_forward.1} parent=5 // pred_check_branch
      %165 = sbr.rel (%p162) target = $region12
    $region11: #{upsample_forward.1} parent=5 // pred_region
      %s166 = ssub.s32 %s10, 1
      // Predicated region
      $region13: #{upsample_forward.1} parent=11 // pred_check
        %p167 = pneg %p103
      $region14: #{upsample_forward.1} parent=11 // pred_check_branch
        %169 = sbr.rel (%p167) target = $region16
      $region15: #{upsample_forward.1} parent=11 // pred_region
        _
      $region16: #{upsample_forward.1} parent=11 // pred_fallthru
        _
      // Predicated region
      $region17: #{upsample_forward.1} parent=11 // pred_check
        %p170 = pneg %p124
      $region18: #{upsample_forward.1} parent=11 // pred_check_branch
        %172 = sbr.rel (%p170) target = $region20
      $region19: #{upsample_forward.1} parent=11 // pred_region
        _
      $region20: #{upsample_forward.1} parent=11 // pred_fallthru
        _
    $region12: #{upsample_forward.1} parent=5 // pred_fallthru
      _
    %p173 = scmp.lt.s32.totalorder %s10, 4
    // Predicated region
    $region21: #{upsample_forward.1} parent=5 // pred_check
      %p174 = pneg %p173
    $region22: #{upsample_forward.1} parent=5 // pred_check_branch
      %176 = sbr.rel (%p174) target = $region24
    $region23: #{upsample_forward.1} parent=5 // pred_region
      // Predicated region
      $region25: #{upsample_forward.1} parent=23 // pred_check
        %p177 = pneg %p44
      $region26: #{upsample_forward.1} parent=23 // pred_check_branch
        %179 = sbr.rel (%p177) target = $region28
      $region27: #{upsample_forward.1} parent=23 // pred_region
        %s180 = smul.u32 8, %s18
        %s181 = ssub.s32 18, %s180
        %p182 = scmp.lt.s32.totalorder %s181, 8
        %s183 = scalar_select %p182, %s181, 8
        %s184 = smul.u32 128, %s183
        %s185 = smul.u32 %s184, 3
        %p186 = scmp.lt.s32.totalorder %s17, 1
        %s187 = scalar_select %p186, %s17, 1
        %p188 = scmp.lt.s32.totalorder %s180, 17
        %s189 = scalar_select %p188, %s180, 17
        %s190 = smul.addr %s189, 3
        %s191 = smul.addr %s187, 54
        %s192 = sadd.s32 %s190, %s191
        %s193 = smul.addr %s192, 8
        %s194 = scalar_lea.vmem %s0, %s193
        %s195 = smul.u32 8, %s18
        %s196 = ssub.s32 18, %s195
        %p197 = scmp.lt.s32.totalorder %s196, 8
        %s198 = scalar_select %p197, %s196, 8
        %s199 = smul.u32 128, %s198
        %s200 = smul.u32 %s199, 3
      $region28: #{upsample_forward.1} parent=23 // pred_fallthru
        _
      // Predicated region
      $region29: #{upsample_forward.1} parent=23 // pred_check
        %p201 = pneg %p76
      $region30: #{upsample_forward.1} parent=23 // pred_check_branch
        %203 = sbr.rel (%p201) target = $region32
      $region31: #{upsample_forward.1} parent=23 // pred_region
        %s204 = sadd.s32 %s18, 1
        %s205 = smul.u32 %s204, 4
        %s206 = smul.u32 2, %s205
        %p207 = scmp.lt.s32.totalorder %s17, 1
        %s208 = scalar_select %p207, %s17, 1
        %p209 = scmp.lt.s32.totalorder %s206, 17
        %s210 = scalar_select %p209, %s206, 17
        %s211 = smul.addr %s210, 3
        %s212 = smul.addr %s208, 54
        %s213 = sadd.s32 %s211, %s212
        %s214 = smul.addr %s213, 8
        %s215 = scalar_lea.vmem %s1, %s214
        %s216 = sadd.s32 %s18, 1
        %s217 = smul.u32 %s216, 4
        %s218 = smul.u32 2, %s217
      $region32: #{upsample_forward.1} parent=23 // pred_fallthru
        _
    $region24: #{upsample_forward.1} parent=5 // pred_fallthru
      _
    %p219 = scmp.le.s32.totalorder 1, %s10
    %p220 = scmp.lt.s32.totalorder %s10, 5
    %p221 = pnand %p219, %p220
    %p222 = pneg %p221
    // Predicated region
    $region33: #{upsample_forward.1} parent=5 // pred_check
      _
    $region34: #{upsample_forward.1} parent=5 // pred_check_branch
      %224 = sbr.rel (%p221) target = $region36
    $region35: #{upsample_forward.1} parent=5 // pred_region
      %s225 = ssub.s32 %s10, 1
      %s226 = smul.u32 8, %s20
      %s227 = ssub.s32 18, %s226
      %p228 = scmp.lt.s32.totalorder %s227, 8
      %s229 = scalar_select %p228, %s227, 8
      %s230 = smul.u32 128, %s229
      %s231 = smul.u32 %s230, 3
      %p232 = scmp.lt.s32.totalorder %s19, 1
      %s233 = scalar_select %p232, %s19, 1
      %p234 = scmp.lt.s32.totalorder %s226, 17
      %s235 = scalar_select %p234, %s226, 17
      %s236 = smul.addr %s235, 3
      %s237 = smul.addr %s233, 54
      %s238 = sadd.s32 %s236, %s237
      %s239 = smul.addr %s238, 8
      %s240 = scalar_lea.vmem %s0, %s239
      %p241 = pneg %p50
      %p242 = pneg %p47
      %s243 = sadd.s32 %s20, 1
      %s244 = smul.u32 %s243, 4
      %s245 = smul.u32 2, %s244
      %p246 = scmp.lt.s32.totalorder %s19, 1
      %s247 = scalar_select %p246, %s19, 1
      %p248 = scmp.lt.s32.totalorder %s245, 17
      %s249 = scalar_select %p248, %s245, 17
      %s250 = smul.addr %s249, 3
      %s251 = smul.addr %s247, 54
      %s252 = sadd.s32 %s250, %s251
      %s253 = smul.addr %s252, 8
      %s254 = scalar_lea.vmem %s1, %s253
      %p255 = pneg %p82
      %p256 = pneg %p79
      %p257 = pneg %p103
      %p258 = pneg %p100
      %p259 = pneg %p124
      %p260 = pneg %p121
      %p261 = pneg %p152
      %p262 = pneg %p149
      %s263 = smul.u32 8, %s20
      %p264 = scmp.lt.s32.totalorder %s19, 1
      %s265 = scalar_select %p264, %s19, 1
      %p266 = scmp.lt.s32.totalorder %s263, 15
      %s267 = scalar_select %p266, %s263, 15
      %s268 = smul.addr %s267, 4
      %s269 = smul.addr %s265, 64
      %s270 = sadd.s32 %s268, %s269
      %s271 = smul.addr %s270, 8
      %s272 = scalar_lea.vmem %s4, %s271
      %s273 = smul.u32 8, %s20
      %s274 = ssub.s32 18, %s273
      %p275 = scmp.lt.s32.totalorder %s274, 8
      %s276 = scalar_select %p275, %s274, 8
      %s277 = smul.u32 128, %s276
      %s278 = smul.u32 %s277, 3
      %p279 = scmp.lt.s32.totalorder %s19, 1
      %s280 = scalar_select %p279, %s19, 1
      %p281 = scmp.lt.s32.totalorder %s273, 17
      %s282 = scalar_select %p281, %s273, 17
      %s283 = smul.addr %s282, 3
      %s284 = smul.addr %s280, 54
      %s285 = sadd.s32 %s283, %s284
      %s286 = smul.addr %s285, 8
      %s287 = scalar_lea.vmem %s0, %s286
      %s288 = smul.u32 8, %s20
      %s289 = ssub.s32 18, %s288
      %p290 = scmp.lt.s32.totalorder %s289, 8
      %s291 = scalar_select %p290, %s289, 8
      %s292 = smul.u32 128, %s291
      %s293 = smul.u32 %s292, 3
      %s294 = sadd.s32 %s20, 1
      %s295 = smul.u32 %s294, 4
      %s296 = smul.u32 2, %s295
      %p297 = scmp.lt.s32.totalorder %s19, 1
      %s298 = scalar_select %p297, %s19, 1
      %p299 = scmp.lt.s32.totalorder %s296, 17
      %s300 = scalar_select %p299, %s296, 17
      %s301 = smul.addr %s300, 3
      %s302 = smul.addr %s298, 54
      %s303 = sadd.s32 %s301, %s302
      %s304 = smul.addr %s303, 8
      %s305 = scalar_lea.vmem %s1, %s304
      %s306 = sadd.s32 %s20, 1
      %s307 = smul.u32 %s306, 4
      %s308 = smul.u32 2, %s307
      %s309 = smul.u32 8, %s20
      %p310 = scmp.lt.s32.totalorder %s19, 1
      %s311 = scalar_select %p310, %s19, 1
      %p312 = scmp.lt.s32.totalorder %s309, 15
      %s313 = scalar_select %p312, %s309, 15
      %s314 = smul.addr %s313, 4
      %s315 = smul.addr %s311, 64
      %s316 = sadd.s32 %s314, %s315
      %s317 = smul.addr %s316, 8
      %s318 = scalar_lea.vmem %s4, %s317
      %s319 = smul.u32 8, %s20
      %v320 = vld [vmem:[%s287] sm:$0xff]
      %v321 = vld [vmem:[%s287 + $0x8] sm:$0xff]
      %v322 = vld [vmem:[%s287 + $0x10] sm:$0x3]
      %v323 = vld [vmem:[%s287 + $0x18] sm:$0xff]
      %v324 = vld [vmem:[%s287 + $0x20] sm:$0xff]
      %v325 = vld [vmem:[%s287 + $0x28] sm:$0x3]
      %v326 = vld [vmem:[%s287 + $0x30] sm:$0xff]
      %v327 = vld [vmem:[%s287 + $0x38] sm:$0xff]
      %v328 = vld [vmem:[%s287 + $0x40] sm:$0x3]
      %v329 = vld [vmem:[%s287 + $0x48] sm:$0xff]
      %v330 = vld [vmem:[%s287 + $0x50] sm:$0xff]
      %v331 = vld [vmem:[%s287 + $0x58] sm:$0x3]
      %v332 = vld [vmem:[%s287 + $0x60] sm:$0xff]
      %v333 = vld [vmem:[%s287 + $0x68] sm:$0xff]
      %v334 = vld [vmem:[%s287 + $0x70] sm:$0x3]
      %v335 = vld [vmem:[%s287 + $0x78] sm:$0xff]
      %v336 = vld [vmem:[%s287 + $0x80] sm:$0xff]
      %v337 = vld [vmem:[%s287 + $0x88] sm:$0x3]
      %v338 = vld [vmem:[%s287 + $0x90] sm:$0xff]
      %v339 = vld [vmem:[%s287 + $0x98] sm:$0xff]
      %v340 = vld [vmem:[%s287 + $0xa0] sm:$0x3]
      %v341 = vld [vmem:[%s287 + $0xa8] sm:$0xff]
      %v342 = vld [vmem:[%s287 + $0xb0] sm:$0xff]
      %v343 = vld [vmem:[%s287 + $0xb8] sm:$0x3]
      %vm344 = vcmask 31744
      %345 = vst.msk [vmem:[#allocation2] sm:$0xff] %vm344, %v320
      %346 = vst.msk [vmem:[#allocation2 + $0x8] sm:$0xff] %vm344, %v321
      %vm347 = vcmask 25600
      %348 = vst.msk [vmem:[#allocation2 + $0x10] sm:$0x3] %vm347, %v322
      %349 = vst.msk [vmem:[#allocation2 + $0x18] sm:$0xff] %vm344, %v323
      %350 = vst.msk [vmem:[#allocation2 + $0x20] sm:$0xff] %vm344, %v324
      %351 = vst.msk [vmem:[#allocation2 + $0x28] sm:$0x3] %vm347, %v325
      %352 = vst.msk [vmem:[#allocation2 + $0x30] sm:$0xff] %vm344, %v326
      %353 = vst.msk [vmem:[#allocation2 + $0x38] sm:$0xff] %vm344, %v327
      %354 = vst.msk [vmem:[#allocation2 + $0x40] sm:$0x3] %vm347, %v328
      %355 = vst.msk [vmem:[#allocation2 + $0x48] sm:$0xff] %vm344, %v329
      %356 = vst.msk [vmem:[#allocation2 + $0x50] sm:$0xff] %vm344, %v330
      %357 = vst.msk [vmem:[#allocation2 + $0x58] sm:$0x3] %vm347, %v331
      %358 = vst.msk [vmem:[#allocation2 + $0x60] sm:$0xff] %vm344, %v332
      %359 = vst.msk [vmem:[#allocation2 + $0x68] sm:$0xff] %vm344, %v333
      %360 = vst.msk [vmem:[#allocation2 + $0x70] sm:$0x3] %vm347, %v334
      %361 = vst.msk [vmem:[#allocation2 + $0x78] sm:$0xff] %vm344, %v335
      %362 = vst.msk [vmem:[#allocation2 + $0x80] sm:$0xff] %vm344, %v336
      %363 = vst.msk [vmem:[#allocation2 + $0x88] sm:$0x3] %vm347, %v337
      %364 = vst.msk [vmem:[#allocation2 + $0x90] sm:$0xff] %vm344, %v338
      %365 = vst.msk [vmem:[#allocation2 + $0x98] sm:$0xff] %vm344, %v339
      %366 = vst.msk [vmem:[#allocation2 + $0xa0] sm:$0x3] %vm347, %v340
      %367 = vst.msk [vmem:[#allocation2 + $0xa8] sm:$0xff] %vm344, %v341
      %368 = vst.msk [vmem:[#allocation2 + $0xb0] sm:$0xff] %vm344, %v342
      %369 = vst.msk [vmem:[#allocation2 + $0xb8] sm:$0x3] %vm347, %v343
      %v370 = vld [vmem:[%s305] sm:$0xff]
      %v371 = vld [vmem:[%s305 + $0x8] sm:$0xff]
      %v372 = vld [vmem:[%s305 + $0x10] sm:$0x3]
      %v373 = vld [vmem:[%s305 + $0x18] sm:$0xff]
      %v374 = vld [vmem:[%s305 + $0x20] sm:$0xff]
      %v375 = vld [vmem:[%s305 + $0x28] sm:$0x3]
      %s376 = scalar_lea.vmem [#allocation2], 192
      %377 = vst.msk [vmem:[%s376] sm:$0xff] %vm344, %v370
      %378 = vst.msk [vmem:[%s376 + $0x8] sm:$0xff] %vm344, %v371
      %379 = vst.msk [vmem:[%s376 + $0x10] sm:$0x3] %vm347, %v372
      %380 = vst.msk [vmem:[%s376 + $0x18] sm:$0xff] %vm344, %v373
      %381 = vst.msk [vmem:[%s376 + $0x20] sm:$0xff] %vm344, %v374
      %382 = vst.msk [vmem:[%s376 + $0x28] sm:$0x3] %vm347, %v375
      %v383 = vld [vmem:[%s3] sm:$0x1]
      %v385 = vlaneseq
      %v386 = vshrl.u32 %v385, 7
      %v387 = vsub.s32 0, %v386
      %v388 = vrot.slane %v383, %v387
      %vm390 = vcmask 64512
      %391 = vst.msk [vmem:[#allocation3] sm:$0xff] %vm390, %v388
      %392 = vst.msk [vmem:[#allocation3 + $0x8] sm:$0xff] %vm390, %v388
      %393 = vst.msk [vmem:[#allocation3 + $0x10] sm:$0xff] %vm390, %v388
      %394 = vst.msk [vmem:[#allocation3 + $0x18] sm:$0xff] %vm390, %v388
      %395 = vst.msk [vmem:[#allocation3 + $0x20] sm:$0xff] %vm390, %v388
      %396 = vst.msk [vmem:[#allocation3 + $0x28] sm:$0xff] %vm390, %v388
      %397 = vst.msk [vmem:[#allocation3 + $0x30] sm:$0xff] %vm390, %v388
      %398 = vst.msk [vmem:[#allocation3 + $0x38] sm:$0xff] %vm390, %v388
      %399 = vst.msk [vmem:[#allocation3 + $0x40] sm:$0xff] %vm390, %v388
      %400 = vst.msk [vmem:[#allocation3 + $0x48] sm:$0xff] %vm390, %v388
      %401 = vst.msk [vmem:[#allocation3 + $0x50] sm:$0xff] %vm390, %v388
      %402 = vst.msk [vmem:[#allocation3 + $0x58] sm:$0xff] %vm390, %v388
      %403 = vst.msk [vmem:[#allocation3 + $0x60] sm:$0xff] %vm390, %v388
      %404 = vst.msk [vmem:[#allocation3 + $0x68] sm:$0xff] %vm390, %v388
      %405 = vst.msk [vmem:[#allocation3 + $0x70] sm:$0xff] %vm390, %v388
      %406 = vst.msk [vmem:[#allocation3 + $0x78] sm:$0xff] %vm390, %v388
      %407 = vst.msk [vmem:[#allocation4] sm:$0xff] %vm390, %v388
      %408 = vst.msk [vmem:[#allocation4 + $0x8] sm:$0xff] %vm390, %v388
      %409 = vst.msk [vmem:[#allocation4 + $0x10] sm:$0xff] %vm390, %v388
      %410 = vst.msk [vmem:[#allocation4 + $0x18] sm:$0xff] %vm390, %v388
      %411 = vst.msk [vmem:[#allocation4 + $0x20] sm:$0xff] %vm390, %v388
      %412 = vst.msk [vmem:[#allocation4 + $0x28] sm:$0xff] %vm390, %v388
      %413 = vst.msk [vmem:[#allocation4 + $0x30] sm:$0xff] %vm390, %v388
      %414 = vst.msk [vmem:[#allocation4 + $0x38] sm:$0xff] %vm390, %v388
      %415 = vst.msk [vmem:[#allocation4 + $0x40] sm:$0xff] %vm390, %v388
      %416 = vst.msk [vmem:[#allocation4 + $0x48] sm:$0xff] %vm390, %v388
      %417 = vst.msk [vmem:[#allocation4 + $0x50] sm:$0xff] %vm390, %v388
      %418 = vst.msk [vmem:[#allocation4 + $0x58] sm:$0xff] %vm390, %v388
      %419 = vst.msk [vmem:[#allocation4 + $0x60] sm:$0xff] %vm390, %v388
      %420 = vst.msk [vmem:[#allocation4 + $0x68] sm:$0xff] %vm390, %v388
      %421 = vst.msk [vmem:[#allocation4 + $0x70] sm:$0xff] %vm390, %v388
      %422 = vst.msk [vmem:[#allocation4 + $0x78] sm:$0xff] %vm390, %v388
      %v423 = vld [vmem:[#allocation2] sm:$0xff]
      %v424 = vld [vmem:[#allocation2 + $0x8] sm:$0xff]
      %v425 = vld [vmem:[#allocation2 + $0x18] sm:$0xff]
      %v426 = vld [vmem:[#allocation2 + $0x20] sm:$0xff]
      %v427 = vld [vmem:[#allocation2 + $0x30] sm:$0xff]
      %v428 = vld [vmem:[#allocation2 + $0x38] sm:$0xff]
      %v429 = vld [vmem:[#allocation2 + $0x48] sm:$0xff]
      %v430 = vld [vmem:[#allocation2 + $0x50] sm:$0xff]
      %v431 = vld [vmem:[#allocation2 + $0x60] sm:$0xff]
      %v432 = vld [vmem:[#allocation2 + $0x68] sm:$0xff]
      %v433 = vld [vmem:[#allocation2 + $0x78] sm:$0xff]
      %v434 = vld [vmem:[#allocation2 + $0x80] sm:$0xff]
      %v435 = vld [vmem:[#allocation2 + $0x90] sm:$0xff]
      %v436 = vld [vmem:[#allocation2 + $0x98] sm:$0xff]
      %v437 = vld [vmem:[#allocation2 + $0xa8] sm:$0xff]
      %v438 = vld [vmem:[#allocation2 + $0xb0] sm:$0xff]
      %v439 = vld [vmem:[#allocation3] sm:$0xff]
      %v440 = vld [vmem:[#allocation3 + $0x8] sm:$0xff]
      %v441 = vld [vmem:[#allocation3 + $0x10] sm:$0xff]
      %v442 = vld [vmem:[#allocation3 + $0x18] sm:$0xff]
      %v443 = vld [vmem:[#allocation3 + $0x20] sm:$0xff]
      %v444 = vld [vmem:[#allocation3 + $0x28] sm:$0xff]
      %v445 = vld [vmem:[#allocation3 + $0x30] sm:$0xff]
      %v446 = vld [vmem:[#allocation3 + $0x38] sm:$0xff]
      %v447 = vld [vmem:[#allocation3 + $0x40] sm:$0xff]
      %v448 = vld [vmem:[#allocation3 + $0x48] sm:$0xff]
      %v449 = vld [vmem:[#allocation3 + $0x50] sm:$0xff]
      %v450 = vld [vmem:[#allocation3 + $0x58] sm:$0xff]
      %v451 = vld [vmem:[#allocation3 + $0x60] sm:$0xff]
      %v452 = vld [vmem:[#allocation3 + $0x68] sm:$0xff]
      %v453 = vld [vmem:[#allocation3 + $0x70] sm:$0xff]
      %v454 = vld [vmem:[#allocation3 + $0x78] sm:$0xff]
      %v455 = vld [vmem:[%s2] sm:$0xf]
      %v457 = vsel %vm344, %v423, 0
      %v460 = vsel %vm344, %v424, 0
      %v463 = vsel %vm344, %v425, 0
      %v466 = vsel %vm344, %v426, 0
      %v469 = vsel %vm344, %v427, 0
      %v472 = vsel %vm344, %v428, 0
      %v475 = vsel %vm344, %v429, 0
      %v478 = vsel %vm344, %v430, 0
      %v481 = vsel %vm344, %v431, 0
      %v484 = vsel %vm344, %v432, 0
      %v487 = vsel %vm344, %v433, 0
      %v490 = vsel %vm344, %v434, 0
      %v493 = vsel %vm344, %v435, 0
      %v496 = vsel %vm344, %v436, 0
      %v499 = vsel %vm344, %v437, 0
      %v502 = vsel %vm344, %v438, 0
      %vm504 = vcmask 1043456
      %v506 = vsel %vm504, %v455, 0
      %508 = vmatprep.subr.mxu0 0.0
      %509 = vmatpush1.msra.mxu0 %v506
      %510 = vmatprep.subr.mxu0 0.0
      %511 = vmatpush1.msra.mxu0 0.0
      %512 = vmatprep.subr.mxu0 0.0
      %513 = vmatpush1.msra.mxu0 0.0
      %514 = vmatprep.subr.mxu0 0.0
      %515 = vmatpush1.msra.mxu0 0.0
      %516 = vmatprep.subr.mxu0 0.0
      %517 = vmatpush1.msra.mxu0 0.0
      %518 = vmatprep.subr.mxu0 0.0
      %519 = vmatpush1.msra.mxu0 0.0
      %520 = vmatprep.subr.mxu0 0.0
      %521 = vmatpush1.msra.mxu0 0.0
      %522 = vmatprep.subr.mxu0 0.0
      %523 = vmatpush1.msra.mxu0 0.0
      %524 = vmatprep.subr.mxu0 0.0
      %525 = vmatpush1.msra.mxu0 0.0
      %526 = vmatprep.subr.mxu0 0.0
      %527 = vmatpush1.msra.mxu0 0.0
      %528 = vmatprep.subr.mxu0 0.0
      %529 = vmatpush1.msra.mxu0 0.0
      %530 = vmatprep.subr.mxu0 0.0
      %531 = vmatpush1.msra.mxu0 0.0
      %532 = vmatprep.subr.mxu0 0.0
      %533 = vmatpush1.msra.mxu0 0.0
      %534 = vmatprep.subr.mxu0 0.0
      %535 = vmatpush1.msra.mxu0 0.0
      %536 = vmatprep.subr.mxu0 0.0
      %537 = vmatpush1.msra.mxu0 0.0
      %538 = vmatprep.subr.mxu0 0.0
      %539 = vmatpush1.msra.mxu0 0.0
      %540 = vmatprep.subr.mxu0 0.0
      %541 = vmatpush1.msra.mxu0 0.0
      %542 = vmatprep.subr.mxu0 0.0
      %543 = vmatpush1.msra.mxu0 0.0
      %544 = vmatprep.subr.mxu0 0.0
      %545 = vmatpush1.msra.mxu0 0.0
      %546 = vmatprep.subr.mxu0 0.0
      %547 = vmatpush1.msra.mxu0 0.0
      %548 = vmatprep.subr.mxu0 0.0
      %549 = vmatpush1.msra.mxu0 0.0
      %550 = vmatprep.subr.mxu0 0.0
      %551 = vmatpush1.msra.mxu0 0.0
      %552 = vmatprep.subr.mxu0 0.0
      %553 = vmatpush1.msra.mxu0 0.0
      %554 = vmatprep.subr.mxu0 0.0
      %555 = vmatpush1.msra.mxu0 0.0
      %556 = vmatprep.subr.mxu0 0.0
      %557 = vmatpush1.msra.mxu0 0.0
      %558 = vmatprep.subr.mxu0 0.0
      %559 = vmatpush1.msra.mxu0 0.0
      %560 = vmatprep.subr.mxu0 0.0
      %561 = vmatpush1.msra.mxu0 0.0
      %562 = vmatprep.subr.mxu0 0.0
      %563 = vmatpush1.msra.mxu0 0.0
      %564 = vmatprep.subr.mxu0 0.0
      %565 = vmatpush1.msra.mxu0 0.0
      %566 = vmatprep.subr.mxu0 0.0
      %567 = vmatpush1.msra.mxu0 0.0
      %568 = vmatprep.subr.mxu0 0.0
      %569 = vmatpush1.msra.mxu0 0.0
      %570 = vmatprep.subr.mxu0 0.0
      %571 = vmatpush1.msra.mxu0 0.0
      %572 = vmatprep.mubr.f32.mxu0 0.0
      %573 = vmatmul.mubr.f32.gmra.mrb[0].mxu0 %v457
      %v574 = vpop.f32.mrb[0].mxu0
      %v575 = vadd.f32 0.0, %v574
      %v576 = vpop.f32.mrb[0].mxu0
      %577 = vmatprep.mubr.f32.mxu0 0.0
      %578 = vmatmul.mubr.f32.gmra.mrb[0].mxu0 %v460
      %v579 = vpop.f32.mrb[0].mxu0
      %v580 = vadd.f32 0.0, %v579
      %v581 = vpop.f32.mrb[0].mxu0
      %582 = vmatprep.mubr.f32.mxu0 0.0
      %583 = vmatmul.mubr.f32.gmra.mrb[0].mxu0 %v463
      %v584 = vpop.f32.mrb[0].mxu0
      %v585 = vadd.f32 0.0, %v584
      %v586 = vpop.f32.mrb[0].mxu0
      %587 = vmatprep.mubr.f32.mxu0 0.0
      %588 = vmatmul.mubr.f32.gmra.mrb[0].mxu0 %v466
      %v589 = vpop.f32.mrb[0].mxu0
      %v590 = vadd.f32 0.0, %v589
      %v591 = vpop.f32.mrb[0].mxu0
      %592 = vmatprep.mubr.f32.mxu0 0.0
      %593 = vmatmul.mubr.f32.gmra.mrb[0].mxu0 %v469
      %v594 = vpop.f32.mrb[0].mxu0
      %v595 = vadd.f32 0.0, %v594
      %v596 = vpop.f32.mrb[0].mxu0
      %597 = vmatprep.mubr.f32.mxu0 0.0
      %598 = vmatmul.mubr.f32.gmra.mrb[0].mxu0 %v472
      %v599 = vpop.f32.mrb[0].mxu0
      %v600 = vadd.f32 0.0, %v599
      %v601 = vpop.f32.mrb[0].mxu0
      %602 = vmatprep.mubr.f32.mxu0 0.0
      %603 = vmatmul.mubr.f32.gmra.mrb[0].mxu0 %v475
      %v604 = vpop.f32.mrb[0].mxu0
      %v605 = vadd.f32 0.0, %v604
      %v606 = vpop.f32.mrb[0].mxu0
      %607 = vmatprep.mubr.f32.mxu0 0.0
      %608 = vmatmul.mubr.f32.gmra.mrb[0].mxu0 %v478
      %v609 = vpop.f32.mrb[0].mxu0
      %v610 = vadd.f32 0.0, %v609
      %v611 = vpop.f32.mrb[0].mxu0
      %612 = vmatprep.mubr.f32.mxu0 0.0
      %613 = vmatmul.mubr.f32.gmra.mrb[0].mxu0 %v481
      %v614 = vpop.f32.mrb[0].mxu0
      %v615 = vadd.f32 0.0, %v614
      %v616 = vpop.f32.mrb[0].mxu0
      %617 = vmatprep.mubr.f32.mxu0 0.0
      %618 = vmatmul.mubr.f32.gmra.mrb[0].mxu0 %v484
      %v619 = vpop.f32.mrb[0].mxu0
      %v620 = vadd.f32 0.0, %v619
      %v621 = vpop.f32.mrb[0].mxu0
      %622 = vmatprep.mubr.f32.mxu0 0.0
      %623 = vmatmul.mubr.f32.gmra.mrb[0].mxu0 %v487
      %v624 = vpop.f32.mrb[0].mxu0
      %v625 = vadd.f32 0.0, %v624
      %v626 = vpop.f32.mrb[0].mxu0
      %627 = vmatprep.mubr.f32.mxu0 0.0
      %628 = vmatmul.mubr.f32.gmra.mrb[0].mxu0 %v490
      %v629 = vpop.f32.mrb[0].mxu0
      %v630 = vadd.f32 0.0, %v629
      %v631 = vpop.f32.mrb[0].mxu0
      %632 = vmatprep.mubr.f32.mxu0 0.0
      %633 = vmatmul.mubr.f32.gmra.mrb[0].mxu0 %v493
      %v634 = vpop.f32.mrb[0].mxu0
      %v635 = vadd.f32 0.0, %v634
      %v636 = vpop.f32.mrb[0].mxu0
      %637 = vmatprep.mubr.f32.mxu0 0.0
      %638 = vmatmul.mubr.f32.gmra.mrb[0].mxu0 %v496
      %v639 = vpop.f32.mrb[0].mxu0
      %v640 = vadd.f32 0.0, %v639
      %v641 = vpop.f32.mrb[0].mxu0
      %642 = vmatprep.mubr.f32.mxu0 0.0
      %643 = vmatmul.mubr.f32.gmra.mrb[0].mxu0 %v499
      %v644 = vpop.f32.mrb[0].mxu0
      %v645 = vadd.f32 0.0, %v644
      %v646 = vpop.f32.mrb[0].mxu0
      %647 = vmatprep.mubr.f32.mxu0 0.0
      %648 = vmatmul.mubr.f32.gmra.mrb[0].mxu0 %v502
      %v649 = vpop.f32.mrb[0].mxu0
      %v650 = vadd.f32 0.0, %v649
      %v651 = vpop.f32.mrb[0].mxu0
      %652 = vdwg.mxu0
      %v653 = vadd.f32 %v439, %v575
      %v654 = vadd.f32 %v440, %v580
      %v655 = vadd.f32 %v441, %v585
      %v656 = vadd.f32 %v442, %v590
      %v657 = vadd.f32 %v443, %v595
      %v658 = vadd.f32 %v444, %v600
      %v659 = vadd.f32 %v445, %v605
      %v660 = vadd.f32 %v446, %v610
      %v661 = vadd.f32 %v447, %v615
      %v662 = vadd.f32 %v448, %v620
      %v663 = vadd.f32 %v449, %v625
      %v664 = vadd.f32 %v450, %v630
      %v665 = vadd.f32 %v451, %v635
      %v666 = vadd.f32 %v452, %v640
      %v667 = vadd.f32 %v453, %v645
      %v668 = vadd.f32 %v454, %v650
      %669 = vst.msk [vmem:[#allocation3] sm:$0xff] %vm390, %v653
      %670 = vst.msk [vmem:[#allocation3 + $0x8] sm:$0xff] %vm390, %v654
      %671 = vst.msk [vmem:[#allocation3 + $0x10] sm:$0xff] %vm390, %v655
      %672 = vst.msk [vmem:[#allocation3 + $0x18] sm:$0xff] %vm390, %v656
      %673 = vst.msk [vmem:[#allocation3 + $0x20] sm:$0xff] %vm390, %v657
      %674 = vst.msk [vmem:[#allocation3 + $0x28] sm:$0xff] %vm390, %v658
      %675 = vst.msk [vmem:[#allocation3 + $0x30] sm:$0xff] %vm390, %v659
      %676 = vst.msk [vmem:[#allocation3 + $0x38] sm:$0xff] %vm390, %v660
      %677 = vst.msk [vmem:[#allocation3 + $0x40] sm:$0xff] %vm390, %v661
      %678 = vst.msk [vmem:[#allocation3 + $0x48] sm:$0xff] %vm390, %v662
      %679 = vst.msk [vmem:[#allocation3 + $0x50] sm:$0xff] %vm390, %v663
      %680 = vst.msk [vmem:[#allocation3 + $0x58] sm:$0xff] %vm390, %v664
      %681 = vst.msk [vmem:[#allocation3 + $0x60] sm:$0xff] %vm390, %v665
      %682 = vst.msk [vmem:[#allocation3 + $0x68] sm:$0xff] %vm390, %v666
      %683 = vst.msk [vmem:[#allocation3 + $0x70] sm:$0xff] %vm390, %v667
      %684 = vst.msk [vmem:[#allocation3 + $0x78] sm:$0xff] %vm390, %v668
      %v685 = vld [vmem:[#allocation2 + $0x1] sm:$0xff]
      %v686 = vld [vmem:[#allocation2 + $0x9] sm:$0xff]
      %v687 = vld [vmem:[#allocation2 + $0x19] sm:$0xff]
      %v688 = vld [vmem:[#allocation2 + $0x21] sm:$0xff]
      %v689 = vld [vmem:[#allocation2 + $0x31] sm:$0xff]
      %v690 = vld [vmem:[#allocation2 + $0x39] sm:$0xff]
      %v691 = vld [vmem:[#allocation2 + $0x49] sm:$0xff]
      %v692 = vld [vmem:[#allocation2 + $0x51] sm:$0xff]
      %v693 = vld [vmem:[#allocation2 + $0x61] sm:$0xff]
      %v694 = vld [vmem:[#allocation2 + $0x69] sm:$0xff]
      %v695 = vld [vmem:[#allocation2 + $0x79] sm:$0xff]
      %v696 = vld [vmem:[#allocation2 + $0x81] sm:$0xff]
      %v697 = vld [vmem:[#allocation2 + $0x91] sm:$0xff]
      %v698 = vld [vmem:[#allocation2 + $0x99] sm:$0xff]
      %v699 = vld [vmem:[#allocation2 + $0xa9] sm:$0xff]
      %v700 = vld [vmem:[#allocation2 + $0xb1] sm:$0xff]
      %v701 = vld [vmem:[#allocation3] sm:$0xff]
      %v702 = vld [vmem:[#allocation3 + $0x8] sm:$0xff]
      %v703 = vld [vmem:[#allocation3 + $0x10] sm:$0xff]
      %v704 = vld [vmem:[#allocation3 + $0x18] sm:$0xff]
      %v705 = vld [vmem:[#allocation3 + $0x20] sm:$0xff]
      %v706 = vld [vmem:[#allocation3 + $0x28] sm:$0xff]
      %v707 = vld [vmem:[#allocation3 + $0x30] sm:$0xff]
      %v708 = vld [vmem:[#allocation3 + $0x38] sm:$0xff]
      %v709 = vld [vmem:[#allocation3 + $0x40] sm:$0xff]
      %v710 = vld [vmem:[#allocation3 + $0x48] sm:$0xff]
      %v711 = vld [vmem:[#allocation3 + $0x50] sm:$0xff]
      %v712 = vld [vmem:[#allocation3 + $0x58] sm:$0xff]
      %v713 = vld [vmem:[#allocation3 + $0x60] sm:$0xff]
      %v714 = vld [vmem:[#allocation3 + $0x68] sm:$0xff]
      %v715 = vld [vmem:[#allocation3 + $0x70] sm:$0xff]
      %v716 = vld [vmem:[#allocation3 + $0x78] sm:$0xff]
      %s717 = scalar_lea.vmem %s2, 4
      %v718 = vld [vmem:[%s717] sm:$0xf]
      %v720 = vsel %vm344, %v685, 0
      %v723 = vsel %vm344, %v686, 0
      %v726 = vsel %vm344, %v687, 0
      %v729 = vsel %vm344, %v688, 0
      %v732 = vsel %vm344, %v689, 0
      %v735 = vsel %vm344, %v690, 0
      %v738 = vsel %vm344, %v691, 0
      %v741 = vsel %vm344, %v692, 0
      %v744 = vsel %vm344, %v693, 0
      %v747 = vsel %vm344, %v694, 0
      %v750 = vsel %vm344, %v695, 0
      %v753 = vsel %vm344, %v696, 0
      %v756 = vsel %vm344, %v697, 0
      %v759 = vsel %vm344, %v698, 0
      %v762 = vsel %vm344, %v699, 0
      %v765 = vsel %vm344, %v700, 0
      %v768 = vsel %vm504, %v718, 0
      %770 = vmatprep.subr.mxu0 0.0
      %771 = vmatpush1.msra.mxu0 %v768
      %772 = vmatprep.subr.mxu0 0.0
      %773 = vmatpush1.msra.mxu0 0.0
      %774 = vmatprep.subr.mxu0 0.0
      %775 = vmatpush1.msra.mxu0 0.0
      %776 = vmatprep.subr.mxu0 0.0
      %777 = vmatpush1.msra.mxu0 0.0
      %778 = vmatprep.subr.mxu0 0.0
      %779 = vmatpush1.msra.mxu0 0.0
      %780 = vmatprep.subr.mxu0 0.0
      %781 = vmatpush1.msra.mxu0 0.0
      %782 = vmatprep.subr.mxu0 0.0
      %783 = vmatpush1.msra.mxu0 0.0
      %784 = vmatprep.subr.mxu0 0.0
      %785 = vmatpush1.msra.mxu0 0.0
      %786 = vmatprep.subr.mxu0 0.0
      %787 = vmatpush1.msra.mxu0 0.0
      %788 = vmatprep.subr.mxu0 0.0
      %789 = vmatpush1.msra.mxu0 0.0
      %790 = vmatprep.subr.mxu0 0.0
      %791 = vmatpush1.msra.mxu0 0.0
      %792 = vmatprep.subr.mxu0 0.0
      %793 = vmatpush1.msra.mxu0 0.0
      %794 = vmatprep.subr.mxu0 0.0
      %795 = vmatpush1.msra.mxu0 0.0
      %796 = vmatprep.subr.mxu0 0.0
      %797 = vmatpush1.msra.mxu0 0.0
      %798 = vmatprep.subr.mxu0 0.0
      %799 = vmatpush1.msra.mxu0 0.0
      %800 = vmatprep.subr.mxu0 0.0
      %801 = vmatpush1.msra.mxu0 0.0
      %802 = vmatprep.subr.mxu0 0.0
      %803 = vmatpush1.msra.mxu0 0.0
      %804 = vmatprep.subr.mxu0 0.0
      %805 = vmatpush1.msra.mxu0 0.0
      %806 = vmatprep.subr.mxu0 0.0
      %807 = vmatpush1.msra.mxu0 0.0
      %808 = vmatprep.subr.mxu0 0.0
      %809 = vmatpush1.msra.mxu0 0.0
      %810 = vmatprep.subr.mxu0 0.0
      %811 = vmatpush1.msra.mxu0 0.0
      %812 = vmatprep.subr.mxu0 0.0
      %813 = vmatpush1.msra.mxu0 0.0
      %814 = vmatprep.subr.mxu0 0.0
      %815 = vmatpush1.msra.mxu0 0.0
      %816 = vmatprep.subr.mxu0 0.0
      %817 = vmatpush1.msra.mxu0 0.0
      %818 = vmatprep.subr.mxu0 0.0
      %819 = vmatpush1.msra.mxu0 0.0
      %820 = vmatprep.subr.mxu0 0.0
      %821 = vmatpush1.msra.mxu0 0.0
      %822 = vmatprep.subr.mxu0 0.0
      %823 = vmatpush1.msra.mxu0 0.0
      %824 = vmatprep.subr.mxu0 0.0
      %825 = vmatpush1.msra.mxu0 0.0
      %826 = vmatprep.subr.mxu0 0.0
      %827 = vmatpush1.msra.mxu0 0.0
      %828 = vmatprep.subr.mxu0 0.0
      %829 = vmatpush1.msra.mxu0 0.0
      %830 = vmatprep.subr.mxu0 0.0
      %831 = vmatpush1.msra.mxu0 0.0
      %832 = vmatprep.subr.mxu0 0.0
      %833 = vmatpush1.msra.mxu0 0.0
      %834 = vmatprep.mubr.f32.mxu0 0.0
      %835 = vmatmul.mubr.f32.gmra.mrb[0].mxu0 %v720
      %v836 = vpop.f32.mrb[0].mxu0
      %v837 = vadd.f32 0.0, %v836
      %v838 = vpop.f32.mrb[0].mxu0
      %839 = vmatprep.mubr.f32.mxu0 0.0
      %840 = vmatmul.mubr.f32.gmra.mrb[0].mxu0 %v723
      %v841 = vpop.f32.mrb[0].mxu0
      %v842 = vadd.f32 0.0, %v841
      %v843 = vpop.f32.mrb[0].mxu0
      %844 = vmatprep.mubr.f32.mxu0 0.0
      %845 = vmatmul.mubr.f32.gmra.mrb[0].mxu0 %v726
      %v846 = vpop.f32.mrb[0].mxu0
      %v847 = vadd.f32 0.0, %v846
      %v848 = vpop.f32.mrb[0].mxu0
      %849 = vmatprep.mubr.f32.mxu0 0.0
      %850 = vmatmul.mubr.f32.gmra.mrb[0].mxu0 %v729
      %v851 = vpop.f32.mrb[0].mxu0
      %v852 = vadd.f32 0.0, %v851
      %v853 = vpop.f32.mrb[0].mxu0
      %854 = vmatprep.mubr.f32.mxu0 0.0
      %855 = vmatmul.mubr.f32.gmra.mrb[0].mxu0 %v732
      %v856 = vpop.f32.mrb[0].mxu0
      %v857 = vadd.f32 0.0, %v856
      %v858 = vpop.f32.mrb[0].mxu0
      %859 = vmatprep.mubr.f32.mxu0 0.0
      %860 = vmatmul.mubr.f32.gmra.mrb[0].mxu0 %v735
      %v861 = vpop.f32.mrb[0].mxu0
      %v862 = vadd.f32 0.0, %v861
      %v863 = vpop.f32.mrb[0].mxu0
      %864 = vmatprep.mubr.f32.mxu0 0.0
      %865 = vmatmul.mubr.f32.gmra.mrb[0].mxu0 %v738
      %v866 = vpop.f32.mrb[0].mxu0
      %v867 = vadd.f32 0.0, %v866
      %v868 = vpop.f32.mrb[0].mxu0
      %869 = vmatprep.mubr.f32.mxu0 0.0
      %870 = vmatmul.mubr.f32.gmra.mrb[0].mxu0 %v741
      %v871 = vpop.f32.mrb[0].mxu0
      %v872 = vadd.f32 0.0, %v871
      %v873 = vpop.f32.mrb[0].mxu0
      %874 = vmatprep.mubr.f32.mxu0 0.0
      %875 = vmatmul.mubr.f32.gmra.mrb[0].mxu0 %v744
      %v876 = vpop.f32.mrb[0].mxu0
      %v877 = vadd.f32 0.0, %v876
      %v878 = vpop.f32.mrb[0].mxu0
      %879 = vmatprep.mubr.f32.mxu0 0.0
      %880 = vmatmul.mubr.f32.gmra.mrb[0].mxu0 %v747
      %v881 = vpop.f32.mrb[0].mxu0
      %v882 = vadd.f32 0.0, %v881
      %v883 = vpop.f32.mrb[0].mxu0
      %884 = vmatprep.mubr.f32.mxu0 0.0
      %885 = vmatmul.mubr.f32.gmra.mrb[0].mxu0 %v750
      %v886 = vpop.f32.mrb[0].mxu0
      %v887 = vadd.f32 0.0, %v886
      %v888 = vpop.f32.mrb[0].mxu0
      %889 = vmatprep.mubr.f32.mxu0 0.0
      %890 = vmatmul.mubr.f32.gmra.mrb[0].mxu0 %v753
      %v891 = vpop.f32.mrb[0].mxu0
      %v892 = vadd.f32 0.0, %v891
      %v893 = vpop.f32.mrb[0].mxu0
      %894 = vmatprep.mubr.f32.mxu0 0.0
      %895 = vmatmul.mubr.f32.gmra.mrb[0].mxu0 %v756
      %v896 = vpop.f32.mrb[0].mxu0
      %v897 = vadd.f32 0.0, %v896
      %v898 = vpop.f32.mrb[0].mxu0
      %899 = vmatprep.mubr.f32.mxu0 0.0
      %900 = vmatmul.mubr.f32.gmra.mrb[0].mxu0 %v759
      %v901 = vpop.f32.mrb[0].mxu0
      %v902 = vadd.f32 0.0, %v901
      %v903 = vpop.f32.mrb[0].mxu0
      %904 = vmatprep.mubr.f32.mxu0 0.0
      %905 = vmatmul.mubr.f32.gmra.mrb[0].mxu0 %v762
      %v906 = vpop.f32.mrb[0].mxu0
      %v907 = vadd.f32 0.0, %v906
      %v908 = vpop.f32.mrb[0].mxu0
      %909 = vmatprep.mubr.f32.mxu0 0.0
      %910 = vmatmul.mubr.f32.gmra.mrb[0].mxu0 %v765
      %v911 = vpop.f32.mrb[0].mxu0
      %v912 = vadd.f32 0.0, %v911
      %v913 = vpop.f32.mrb[0].mxu0
      %914 = vdwg.mxu0
      %v915 = vadd.f32 %v701, %v837
      %v916 = vadd.f32 %v702, %v842
      %v917 = vadd.f32 %v703, %v847
      %v918 = vadd.f32 %v704, %v852
      %v919 = vadd.f32 %v705, %v857
      %v920 = vadd.f32 %v706, %v862
      %v921 = vadd.f32 %v707, %v867
      %v922 = vadd.f32 %v708, %v872
      %v923 = vadd.f32 %v709, %v877
      %v924 = vadd.f32 %v710, %v882
      %v925 = vadd.f32 %v711, %v887
      %v926 = vadd.f32 %v712, %v892
      %v927 = vadd.f32 %v713, %v897
      %v928 = vadd.f32 %v714, %v902
      %v929 = vadd.f32 %v715, %v907
      %v930 = vadd.f32 %v716, %v912
      %931 = vst.msk [vmem:[#allocation3] sm:$0xff] %vm390, %v915
      %932 = vst.msk [vmem:[#allocation3 + $0x8] sm:$0xff] %vm390, %v916
      %933 = vst.msk [vmem:[#allocation3 + $0x10] sm:$0xff] %vm390, %v917
      %934 = vst.msk [vmem:[#allocation3 + $0x18] sm:$0xff] %vm390, %v918
      %935 = vst.msk [vmem:[#allocation3 + $0x20] sm:$0xff] %vm390, %v919
      %936 = vst.msk [vmem:[#allocation3 + $0x28] sm:$0xff] %vm390, %v920
      %937 = vst.msk [vmem:[#allocation3 + $0x30] sm:$0xff] %vm390, %v921
      %938 = vst.msk [vmem:[#allocation3 + $0x38] sm:$0xff] %vm390, %v922
      %939 = vst.msk [vmem:[#allocation3 + $0x40] sm:$0xff] %vm390, %v923
      %940 = vst.msk [vmem:[#allocation3 + $0x48] sm:$0xff] %vm390, %v924
      %941 = vst.msk [vmem:[#allocation3 + $0x50] sm:$0xff] %vm390, %v925
      %942 = vst.msk [vmem:[#allocation3 + $0x58] sm:$0xff] %vm390, %v926
      %943 = vst.msk [vmem:[#allocation3 + $0x60] sm:$0xff] %vm390, %v927
      %944 = vst.msk [vmem:[#allocation3 + $0x68] sm:$0xff] %vm390, %v928
      %945 = vst.msk [vmem:[#allocation3 + $0x70] sm:$0xff] %vm390, %v929
      %946 = vst.msk [vmem:[#allocation3 + $0x78] sm:$0xff] %vm390, %v930
      %v947 = vld [vmem:[#allocation2 + $0x2] sm:$0xff]
      %v948 = vld [vmem:[#allocation2 + $0xa] sm:$0xff]
      %v949 = vld [vmem:[#allocation2 + $0x1a] sm:$0xff]
      %v950 = vld [vmem:[#allocation2 + $0x22] sm:$0xff]
      %v951 = vld [vmem:[#allocation2 + $0x32] sm:$0xff]
      %v952 = vld [vmem:[#allocation2 + $0x3a] sm:$0xff]
      %v953 = vld [vmem:[#allocation2 + $0x4a] sm:$0xff]
      %v954 = vld [vmem:[#allocation2 + $0x52] sm:$0xff]
      %v955 = vld [vmem:[#allocation2 + $0x62] sm:$0xff]
      %v956 = vld [vmem:[#allocation2 + $0x6a] sm:$0xff]
      %v957 = vld [vmem:[#allocation2 + $0x7a] sm:$0xff]
      %v958 = vld [vmem:[#allocation2 + $0x82] sm:$0xff]
      %v959 = vld [vmem:[#allocation2 + $0x92] sm:$0xff]
      %v960 = vld [vmem:[#allocation2 + $0x9a] sm:$0xff]
      %v961 = vld [vmem:[#allocation2 + $0xaa] sm:$0xff]
      %v962 = vld [vmem:[#allocation2 + $0xb2] sm:$0xff]
      %v963 = vld [vmem:[#allocation3] sm:$0xff]
      %v964 = vld [vmem:[#allocation3 + $0x8] sm:$0xff]
      %v965 = vld [vmem:[#allocation3 + $0x10] sm:$0xff]
      %v966 = vld [vmem:[#allocation3 + $0x18] sm:$0xff]
      %v967 = vld [vmem:[#allocation3 + $0x20] sm:$0xff]
      %v968 = vld [vmem:[#allocation3 + $0x28] sm:$0xff]
      %v969 = vld [vmem:[#allocation3 + $0x30] sm:$0xff]
      %v970 = vld [vmem:[#allocation3 + $0x38] sm:$0xff]
      %v971 = vld [vmem:[#allocation3 + $0x40] sm:$0xff]
      %v972 = vld [vmem:[#allocation3 + $0x48] sm:$0xff]
      %v973 = vld [vmem:[#allocation3 + $0x50] sm:$0xff]
      %v974 = vld [vmem:[#allocation3 + $0x58] sm:$0xff]
      %v975 = vld [vmem:[#allocation3 + $0x60] sm:$0xff]
      %v976 = vld [vmem:[#allocation3 + $0x68] sm:$0xff]
      %v977 = vld [vmem:[#allocation3 + $0x70] sm:$0xff]
      %v978 = vld [vmem:[#allocation3 + $0x78] sm:$0xff]
      %s979 = scalar_lea.vmem %s2, 8
      %v980 = vld [vmem:[%s979] sm:$0xf]
      %v982 = vsel %vm344, %v947, 0
      %v985 = vsel %vm344, %v948, 0
      %v988 = vsel %vm344, %v949, 0
      %v991 = vsel %vm344, %v950, 0
      %v994 = vsel %vm344, %v951, 0
      %v997 = vsel %vm344, %v952, 0
      %v1000 = vsel %vm344, %v953, 0
      %v1003 = vsel %vm344, %v954, 0
      %v1006 = vsel %vm344, %v955, 0
      %v1009 = vsel %vm344, %v956, 0
      %v1012 = vsel %vm344, %v957, 0
      %v1015 = vsel %vm344, %v958, 0
      %v1018 = vsel %vm344, %v959, 0
      %v1021 = vsel %vm344, %v960, 0
      %v1024 = vsel %vm344, %v961, 0
      %v1027 = vsel %vm344, %v962, 0
      %v1030 = vsel %vm504, %v980, 0
      %1032 = vmatprep.subr.mxu0 0.0
      %1033 = vmatpush1.msra.mxu0 %v1030
      %1034 = vmatprep.subr.mxu0 0.0
      %1035 = vmatpush1.msra.mxu0 0.0
      %1036 = vmatprep.subr.mxu0 0.0
      %1037 = vmatpush1.msra.mxu0 0.0
      %1038 = vmatprep.subr.mxu0 0.0
      %1039 = vmatpush1.msra.mxu0 0.0
      %1040 = vmatprep.subr.mxu0 0.0
      %1041 = vmatpush1.msra.mxu0 0.0
      %1042 = vmatprep.subr.mxu0 0.0
      %1043 = vmatpush1.msra.mxu0 0.0
      %1044 = vmatprep.subr.mxu0 0.0
      %1045 = vmatpush1.msra.mxu0 0.0
      %1046 = vmatprep.subr.mxu0 0.0
      %1047 = vmatpush1.msra.mxu0 0.0
      %1048 = vmatprep.subr.mxu0 0.0
      %1049 = vmatpush1.msra.mxu0 0.0
      %1050 = vmatprep.subr.mxu0 0.0
      %1051 = vmatpush1.msra.mxu0 0.0
      %1052 = vmatprep.subr.mxu0 0.0
      %1053 = vmatpush1.msra.mxu0 0.0
      %1054 = vmatprep.subr.mxu0 0.0
      %1055 = vmatpush1.msra.mxu0 0.0
      %1056 = vmatprep.subr.mxu0 0.0
      %1057 = vmatpush1.msra.mxu0 0.0
      %1058 = vmatprep.subr.mxu0 0.0
      %1059 = vmatpush1.msra.mxu0 0.0
      %1060 = vmatprep.subr.mxu0 0.0
      %1061 = vmatpush1.msra.mxu0 0.0
      %1062 = vmatprep.subr.mxu0 0.0
      %1063 = vmatpush1.msra.mxu0 0.0
      %1064 = vmatprep.subr.mxu0 0.0
      %1065 = vmatpush1.msra.mxu0 0.0
      %1066 = vmatprep.subr.mxu0 0.0
      %1067 = vmatpush1.msra.mxu0 0.0
      %1068 = vmatprep.subr.mxu0 0.0
      %1069 = vmatpush1.msra.mxu0 0.0
      %1070 = vmatprep.subr.mxu0 0.0
      %1071 = vmatpush1.msra.mxu0 0.0
      %1072 = vmatprep.subr.mxu0 0.0
      %1073 = vmatpush1.msra.mxu0 0.0
      %1074 = vmatprep.subr.mxu0 0.0
      %1075 = vmatpush1.msra.mxu0 0.0
      %1076 = vmatprep.subr.mxu0 0.0
      %1077 = vmatpush1.msra.mxu0 0.0
      %1078 = vmatprep.subr.mxu0 0.0
      %1079 = vmatpush1.msra.mxu0 0.0
      %1080 = vmatprep.subr.mxu0 0.0
      %1081 = vmatpush1.msra.mxu0 0.0
      %1082 = vmatprep.subr.mxu0 0.0
      %1083 = vmatpush1.msra.mxu0 0.0
      %1084 = vmatprep.subr.mxu0 0.0
      %1085 = vmatpush1.msra.mxu0 0.0
      %1086 = vmatprep.subr.mxu0 0.0
      %1087 = vmatpush1.msra.mxu0 0.0
      %1088 = vmatprep.subr.mxu0 0.0
      %1089 = vmatpush1.msra.mxu0 0.0
      %1090 = vmatprep.subr.mxu0 0.0
      %1091 = vmatpush1.msra.mxu0 0.0
      %1092 = vmatprep.subr.mxu0 0.0
      %1093 = vmatpush1.msra.mxu0 0.0
      %1094 = vmatprep.subr.mxu0 0.0
      %1095 = vmatpush1.msra.mxu0 0.0
      %1096 = vmatprep.mubr.f32.mxu0 0.0
      %1097 = vmatmul.mubr.f32.gmra.mrb[0].mxu0 %v982
      %v1098 = vpop.f32.mrb[0].mxu0
      %v1099 = vadd.f32 0.0, %v1098
      %v1100 = vpop.f32.mrb[0].mxu0
      %1101 = vmatprep.mubr.f32.mxu0 0.0
      %1102 = vmatmul.mubr.f32.gmra.mrb[0].mxu0 %v985
      %v1103 = vpop.f32.mrb[0].mxu0
      %v1104 = vadd.f32 0.0, %v1103
      %v1105 = vpop.f32.mrb[0].mxu0
      %1106 = vmatprep.mubr.f32.mxu0 0.0
      %1107 = vmatmul.mubr.f32.gmra.mrb[0].mxu0 %v988
      %v1108 = vpop.f32.mrb[0].mxu0
      %v1109 = vadd.f32 0.0, %v1108
      %v1110 = vpop.f32.mrb[0].mxu0
      %1111 = vmatprep.mubr.f32.mxu0 0.0
      %1112 = vmatmul.mubr.f32.gmra.mrb[0].mxu0 %v991
      %v1113 = vpop.f32.mrb[0].mxu0
      %v1114 = vadd.f32 0.0, %v1113
      %v1115 = vpop.f32.mrb[0].mxu0
      %1116 = vmatprep.mubr.f32.mxu0 0.0
      %1117 = vmatmul.mubr.f32.gmra.mrb[0].mxu0 %v994
      %v1118 = vpop.f32.mrb[0].mxu0
      %v1119 = vadd.f32 0.0, %v1118
      %v1120 = vpop.f32.mrb[0].mxu0
      %1121 = vmatprep.mubr.f32.mxu0 0.0
      %1122 = vmatmul.mubr.f32.gmra.mrb[0].mxu0 %v997
      %v1123 = vpop.f32.mrb[0].mxu0
      %v1124 = vadd.f32 0.0, %v1123
      %v1125 = vpop.f32.mrb[0].mxu0
      %1126 = vmatprep.mubr.f32.mxu0 0.0
      %1127 = vmatmul.mubr.f32.gmra.mrb[0].mxu0 %v1000
      %v1128 = vpop.f32.mrb[0].mxu0
      %v1129 = vadd.f32 0.0, %v1128
      %v1130 = vpop.f32.mrb[0].mxu0
      %1131 = vmatprep.mubr.f32.mxu0 0.0
      %1132 = vmatmul.mubr.f32.gmra.mrb[0].mxu0 %v1003
      %v1133 = vpop.f32.mrb[0].mxu0
      %v1134 = vadd.f32 0.0, %v1133
      %v1135 = vpop.f32.mrb[0].mxu0
      %1136 = vmatprep.mubr.f32.mxu0 0.0
      %1137 = vmatmul.mubr.f32.gmra.mrb[0].mxu0 %v1006
      %v1138 = vpop.f32.mrb[0].mxu0
      %v1139 = vadd.f32 0.0, %v1138
      %v1140 = vpop.f32.mrb[0].mxu0
      %1141 = vmatprep.mubr.f32.mxu0 0.0
      %1142 = vmatmul.mubr.f32.gmra.mrb[0].mxu0 %v1009
      %v1143 = vpop.f32.mrb[0].mxu0
      %v1144 = vadd.f32 0.0, %v1143
      %v1145 = vpop.f32.mrb[0].mxu0
      %1146 = vmatprep.mubr.f32.mxu0 0.0
      %1147 = vmatmul.mubr.f32.gmra.mrb[0].mxu0 %v1012
      %v1148 = vpop.f32.mrb[0].mxu0
      %v1149 = vadd.f32 0.0, %v1148
      %v1150 = vpop.f32.mrb[0].mxu0
      %1151 = vmatprep.mubr.f32.mxu0 0.0
      %1152 = vmatmul.mubr.f32.gmra.mrb[0].mxu0 %v1015
      %v1153 = vpop.f32.mrb[0].mxu0
      %v1154 = vadd.f32 0.0, %v1153
      %v1155 = vpop.f32.mrb[0].mxu0
      %1156 = vmatprep.mubr.f32.mxu0 0.0
      %1157 = vmatmul.mubr.f32.gmra.mrb[0].mxu0 %v1018
      %v1158 = vpop.f32.mrb[0].mxu0
      %v1159 = vadd.f32 0.0, %v1158
      %v1160 = vpop.f32.mrb[0].mxu0
      %1161 = vmatprep.mubr.f32.mxu0 0.0
      %1162 = vmatmul.mubr.f32.gmra.mrb[0].mxu0 %v1021
      %v1163 = vpop.f32.mrb[0].mxu0
      %v1164 = vadd.f32 0.0, %v1163
      %v1165 = vpop.f32.mrb[0].mxu0
      %1166 = vmatprep.mubr.f32.mxu0 0.0
      %1167 = vmatmul.mubr.f32.gmra.mrb[0].mxu0 %v1024
      %v1168 = vpop.f32.mrb[0].mxu0
      %v1169 = vadd.f32 0.0, %v1168
      %v1170 = vpop.f32.mrb[0].mxu0
      %1171 = vmatprep.mubr.f32.mxu0 0.0
      %1172 = vmatmul.mubr.f32.gmra.mrb[0].mxu0 %v1027
      %v1173 = vpop.f32.mrb[0].mxu0
      %v1174 = vadd.f32 0.0, %v1173
      %v1175 = vpop.f32.mrb[0].mxu0
      %1176 = vdwg.mxu0
      %v1177 = vadd.f32 %v963, %v1099
      %v1178 = vadd.f32 %v964, %v1104
      %v1179 = vadd.f32 %v965, %v1109
      %v1180 = vadd.f32 %v966, %v1114
      %v1181 = vadd.f32 %v967, %v1119
      %v1182 = vadd.f32 %v968, %v1124
      %v1183 = vadd.f32 %v969, %v1129
      %v1184 = vadd.f32 %v970, %v1134
      %v1185 = vadd.f32 %v971, %v1139
      %v1186 = vadd.f32 %v972, %v1144
      %v1187 = vadd.f32 %v973, %v1149
      %v1188 = vadd.f32 %v974, %v1154
      %v1189 = vadd.f32 %v975, %v1159
      %v1190 = vadd.f32 %v976, %v1164
      %v1191 = vadd.f32 %v977, %v1169
      %v1192 = vadd.f32 %v978, %v1174
      %1193 = vst.msk [vmem:[#allocation3] sm:$0xff] %vm390, %v1177
      %1194 = vst.msk [vmem:[#allocation3 + $0x8] sm:$0xff] %vm390, %v1178
      %1195 = vst.msk [vmem:[#allocation3 + $0x10] sm:$0xff] %vm390, %v1179
      %1196 = vst.msk [vmem:[#allocation3 + $0x18] sm:$0xff] %vm390, %v1180
      %1197 = vst.msk [vmem:[#allocation3 + $0x20] sm:$0xff] %vm390, %v1181
      %1198 = vst.msk [vmem:[#allocation3 + $0x28] sm:$0xff] %vm390, %v1182
      %1199 = vst.msk [vmem:[#allocation3 + $0x30] sm:$0xff] %vm390, %v1183
      %1200 = vst.msk [vmem:[#allocation3 + $0x38] sm:$0xff] %vm390, %v1184
      %1201 = vst.msk [vmem:[#allocation3 + $0x40] sm:$0xff] %vm390, %v1185
      %1202 = vst.msk [vmem:[#allocation3 + $0x48] sm:$0xff] %vm390, %v1186
      %1203 = vst.msk [vmem:[#allocation3 + $0x50] sm:$0xff] %vm390, %v1187
      %1204 = vst.msk [vmem:[#allocation3 + $0x58] sm:$0xff] %vm390, %v1188
      %1205 = vst.msk [vmem:[#allocation3 + $0x60] sm:$0xff] %vm390, %v1189
      %1206 = vst.msk [vmem:[#allocation3 + $0x68] sm:$0xff] %vm390, %v1190
      %1207 = vst.msk [vmem:[#allocation3 + $0x70] sm:$0xff] %vm390, %v1191
      %1208 = vst.msk [vmem:[#allocation3 + $0x78] sm:$0xff] %vm390, %v1192
      %s1209 = scalar_lea.vmem [#allocation2], 24
      %v1210 = vld [vmem:[%s1209] sm:$0xff]
      %v1211 = vld [vmem:[%s1209 + $0x8] sm:$0xff]
      %v1212 = vld [vmem:[%s1209 + $0x18] sm:$0xff]
      %v1213 = vld [vmem:[%s1209 + $0x20] sm:$0xff]
      %v1214 = vld [vmem:[%s1209 + $0x30] sm:$0xff]
      %v1215 = vld [vmem:[%s1209 + $0x38] sm:$0xff]
      %v1216 = vld [vmem:[%s1209 + $0x48] sm:$0xff]
      %v1217 = vld [vmem:[%s1209 + $0x50] sm:$0xff]
      %v1218 = vld [vmem:[%s1209 + $0x60] sm:$0xff]
      %v1219 = vld [vmem:[%s1209 + $0x68] sm:$0xff]
      %v1220 = vld [vmem:[%s1209 + $0x78] sm:$0xff]
      %v1221 = vld [vmem:[%s1209 + $0x80] sm:$0xff]
      %v1222 = vld [vmem:[%s1209 + $0x90] sm:$0xff]
      %v1223 = vld [vmem:[%s1209 + $0x98] sm:$0xff]
      %v1224 = vld [vmem:[%s1209 + $0xa8] sm:$0xff]
      %v1225 = vld [vmem:[%s1209 + $0xb0] sm:$0xff]
      %v1226 = vld [vmem:[#allocation3] sm:$0xff]
      %v1227 = vld [vmem:[#allocation3 + $0x8] sm:$0xff]
      %v1228 = vld [vmem:[#allocation3 + $0x10] sm:$0xff]
      %v1229 = vld [vmem:[#allocation3 + $0x18] sm:$0xff]
      %v1230 = vld [vmem:[#allocation3 + $0x20] sm:$0xff]
      %v1231 = vld [vmem:[#allocation3 + $0x28] sm:$0xff]
      %v1232 = vld [vmem:[#allocation3 + $0x30] sm:$0xff]
      %v1233 = vld [vmem:[#allocation3 + $0x38] sm:$0xff]
      %v1234 = vld [vmem:[#allocation3 + $0x40] sm:$0xff]
      %v1235 = vld [vmem:[#allocation3 + $0x48] sm:$0xff]
      %v1236 = vld [vmem:[#allocation3 + $0x50] sm:$0xff]
      %v1237 = vld [vmem:[#allocation3 + $0x58] sm:$0xff]
      %v1238 = vld [vmem:[#allocation3 + $0x60] sm:$0xff]
      %v1239 = vld [vmem:[#allocation3 + $0x68] sm:$0xff]
      %v1240 = vld [vmem:[#allocation3 + $0x70] sm:$0xff]
      %v1241 = vld [vmem:[#allocation3 + $0x78] sm:$0xff]
      %s1242 = scalar_lea.vmem %s2, 12
      %v1243 = vld [vmem:[%s1242] sm:$0xf]
      %v1245 = vsel %vm344, %v1210, 0
      %v1248 = vsel %vm344, %v1211, 0
      %v1251 = vsel %vm344, %v1212, 0
      %v1254 = vsel %vm344, %v1213, 0
      %v1257 = vsel %vm344, %v1214, 0
      %v1260 = vsel %vm344, %v1215, 0
      %v1263 = vsel %vm344, %v1216, 0
      %v1266 = vsel %vm344, %v1217, 0
      %v1269 = vsel %vm344, %v1218, 0
      %v1272 = vsel %vm344, %v1219, 0
      %v1275 = vsel %vm344, %v1220, 0
      %v1278 = vsel %vm344, %v1221, 0
      %v1281 = vsel %vm344, %v1222, 0
      %v1284 = vsel %vm344, %v1223, 0
      %v1287 = vsel %vm344, %v1224, 0
      %v1290 = vsel %vm344, %v1225, 0
      %v1293 = vsel %vm504, %v1243, 0
      %1295 = vmatprep.subr.mxu0 0.0
      %1296 = vmatpush1.msra.mxu0 %v1293
      %1297 = vmatprep.subr.mxu0 0.0
      %1298 = vmatpush1.msra.mxu0 0.0
      %1299 = vmatprep.subr.mxu0 0.0
      %1300 = vmatpush1.msra.mxu0 0.0
      %1301 = vmatprep.subr.mxu0 0.0
      %1302 = vmatpush1.msra.mxu0 0.0
      %1303 = vmatprep.subr.mxu0 0.0
      %1304 = vmatpush1.msra.mxu0 0.0
      %1305 = vmatprep.subr.mxu0 0.0
      %1306 = vmatpush1.msra.mxu0 0.0
      %1307 = vmatprep.subr.mxu0 0.0
      %1308 = vmatpush1.msra.mxu0 0.0
      %1309 = vmatprep.subr.mxu0 0.0
      %1310 = vmatpush1.msra.mxu0 0.0
      %1311 = vmatprep.subr.mxu0 0.0
      %1312 = vmatpush1.msra.mxu0 0.0
      %1313 = vmatprep.subr.mxu0 0.0
      %1314 = vmatpush1.msra.mxu0 0.0
      %1315 = vmatprep.subr.mxu0 0.0
      %1316 = vmatpush1.msra.mxu0 0.0
      %1317 = vmatprep.subr.mxu0 0.0
      %1318 = vmatpush1.msra.mxu0 0.0
      %1319 = vmatprep.subr.mxu0 0.0
      %1320 = vmatpush1.msra.mxu0 0.0
      %1321 = vmatprep.subr.mxu0 0.0
      %1322 = vmatpush1.msra.mxu0 0.0
      %1323 = vmatprep.subr.mxu0 0.0
      %1324 = vmatpush1.msra.mxu0 0.0
      %1325 = vmatprep.subr.mxu0 0.0
      %1326 = vmatpush1.msra.mxu0 0.0
      %1327 = vmatprep.subr.mxu0 0.0
      %1328 = vmatpush1.msra.mxu0 0.0
      %1329 = vmatprep.subr.mxu0 0.0
      %1330 = vmatpush1.msra.mxu0 0.0
      %1331 = vmatprep.subr.mxu0 0.0
      %1332 = vmatpush1.msra.mxu0 0.0
      %1333 = vmatprep.subr.mxu0 0.0
      %1334 = vmatpush1.msra.mxu0 0.0
      %1335 = vmatprep.subr.mxu0 0.0
      %1336 = vmatpush1.msra.mxu0 0.0
      %1337 = vmatprep.subr.mxu0 0.0
      %1338 = vmatpush1.msra.mxu0 0.0
      %1339 = vmatprep.subr.mxu0 0.0
      %1340 = vmatpush1.msra.mxu0 0.0
      %1341 = vmatprep.subr.mxu0 0.0
      %1342 = vmatpush1.msra.mxu0 0.0
      %1343 = vmatprep.subr.mxu0 0.0
      %1344 = vmatpush1.msra.mxu0 0.0
      %1345 = vmatprep.subr.mxu0 0.0
      %1346 = vmatpush1.msra.mxu0 0.0
      %1347 = vmatprep.subr.mxu0 0.0
      %1348 = vmatpush1.msra.mxu0 0.0
      %1349 = vmatprep.subr.mxu0 0.0
      %1350 = vmatpush1.msra.mxu0 0.0
      %1351 = vmatprep.subr.mxu0 0.0
      %1352 = vmatpush1.msra.mxu0 0.0
      %1353 = vmatprep.subr.mxu0 0.0
      %1354 = vmatpush1.msra.mxu0 0.0
      %1355 = vmatprep.subr.mxu0 0.0
      %1356 = vmatpush1.msra.mxu0 0.0
      %1357 = vmatprep.subr.mxu0 0.0
      %1358 = vmatpush1.msra.mxu0 0.0
      %1359 = vmatprep.mubr.f32.mxu0 0.0
      %1360 = vmatmul.mubr.f32.gmra.mrb[0].mxu0 %v1245
      %v1361 = vpop.f32.mrb[0].mxu0
      %v1362 = vadd.f32 0.0, %v1361
      %v1363 = vpop.f32.mrb[0].mxu0
      %1364 = vmatprep.mubr.f32.mxu0 0.0
      %1365 = vmatmul.mubr.f32.gmra.mrb[0].mxu0 %v1248
      %v1366 = vpop.f32.mrb[0].mxu0
      %v1367 = vadd.f32 0.0, %v1366
      %v1368 = vpop.f32.mrb[0].mxu0
      %1369 = vmatprep.mubr.f32.mxu0 0.0
      %1370 = vmatmul.mubr.f32.gmra.mrb[0].mxu0 %v1251
      %v1371 = vpop.f32.mrb[0].mxu0
      %v1372 = vadd.f32 0.0, %v1371
      %v1373 = vpop.f32.mrb[0].mxu0
      %1374 = vmatprep.mubr.f32.mxu0 0.0
      %1375 = vmatmul.mubr.f32.gmra.mrb[0].mxu0 %v1254
      %v1376 = vpop.f32.mrb[0].mxu0
      %v1377 = vadd.f32 0.0, %v1376
      %v1378 = vpop.f32.mrb[0].mxu0
      %1379 = vmatprep.mubr.f32.mxu0 0.0
      %1380 = vmatmul.mubr.f32.gmra.mrb[0].mxu0 %v1257
      %v1381 = vpop.f32.mrb[0].mxu0
      %v1382 = vadd.f32 0.0, %v1381
      %v1383 = vpop.f32.mrb[0].mxu0
      %1384 = vmatprep.mubr.f32.mxu0 0.0
      %1385 = vmatmul.mubr.f32.gmra.mrb[0].mxu0 %v1260
      %v1386 = vpop.f32.mrb[0].mxu0
      %v1387 = vadd.f32 0.0, %v1386
      %v1388 = vpop.f32.mrb[0].mxu0
      %1389 = vmatprep.mubr.f32.mxu0 0.0
      %1390 = vmatmul.mubr.f32.gmra.mrb[0].mxu0 %v1263
      %v1391 = vpop.f32.mrb[0].mxu0
      %v1392 = vadd.f32 0.0, %v1391
      %v1393 = vpop.f32.mrb[0].mxu0
      %1394 = vmatprep.mubr.f32.mxu0 0.0
      %1395 = vmatmul.mubr.f32.gmra.mrb[0].mxu0 %v1266
      %v1396 = vpop.f32.mrb[0].mxu0
      %v1397 = vadd.f32 0.0, %v1396
      %v1398 = vpop.f32.mrb[0].mxu0
      %1399 = vmatprep.mubr.f32.mxu0 0.0
      %1400 = vmatmul.mubr.f32.gmra.mrb[0].mxu0 %v1269
      %v1401 = vpop.f32.mrb[0].mxu0
      %v1402 = vadd.f32 0.0, %v1401
      %v1403 = vpop.f32.mrb[0].mxu0
      %1404 = vmatprep.mubr.f32.mxu0 0.0
      %1405 = vmatmul.mubr.f32.gmra.mrb[0].mxu0 %v1272
      %v1406 = vpop.f32.mrb[0].mxu0
      %v1407 = vadd.f32 0.0, %v1406
      %v1408 = vpop.f32.mrb[0].mxu0
      %1409 = vmatprep.mubr.f32.mxu0 0.0
      %1410 = vmatmul.mubr.f32.gmra.mrb[0].mxu0 %v1275
      %v1411 = vpop.f32.mrb[0].mxu0
      %v1412 = vadd.f32 0.0, %v1411
      %v1413 = vpop.f32.mrb[0].mxu0
      %1414 = vmatprep.mubr.f32.mxu0 0.0
      %1415 = vmatmul.mubr.f32.gmra.mrb[0].mxu0 %v1278
      %v1416 = vpop.f32.mrb[0].mxu0
      %v1417 = vadd.f32 0.0, %v1416
      %v1418 = vpop.f32.mrb[0].mxu0
      %1419 = vmatprep.mubr.f32.mxu0 0.0
      %1420 = vmatmul.mubr.f32.gmra.mrb[0].mxu0 %v1281
      %v1421 = vpop.f32.mrb[0].mxu0
      %v1422 = vadd.f32 0.0, %v1421
      %v1423 = vpop.f32.mrb[0].mxu0
      %1424 = vmatprep.mubr.f32.mxu0 0.0
      %1425 = vmatmul.mubr.f32.gmra.mrb[0].mxu0 %v1284
      %v1426 = vpop.f32.mrb[0].mxu0
      %v1427 = vadd.f32 0.0, %v1426
      %v1428 = vpop.f32.mrb[0].mxu0
      %1429 = vmatprep.mubr.f32.mxu0 0.0
      %1430 = vmatmul.mubr.f32.gmra.mrb[0].mxu0 %v1287
      %v1431 = vpop.f32.mrb[0].mxu0
      %v1432 = vadd.f32 0.0, %v1431
      %v1433 = vpop.f32.mrb[0].mxu0
      %1434 = vmatprep.mubr.f32.mxu0 0.0
      %1435 = vmatmul.mubr.f32.gmra.mrb[0].mxu0 %v1290
      %v1436 = vpop.f32.mrb[0].mxu0
      %v1437 = vadd.f32 0.0, %v1436
      %v1438 = vpop.f32.mrb[0].mxu0
      %1439 = vdwg.mxu0
      %v1440 = vadd.f32 %v1226, %v1362
      %v1441 = vadd.f32 %v1227, %v1367
      %v1442 = vadd.f32 %v1228, %v1372
      %v1443 = vadd.f32 %v1229, %v1377
      %v1444 = vadd.f32 %v1230, %v1382
      %v1445 = vadd.f32 %v1231, %v1387
      %v1446 = vadd.f32 %v1232, %v1392
      %v1447 = vadd.f32 %v1233, %v1397
      %v1448 = vadd.f32 %v1234, %v1402
      %v1449 = vadd.f32 %v1235, %v1407
      %v1450 = vadd.f32 %v1236, %v1412
      %v1451 = vadd.f32 %v1237, %v1417
      %v1452 = vadd.f32 %v1238, %v1422
      %v1453 = vadd.f32 %v1239, %v1427
      %v1454 = vadd.f32 %v1240, %v1432
      %v1455 = vadd.f32 %v1241, %v1437
      %1456 = vst.msk [vmem:[#allocation3] sm:$0xff] %vm390, %v1440
      %1457 = vst.msk [vmem:[#allocation3 + $0x8] sm:$0xff] %vm390, %v1441
      %1458 = vst.msk [vmem:[#allocation3 + $0x10] sm:$0xff] %vm390, %v1442
      %1459 = vst.msk [vmem:[#allocation3 + $0x18] sm:$0xff] %vm390, %v1443
      %1460 = vst.msk [vmem:[#allocation3 + $0x20] sm:$0xff] %vm390, %v1444
      %1461 = vst.msk [vmem:[#allocation3 + $0x28] sm:$0xff] %vm390, %v1445
      %1462 = vst.msk [vmem:[#allocation3 + $0x30] sm:$0xff] %vm390, %v1446
      %1463 = vst.msk [vmem:[#allocation3 + $0x38] sm:$0xff] %vm390, %v1447
      %1464 = vst.msk [vmem:[#allocation3 + $0x40] sm:$0xff] %vm390, %v1448
      %1465 = vst.msk [vmem:[#allocation3 + $0x48] sm:$0xff] %vm390, %v1449
      %1466 = vst.msk [vmem:[#allocation3 + $0x50] sm:$0xff] %vm390, %v1450
      %1467 = vst.msk [vmem:[#allocation3 + $0x58] sm:$0xff] %vm390, %v1451
      %1468 = vst.msk [vmem:[#allocation3 + $0x60] sm:$0xff] %vm390, %v1452
      %1469 = vst.msk [vmem:[#allocation3 + $0x68] sm:$0xff] %vm390, %v1453
      %1470 = vst.msk [vmem:[#allocation3 + $0x70] sm:$0xff] %vm390, %v1454
      %1471 = vst.msk [vmem:[#allocation3 + $0x78] sm:$0xff] %vm390, %v1455
      %v1472 = vld [vmem:[#allocation4] sm:$0xff]
      %v1473 = vld [vmem:[#allocation4 + $0x8] sm:$0xff]
      %v1474 = vld [vmem:[#allocation4 + $0x10] sm:$0xff]
      %v1475 = vld [vmem:[#allocation4 + $0x18] sm:$0xff]
      %v1476 = vld [vmem:[#allocation4 + $0x20] sm:$0xff]
      %v1477 = vld [vmem:[#allocation4 + $0x28] sm:$0xff]
      %v1478 = vld [vmem:[#allocation4 + $0x30] sm:$0xff]
      %v1479 = vld [vmem:[#allocation4 + $0x38] sm:$0xff]
      %v1480 = vld [vmem:[#allocation4 + $0x40] sm:$0xff]
      %v1481 = vld [vmem:[#allocation4 + $0x48] sm:$0xff]
      %v1482 = vld [vmem:[#allocation4 + $0x50] sm:$0xff]
      %v1483 = vld [vmem:[#allocation4 + $0x58] sm:$0xff]
      %v1484 = vld [vmem:[#allocation4 + $0x60] sm:$0xff]
      %v1485 = vld [vmem:[#allocation4 + $0x68] sm:$0xff]
      %v1486 = vld [vmem:[#allocation4 + $0x70] sm:$0xff]
      %v1487 = vld [vmem:[#allocation4 + $0x78] sm:$0xff]
      %s1488 = scalar_lea.vmem %s2, 48
      %v1489 = vld [vmem:[%s1488] sm:$0xf]
      %v1491 = vsel %vm504, %v1489, 0
      %1493 = vmatprep.subr.mxu0 0.0
      %1494 = vmatpush1.msra.mxu0 %v1491
      %1495 = vmatprep.subr.mxu0 0.0
      %1496 = vmatpush1.msra.mxu0 0.0
      %1497 = vmatprep.subr.mxu0 0.0
      %1498 = vmatpush1.msra.mxu0 0.0
      %1499 = vmatprep.subr.mxu0 0.0
      %1500 = vmatpush1.msra.mxu0 0.0
      %1501 = vmatprep.subr.mxu0 0.0
      %1502 = vmatpush1.msra.mxu0 0.0
      %1503 = vmatprep.subr.mxu0 0.0
      %1504 = vmatpush1.msra.mxu0 0.0
      %1505 = vmatprep.subr.mxu0 0.0
      %1506 = vmatpush1.msra.mxu0 0.0
      %1507 = vmatprep.subr.mxu0 0.0
      %1508 = vmatpush1.msra.mxu0 0.0
      %1509 = vmatprep.subr.mxu0 0.0
      %1510 = vmatpush1.msra.mxu0 0.0
      %1511 = vmatprep.subr.mxu0 0.0
      %1512 = vmatpush1.msra.mxu0 0.0
      %1513 = vmatprep.subr.mxu0 0.0
      %1514 = vmatpush1.msra.mxu0 0.0
      %1515 = vmatprep.subr.mxu0 0.0
      %1516 = vmatpush1.msra.mxu0 0.0
      %1517 = vmatprep.subr.mxu0 0.0
      %1518 = vmatpush1.msra.mxu0 0.0
      %1519 = vmatprep.subr.mxu0 0.0
      %1520 = vmatpush1.msra.mxu0 0.0
      %1521 = vmatprep.subr.mxu0 0.0
      %1522 = vmatpush1.msra.mxu0 0.0
      %1523 = vmatprep.subr.mxu0 0.0
      %1524 = vmatpush1.msra.mxu0 0.0
      %1525 = vmatprep.subr.mxu0 0.0
      %1526 = vmatpush1.msra.mxu0 0.0
      %1527 = vmatprep.subr.mxu0 0.0
      %1528 = vmatpush1.msra.mxu0 0.0
      %1529 = vmatprep.subr.mxu0 0.0
      %1530 = vmatpush1.msra.mxu0 0.0
      %1531 = vmatprep.subr.mxu0 0.0
      %1532 = vmatpush1.msra.mxu0 0.0
      %1533 = vmatprep.subr.mxu0 0.0
      %1534 = vmatpush1.msra.mxu0 0.0
      %1535 = vmatprep.subr.mxu0 0.0
      %1536 = vmatpush1.msra.mxu0 0.0
      %1537 = vmatprep.subr.mxu0 0.0
      %1538 = vmatpush1.msra.mxu0 0.0
      %1539 = vmatprep.subr.mxu0 0.0
      %1540 = vmatpush1.msra.mxu0 0.0
      %1541 = vmatprep.subr.mxu0 0.0
      %1542 = vmatpush1.msra.mxu0 0.0
      %1543 = vmatprep.subr.mxu0 0.0
      %1544 = vmatpush1.msra.mxu0 0.0
      %1545 = vmatprep.subr.mxu0 0.0
      %1546 = vmatpush1.msra.mxu0 0.0
      %1547 = vmatprep.subr.mxu0 0.0
      %1548 = vmatpush1.msra.mxu0 0.0
      %1549 = vmatprep.subr.mxu0 0.0
      %1550 = vmatpush1.msra.mxu0 0.0
      %1551 = vmatprep.subr.mxu0 0.0
      %1552 = vmatpush1.msra.mxu0 0.0
      %1553 = vmatprep.subr.mxu0 0.0
      %1554 = vmatpush1.msra.mxu0 0.0
      %1555 = vmatprep.subr.mxu0 0.0
      %1556 = vmatpush1.msra.mxu0 0.0
      %1557 = vmatprep.mubr.f32.mxu0 0.0
      %1558 = vmatmul.mubr.f32.gmra.mrb[0].mxu0 %v1245
      %v1559 = vpop.f32.mrb[0].mxu0
      %v1560 = vadd.f32 0.0, %v1559
      %v1561 = vpop.f32.mrb[0].mxu0
      %1562 = vmatprep.mubr.f32.mxu0 0.0
      %1563 = vmatmul.mubr.f32.gmra.mrb[0].mxu0 %v1248
      %v1564 = vpop.f32.mrb[0].mxu0
      %v1565 = vadd.f32 0.0, %v1564
      %v1566 = vpop.f32.mrb[0].mxu0
      %1567 = vmatprep.mubr.f32.mxu0 0.0
      %1568 = vmatmul.mubr.f32.gmra.mrb[0].mxu0 %v1251
      %v1569 = vpop.f32.mrb[0].mxu0
      %v1570 = vadd.f32 0.0, %v1569
      %v1571 = vpop.f32.mrb[0].mxu0
      %1572 = vmatprep.mubr.f32.mxu0 0.0
      %1573 = vmatmul.mubr.f32.gmra.mrb[0].mxu0 %v1254
      %v1574 = vpop.f32.mrb[0].mxu0
      %v1575 = vadd.f32 0.0, %v1574
      %v1576 = vpop.f32.mrb[0].mxu0
      %1577 = vmatprep.mubr.f32.mxu0 0.0
      %1578 = vmatmul.mubr.f32.gmra.mrb[0].mxu0 %v1257
      %v1579 = vpop.f32.mrb[0].mxu0
      %v1580 = vadd.f32 0.0, %v1579
      %v1581 = vpop.f32.mrb[0].mxu0
      %1582 = vmatprep.mubr.f32.mxu0 0.0
      %1583 = vmatmul.mubr.f32.gmra.mrb[0].mxu0 %v1260
      %v1584 = vpop.f32.mrb[0].mxu0
      %v1585 = vadd.f32 0.0, %v1584
      %v1586 = vpop.f32.mrb[0].mxu0
      %1587 = vmatprep.mubr.f32.mxu0 0.0
      %1588 = vmatmul.mubr.f32.gmra.mrb[0].mxu0 %v1263
      %v1589 = vpop.f32.mrb[0].mxu0
      %v1590 = vadd.f32 0.0, %v1589
      %v1591 = vpop.f32.mrb[0].mxu0
      %1592 = vmatprep.mubr.f32.mxu0 0.0
      %1593 = vmatmul.mubr.f32.gmra.mrb[0].mxu0 %v1266
      %v1594 = vpop.f32.mrb[0].mxu0
      %v1595 = vadd.f32 0.0, %v1594
      %v1596 = vpop.f32.mrb[0].mxu0
      %1597 = vmatprep.mubr.f32.mxu0 0.0
      %1598 = vmatmul.mubr.f32.gmra.mrb[0].mxu0 %v1269
      %v1599 = vpop.f32.mrb[0].mxu0
      %v1600 = vadd.f32 0.0, %v1599
      %v1601 = vpop.f32.mrb[0].mxu0
      %1602 = vmatprep.mubr.f32.mxu0 0.0
      %1603 = vmatmul.mubr.f32.gmra.mrb[0].mxu0 %v1272
      %v1604 = vpop.f32.mrb[0].mxu0
      %v1605 = vadd.f32 0.0, %v1604
      %v1606 = vpop.f32.mrb[0].mxu0
      %1607 = vmatprep.mubr.f32.mxu0 0.0
      %1608 = vmatmul.mubr.f32.gmra.mrb[0].mxu0 %v1275
      %v1609 = vpop.f32.mrb[0].mxu0
      %v1610 = vadd.f32 0.0, %v1609
      %v1611 = vpop.f32.mrb[0].mxu0
      %1612 = vmatprep.mubr.f32.mxu0 0.0
      %1613 = vmatmul.mubr.f32.gmra.mrb[0].mxu0 %v1278
      %v1614 = vpop.f32.mrb[0].mxu0
      %v1615 = vadd.f32 0.0, %v1614
      %v1616 = vpop.f32.mrb[0].mxu0
      %1617 = vmatprep.mubr.f32.mxu0 0.0
      %1618 = vmatmul.mubr.f32.gmra.mrb[0].mxu0 %v1281
      %v1619 = vpop.f32.mrb[0].mxu0
      %v1620 = vadd.f32 0.0, %v1619
      %v1621 = vpop.f32.mrb[0].mxu0
      %1622 = vmatprep.mubr.f32.mxu0 0.0
      %1623 = vmatmul.mubr.f32.gmra.mrb[0].mxu0 %v1284
      %v1624 = vpop.f32.mrb[0].mxu0
      %v1625 = vadd.f32 0.0, %v1624
      %v1626 = vpop.f32.mrb[0].mxu0
      %1627 = vmatprep.mubr.f32.mxu0 0.0
      %1628 = vmatmul.mubr.f32.gmra.mrb[0].mxu0 %v1287
      %v1629 = vpop.f32.mrb[0].mxu0
      %v1630 = vadd.f32 0.0, %v1629
      %v1631 = vpop.f32.mrb[0].mxu0
      %1632 = vmatprep.mubr.f32.mxu0 0.0
      %1633 = vmatmul.mubr.f32.gmra.mrb[0].mxu0 %v1290
      %v1634 = vpop.f32.mrb[0].mxu0
      %v1635 = vadd.f32 0.0, %v1634
      %v1636 = vpop.f32.mrb[0].mxu0
      %1637 = vdwg.mxu0
      %v1638 = vadd.f32 %v1472, %v1560
      %v1639 = vadd.f32 %v1473, %v1565
      %v1640 = vadd.f32 %v1474, %v1570
      %v1641 = vadd.f32 %v1475, %v1575
      %v1642 = vadd.f32 %v1476, %v1580
      %v1643 = vadd.f32 %v1477, %v1585
      %v1644 = vadd.f32 %v1478, %v1590
      %v1645 = vadd.f32 %v1479, %v1595
      %v1646 = vadd.f32 %v1480, %v1600
      %v1647 = vadd.f32 %v1481, %v1605
      %v1648 = vadd.f32 %v1482, %v1610
      %v1649 = vadd.f32 %v1483, %v1615
      %v1650 = vadd.f32 %v1484, %v1620
      %v1651 = vadd.f32 %v1485, %v1625
      %v1652 = vadd.f32 %v1486, %v1630
      %v1653 = vadd.f32 %v1487, %v1635
      %1654 = vst.msk [vmem:[#allocation4] sm:$0xff] %vm390, %v1638
      %1655 = vst.msk [vmem:[#allocation4 + $0x8] sm:$0xff] %vm390, %v1639
      %1656 = vst.msk [vmem:[#allocation4 + $0x10] sm:$0xff] %vm390, %v1640
      %1657 = vst.msk [vmem:[#allocation4 + $0x18] sm:$0xff] %vm390, %v1641
      %1658 = vst.msk [vmem:[#allocation4 + $0x20] sm:$0xff] %vm390, %v1642
      %1659 = vst.msk [vmem:[#allocation4 + $0x28] sm:$0xff] %vm390, %v1643
      %1660 = vst.msk [vmem:[#allocation4 + $0x30] sm:$0xff] %vm390, %v1644
      %1661 = vst.msk [vmem:[#allocation4 + $0x38] sm:$0xff] %vm390, %v1645
      %1662 = vst.msk [vmem:[#allocation4 + $0x40] sm:$0xff] %vm390, %v1646
      %1663 = vst.msk [vmem:[#allocation4 + $0x48] sm:$0xff] %vm390, %v1647
      %1664 = vst.msk [vmem:[#allocation4 + $0x50] sm:$0xff] %vm390, %v1648
      %1665 = vst.msk [vmem:[#allocation4 + $0x58] sm:$0xff] %vm390, %v1649
      %1666 = vst.msk [vmem:[#allocation4 + $0x60] sm:$0xff] %vm390, %v1650
      %1667 = vst.msk [vmem:[#allocation4 + $0x68] sm:$0xff] %vm390, %v1651
      %1668 = vst.msk [vmem:[#allocation4 + $0x70] sm:$0xff] %vm390, %v1652
      %1669 = vst.msk [vmem:[#allocation4 + $0x78] sm:$0xff] %vm390, %v1653
      %v1670 = vld [vmem:[%s1209 + $0x1] sm:$0xff]
      %v1671 = vld [vmem:[%s1209 + $0x9] sm:$0xff]
      %v1672 = vld [vmem:[%s1209 + $0x19] sm:$0xff]
      %v1673 = vld [vmem:[%s1209 + $0x21] sm:$0xff]
      %v1674 = vld [vmem:[%s1209 + $0x31] sm:$0xff]
      %v1675 = vld [vmem:[%s1209 + $0x39] sm:$0xff]
      %v1676 = vld [vmem:[%s1209 + $0x49] sm:$0xff]
      %v1677 = vld [vmem:[%s1209 + $0x51] sm:$0xff]
      %v1678 = vld [vmem:[%s1209 + $0x61] sm:$0xff]
      %v1679 = vld [vmem:[%s1209 + $0x69] sm:$0xff]
      %v1680 = vld [vmem:[%s1209 + $0x79] sm:$0xff]
      %v1681 = vld [vmem:[%s1209 + $0x81] sm:$0xff]
      %v1682 = vld [vmem:[%s1209 + $0x91] sm:$0xff]
      %v1683 = vld [vmem:[%s1209 + $0x99] sm:$0xff]
      %v1684 = vld [vmem:[%s1209 + $0xa9] sm:$0xff]
      %v1685 = vld [vmem:[%s1209 + $0xb1] sm:$0xff]
      %v1686 = vld [vmem:[#allocation3] sm:$0xff]
      %v1687 = vld [vmem:[#allocation3 + $0x8] sm:$0xff]
      %v1688 = vld [vmem:[#allocation3 + $0x10] sm:$0xff]
      %v1689 = vld [vmem:[#allocation3 + $0x18] sm:$0xff]
      %v1690 = vld [vmem:[#allocation3 + $0x20] sm:$0xff]
      %v1691 = vld [vmem:[#allocation3 + $0x28] sm:$0xff]
      %v1692 = vld [vmem:[#allocation3 + $0x30] sm:$0xff]
      %v1693 = vld [vmem:[#allocation3 + $0x38] sm:$0xff]
      %v1694 = vld [vmem:[#allocation3 + $0x40] sm:$0xff]
      %v1695 = vld [vmem:[#allocation3 + $0x48] sm:$0xff]
      %v1696 = vld [vmem:[#allocation3 + $0x50] sm:$0xff]
      %v1697 = vld [vmem:[#allocation3 + $0x58] sm:$0xff]
      %v1698 = vld [vmem:[#allocation3 + $0x60] sm:$0xff]
      %v1699 = vld [vmem:[#allocation3 + $0x68] sm:$0xff]
      %v1700 = vld [vmem:[#allocation3 + $0x70] sm:$0xff]
      %v1701 = vld [vmem:[#allocation3 + $0x78] sm:$0xff]
      %s1702 = scalar_lea.vmem %s2, 16
      %v1703 = vld [vmem:[%s1702] sm:$0xf]
      %v1705 = vsel %vm344, %v1670, 0
      %v1708 = vsel %vm344, %v1671, 0
      %v1711 = vsel %vm344, %v1672, 0
      %v1714 = vsel %vm344, %v1673, 0
      %v1717 = vsel %vm344, %v1674, 0
      %v1720 = vsel %vm344, %v1675, 0
      %v1723 = vsel %vm344, %v1676, 0
      %v1726 = vsel %vm344, %v1677, 0
      %v1729 = vsel %vm344, %v1678, 0
      %v1732 = vsel %vm344, %v1679, 0
      %v1735 = vsel %vm344, %v1680, 0
      %v1738 = vsel %vm344, %v1681, 0
      %v1741 = vsel %vm344, %v1682, 0
      %v1744 = vsel %vm344, %v1683, 0
      %v1747 = vsel %vm344, %v1684, 0
      %v1750 = vsel %vm344, %v1685, 0
      %v1753 = vsel %vm504, %v1703, 0
      %1755 = vmatprep.subr.mxu0 0.0
      %1756 = vmatpush1.msra.mxu0 %v1753
      %1757 = vmatprep.subr.mxu0 0.0
      %1758 = vmatpush1.msra.mxu0 0.0
      %1759 = vmatprep.subr.mxu0 0.0
      %1760 = vmatpush1.msra.mxu0 0.0
      %1761 = vmatprep.subr.mxu0 0.0
      %1762 = vmatpush1.msra.mxu0 0.0
      %1763 = vmatprep.subr.mxu0 0.0
      %1764 = vmatpush1.msra.mxu0 0.0
      %1765 = vmatprep.subr.mxu0 0.0
      %1766 = vmatpush1.msra.mxu0 0.0
      %1767 = vmatprep.subr.mxu0 0.0
      %1768 = vmatpush1.msra.mxu0 0.0
      %1769 = vmatprep.subr.mxu0 0.0
      %1770 = vmatpush1.msra.mxu0 0.0
      %1771 = vmatprep.subr.mxu0 0.0
      %1772 = vmatpush1.msra.mxu0 0.0
      %1773 = vmatprep.subr.mxu0 0.0
      %1774 = vmatpush1.msra.mxu0 0.0
      %1775 = vmatprep.subr.mxu0 0.0
      %1776 = vmatpush1.msra.mxu0 0.0
      %1777 = vmatprep.subr.mxu0 0.0
      %1778 = vmatpush1.msra.mxu0 0.0
      %1779 = vmatprep.subr.mxu0 0.0
      %1780 = vmatpush1.msra.mxu0 0.0
      %1781 = vmatprep.subr.mxu0 0.0
      %1782 = vmatpush1.msra.mxu0 0.0
      %1783 = vmatprep.subr.mxu0 0.0
      %1784 = vmatpush1.msra.mxu0 0.0
      %1785 = vmatprep.subr.mxu0 0.0
      %1786 = vmatpush1.msra.mxu0 0.0
      %1787 = vmatprep.subr.mxu0 0.0
      %1788 = vmatpush1.msra.mxu0 0.0
      %1789 = vmatprep.subr.mxu0 0.0
      %1790 = vmatpush1.msra.mxu0 0.0
      %1791 = vmatprep.subr.mxu0 0.0
      %1792 = vmatpush1.msra.mxu0 0.0
      %1793 = vmatprep.subr.mxu0 0.0
      %1794 = vmatpush1.msra.mxu0 0.0
      %1795 = vmatprep.subr.mxu0 0.0
      %1796 = vmatpush1.msra.mxu0 0.0
      %1797 = vmatprep.subr.mxu0 0.0
      %1798 = vmatpush1.msra.mxu0 0.0
      %1799 = vmatprep.subr.mxu0 0.0
      %1800 = vmatpush1.msra.mxu0 0.0
      %1801 = vmatprep.subr.mxu0 0.0
      %1802 = vmatpush1.msra.mxu0 0.0
      %1803 = vmatprep.subr.mxu0 0.0
      %1804 = vmatpush1.msra.mxu0 0.0
      %1805 = vmatprep.subr.mxu0 0.0
      %1806 = vmatpush1.msra.mxu0 0.0
      %1807 = vmatprep.subr.mxu0 0.0
      %1808 = vmatpush1.msra.mxu0 0.0
      %1809 = vmatprep.subr.mxu0 0.0
      %1810 = vmatpush1.msra.mxu0 0.0
      %1811 = vmatprep.subr.mxu0 0.0
      %1812 = vmatpush1.msra.mxu0 0.0
      %1813 = vmatprep.subr.mxu0 0.0
      %1814 = vmatpush1.msra.mxu0 0.0
      %1815 = vmatprep.subr.mxu0 0.0
      %1816 = vmatpush1.msra.mxu0 0.0
      %1817 = vmatprep.subr.mxu0 0.0
      %1818 = vmatpush1.msra.mxu0 0.0
      %1819 = vmatprep.mubr.f32.mxu0 0.0
      %1820 = vmatmul.mubr.f32.gmra.mrb[0].mxu0 %v1705
      %v1821 = vpop.f32.mrb[0].mxu0
      %v1822 = vadd.f32 0.0, %v1821
      %v1823 = vpop.f32.mrb[0].mxu0
      %1824 = vmatprep.mubr.f32.mxu0 0.0
      %1825 = vmatmul.mubr.f32.gmra.mrb[0].mxu0 %v1708
      %v1826 = vpop.f32.mrb[0].mxu0
      %v1827 = vadd.f32 0.0, %v1826
      %v1828 = vpop.f32.mrb[0].mxu0
      %1829 = vmatprep.mubr.f32.mxu0 0.0
      %1830 = vmatmul.mubr.f32.gmra.mrb[0].mxu0 %v1711
      %v1831 = vpop.f32.mrb[0].mxu0
      %v1832 = vadd.f32 0.0, %v1831
      %v1833 = vpop.f32.mrb[0].mxu0
      %1834 = vmatprep.mubr.f32.mxu0 0.0
      %1835 = vmatmul.mubr.f32.gmra.mrb[0].mxu0 %v1714
      %v1836 = vpop.f32.mrb[0].mxu0
      %v1837 = vadd.f32 0.0, %v1836
      %v1838 = vpop.f32.mrb[0].mxu0
      %1839 = vmatprep.mubr.f32.mxu0 0.0
      %1840 = vmatmul.mubr.f32.gmra.mrb[0].mxu0 %v1717
      %v1841 = vpop.f32.mrb[0].mxu0
      %v1842 = vadd.f32 0.0, %v1841
      %v1843 = vpop.f32.mrb[0].mxu0
      %1844 = vmatprep.mubr.f32.mxu0 0.0
      %1845 = vmatmul.mubr.f32.gmra.mrb[0].mxu0 %v1720
      %v1846 = vpop.f32.mrb[0].mxu0
      %v1847 = vadd.f32 0.0, %v1846
      %v1848 = vpop.f32.mrb[0].mxu0
      %1849 = vmatprep.mubr.f32.mxu0 0.0
      %1850 = vmatmul.mubr.f32.gmra.mrb[0].mxu0 %v1723
      %v1851 = vpop.f32.mrb[0].mxu0
      %v1852 = vadd.f32 0.0, %v1851
      %v1853 = vpop.f32.mrb[0].mxu0
      %1854 = vmatprep.mubr.f32.mxu0 0.0
      %1855 = vmatmul.mubr.f32.gmra.mrb[0].mxu0 %v1726
      %v1856 = vpop.f32.mrb[0].mxu0
      %v1857 = vadd.f32 0.0, %v1856
      %v1858 = vpop.f32.mrb[0].mxu0
      %1859 = vmatprep.mubr.f32.mxu0 0.0
      %1860 = vmatmul.mubr.f32.gmra.mrb[0].mxu0 %v1729
      %v1861 = vpop.f32.mrb[0].mxu0
      %v1862 = vadd.f32 0.0, %v1861
      %v1863 = vpop.f32.mrb[0].mxu0
      %1864 = vmatprep.mubr.f32.mxu0 0.0
      %1865 = vmatmul.mubr.f32.gmra.mrb[0].mxu0 %v1732
      %v1866 = vpop.f32.mrb[0].mxu0
      %v1867 = vadd.f32 0.0, %v1866
      %v1868 = vpop.f32.mrb[0].mxu0
      %1869 = vmatprep.mubr.f32.mxu0 0.0
      %1870 = vmatmul.mubr.f32.gmra.mrb[0].mxu0 %v1735
      %v1871 = vpop.f32.mrb[0].mxu0
      %v1872 = vadd.f32 0.0, %v1871
      %v1873 = vpop.f32.mrb[0].mxu0
      %1874 = vmatprep.mubr.f32.mxu0 0.0
      %1875 = vmatmul.mubr.f32.gmra.mrb[0].mxu0 %v1738
      %v1876 = vpop.f32.mrb[0].mxu0
      %v1877 = vadd.f32 0.0, %v1876
      %v1878 = vpop.f32.mrb[0].mxu0
      %1879 = vmatprep.mubr.f32.mxu0 0.0
      %1880 = vmatmul.mubr.f32.gmra.mrb[0].mxu0 %v1741
      %v1881 = vpop.f32.mrb[0].mxu0
      %v1882 = vadd.f32 0.0, %v1881
      %v1883 = vpop.f32.mrb[0].mxu0
      %1884 = vmatprep.mubr.f32.mxu0 0.0
      %1885 = vmatmul.mubr.f32.gmra.mrb[0].mxu0 %v1744
      %v1886 = vpop.f32.mrb[0].mxu0
      %v1887 = vadd.f32 0.0, %v1886
      %v1888 = vpop.f32.mrb[0].mxu0
      %1889 = vmatprep.mubr.f32.mxu0 0.0
      %1890 = vmatmul.mubr.f32.gmra.mrb[0].mxu0 %v1747
      %v1891 = vpop.f32.mrb[0].mxu0
      %v1892 = vadd.f32 0.0, %v1891
      %v1893 = vpop.f32.mrb[0].mxu0
      %1894 = vmatprep.mubr.f32.mxu0 0.0
      %1895 = vmatmul.mubr.f32.gmra.mrb[0].mxu0 %v1750
      %v1896 = vpop.f32.mrb[0].mxu0
      %v1897 = vadd.f32 0.0, %v1896
      %v1898 = vpop.f32.mrb[0].mxu0
      %1899 = vdwg.mxu0
      %v1900 = vadd.f32 %v1686, %v1822
      %v1901 = vadd.f32 %v1687, %v1827
      %v1902 = vadd.f32 %v1688, %v1832
      %v1903 = vadd.f32 %v1689, %v1837
      %v1904 = vadd.f32 %v1690, %v1842
      %v1905 = vadd.f32 %v1691, %v1847
      %v1906 = vadd.f32 %v1692, %v1852
      %v1907 = vadd.f32 %v1693, %v1857
      %v1908 = vadd.f32 %v1694, %v1862
      %v1909 = vadd.f32 %v1695, %v1867
      %v1910 = vadd.f32 %v1696, %v1872
      %v1911 = vadd.f32 %v1697, %v1877
      %v1912 = vadd.f32 %v1698, %v1882
      %v1913 = vadd.f32 %v1699, %v1887
      %v1914 = vadd.f32 %v1700, %v1892
      %v1915 = vadd.f32 %v1701, %v1897
      %1916 = vst.msk [vmem:[#allocation3] sm:$0xff] %vm390, %v1900
      %1917 = vst.msk [vmem:[#allocation3 + $0x8] sm:$0xff] %vm390, %v1901
      %1918 = vst.msk [vmem:[#allocation3 + $0x10] sm:$0xff] %vm390, %v1902
      %1919 = vst.msk [vmem:[#allocation3 + $0x18] sm:$0xff] %vm390, %v1903
      %1920 = vst.msk [vmem:[#allocation3 + $0x20] sm:$0xff] %vm390, %v1904
      %1921 = vst.msk [vmem:[#allocation3 + $0x28] sm:$0xff] %vm390, %v1905
      %1922 = vst.msk [vmem:[#allocation3 + $0x30] sm:$0xff] %vm390, %v1906
      %1923 = vst.msk [vmem:[#allocation3 + $0x38] sm:$0xff] %vm390, %v1907
      %1924 = vst.msk [vmem:[#allocation3 + $0x40] sm:$0xff] %vm390, %v1908
      %1925 = vst.msk [vmem:[#allocation3 + $0x48] sm:$0xff] %vm390, %v1909
      %1926 = vst.msk [vmem:[#allocation3 + $0x50] sm:$0xff] %vm390, %v1910
      %1927 = vst.msk [vmem:[#allocation3 + $0x58] sm:$0xff] %vm390, %v1911
      %1928 = vst.msk [vmem:[#allocation3 + $0x60] sm:$0xff] %vm390, %v1912
      %1929 = vst.msk [vmem:[#allocation3 + $0x68] sm:$0xff] %vm390, %v1913
      %1930 = vst.msk [vmem:[#allocation3 + $0x70] sm:$0xff] %vm390, %v1914
      %1931 = vst.msk [vmem:[#allocation3 + $0x78] sm:$0xff] %vm390, %v1915
      %v1932 = vld [vmem:[#allocation4] sm:$0xff]
      %v1933 = vld [vmem:[#allocation4 + $0x8] sm:$0xff]
      %v1934 = vld [vmem:[#allocation4 + $0x10] sm:$0xff]
      %v1935 = vld [vmem:[#allocation4 + $0x18] sm:$0xff]
      %v1936 = vld [vmem:[#allocation4 + $0x20] sm:$0xff]
      %v1937 = vld [vmem:[#allocation4 + $0x28] sm:$0xff]
      %v1938 = vld [vmem:[#allocation4 + $0x30] sm:$0xff]
      %v1939 = vld [vmem:[#allocation4 + $0x38] sm:$0xff]
      %v1940 = vld [vmem:[#allocation4 + $0x40] sm:$0xff]
      %v1941 = vld [vmem:[#allocation4 + $0x48] sm:$0xff]
      %v1942 = vld [vmem:[#allocation4 + $0x50] sm:$0xff]
      %v1943 = vld [vmem:[#allocation4 + $0x58] sm:$0xff]
      %v1944 = vld [vmem:[#allocation4 + $0x60] sm:$0xff]
      %v1945 = vld [vmem:[#allocation4 + $0x68] sm:$0xff]
      %v1946 = vld [vmem:[#allocation4 + $0x70] sm:$0xff]
      %v1947 = vld [vmem:[#allocation4 + $0x78] sm:$0xff]
      %s1948 = scalar_lea.vmem %s2, 52
      %v1949 = vld [vmem:[%s1948] sm:$0xf]
      %v1951 = vsel %vm504, %v1949, 0
      %1953 = vmatprep.subr.mxu0 0.0
      %1954 = vmatpush1.msra.mxu0 %v1951
      %1955 = vmatprep.subr.mxu0 0.0
      %1956 = vmatpush1.msra.mxu0 0.0
      %1957 = vmatprep.subr.mxu0 0.0
      %1958 = vmatpush1.msra.mxu0 0.0
      %1959 = vmatprep.subr.mxu0 0.0
      %1960 = vmatpush1.msra.mxu0 0.0
      %1961 = vmatprep.subr.mxu0 0.0
      %1962 = vmatpush1.msra.mxu0 0.0
      %1963 = vmatprep.subr.mxu0 0.0
      %1964 = vmatpush1.msra.mxu0 0.0
      %1965 = vmatprep.subr.mxu0 0.0
      %1966 = vmatpush1.msra.mxu0 0.0
      %1967 = vmatprep.subr.mxu0 0.0
      %1968 = vmatpush1.msra.mxu0 0.0
      %1969 = vmatprep.subr.mxu0 0.0
      %1970 = vmatpush1.msra.mxu0 0.0
      %1971 = vmatprep.subr.mxu0 0.0
      %1972 = vmatpush1.msra.mxu0 0.0
      %1973 = vmatprep.subr.mxu0 0.0
      %1974 = vmatpush1.msra.mxu0 0.0
      %1975 = vmatprep.subr.mxu0 0.0
      %1976 = vmatpush1.msra.mxu0 0.0
      %1977 = vmatprep.subr.mxu0 0.0
      %1978 = vmatpush1.msra.mxu0 0.0
      %1979 = vmatprep.subr.mxu0 0.0
      %1980 = vmatpush1.msra.mxu0 0.0
      %1981 = vmatprep.subr.mxu0 0.0
      %1982 = vmatpush1.msra.mxu0 0.0
      %1983 = vmatprep.subr.mxu0 0.0
      %1984 = vmatpush1.msra.mxu0 0.0
      %1985 = vmatprep.subr.mxu0 0.0
      %1986 = vmatpush1.msra.mxu0 0.0
      %1987 = vmatprep.subr.mxu0 0.0
      %1988 = vmatpush1.msra.mxu0 0.0
      %1989 = vmatprep.subr.mxu0 0.0
      %1990 = vmatpush1.msra.mxu0 0.0
      %1991 = vmatprep.subr.mxu0 0.0
      %1992 = vmatpush1.msra.mxu0 0.0
      %1993 = vmatprep.subr.mxu0 0.0
      %1994 = vmatpush1.msra.mxu0 0.0
      %1995 = vmatprep.subr.mxu0 0.0
      %1996 = vmatpush1.msra.mxu0 0.0
      %1997 = vmatprep.subr.mxu0 0.0
      %1998 = vmatpush1.msra.mxu0 0.0
      %1999 = vmatprep.subr.mxu0 0.0
      %2000 = vmatpush1.msra.mxu0 0.0
      %2001 = vmatprep.subr.mxu0 0.0
      %2002 = vmatpush1.msra.mxu0 0.0
      %2003 = vmatprep.subr.mxu0 0.0
      %2004 = vmatpush1.msra.mxu0 0.0
      %2005 = vmatprep.subr.mxu0 0.0
      %2006 = vmatpush1.msra.mxu0 0.0
      %2007 = vmatprep.subr.mxu0 0.0
      %2008 = vmatpush1.msra.mxu0 0.0
      %2009 = vmatprep.subr.mxu0 0.0
      %2010 = vmatpush1.msra.mxu0 0.0
      %2011 = vmatprep.subr.mxu0 0.0
      %2012 = vmatpush1.msra.mxu0 0.0
      %2013 = vmatprep.subr.mxu0 0.0
      %2014 = vmatpush1.msra.mxu0 0.0
      %2015 = vmatprep.subr.mxu0 0.0
      %2016 = vmatpush1.msra.mxu0 0.0
      %2017 = vmatprep.mubr.f32.mxu0 0.0
      %2018 = vmatmul.mubr.f32.gmra.mrb[0].mxu0 %v1705
      %v2019 = vpop.f32.mrb[0].mxu0
      %v2020 = vadd.f32 0.0, %v2019
      %v2021 = vpop.f32.mrb[0].mxu0
      %2022 = vmatprep.mubr.f32.mxu0 0.0
      %2023 = vmatmul.mubr.f32.gmra.mrb[0].mxu0 %v1708
      %v2024 = vpop.f32.mrb[0].mxu0
      %v2025 = vadd.f32 0.0, %v2024
      %v2026 = vpop.f32.mrb[0].mxu0
      %2027 = vmatprep.mubr.f32.mxu0 0.0
      %2028 = vmatmul.mubr.f32.gmra.mrb[0].mxu0 %v1711
      %v2029 = vpop.f32.mrb[0].mxu0
      %v2030 = vadd.f32 0.0, %v2029
      %v2031 = vpop.f32.mrb[0].mxu0
      %2032 = vmatprep.mubr.f32.mxu0 0.0
      %2033 = vmatmul.mubr.f32.gmra.mrb[0].mxu0 %v1714
      %v2034 = vpop.f32.mrb[0].mxu0
      %v2035 = vadd.f32 0.0, %v2034
      %v2036 = vpop.f32.mrb[0].mxu0
      %2037 = vmatprep.mubr.f32.mxu0 0.0
      %2038 = vmatmul.mubr.f32.gmra.mrb[0].mxu0 %v1717
      %v2039 = vpop.f32.mrb[0].mxu0
      %v2040 = vadd.f32 0.0, %v2039
      %v2041 = vpop.f32.mrb[0].mxu0
      %2042 = vmatprep.mubr.f32.mxu0 0.0
      %2043 = vmatmul.mubr.f32.gmra.mrb[0].mxu0 %v1720
      %v2044 = vpop.f32.mrb[0].mxu0
      %v2045 = vadd.f32 0.0, %v2044
      %v2046 = vpop.f32.mrb[0].mxu0
      %2047 = vmatprep.mubr.f32.mxu0 0.0
      %2048 = vmatmul.mubr.f32.gmra.mrb[0].mxu0 %v1723
      %v2049 = vpop.f32.mrb[0].mxu0
      %v2050 = vadd.f32 0.0, %v2049
      %v2051 = vpop.f32.mrb[0].mxu0
      %2052 = vmatprep.mubr.f32.mxu0 0.0
      %2053 = vmatmul.mubr.f32.gmra.mrb[0].mxu0 %v1726
      %v2054 = vpop.f32.mrb[0].mxu0
      %v2055 = vadd.f32 0.0, %v2054
      %v2056 = vpop.f32.mrb[0].mxu0
      %2057 = vmatprep.mubr.f32.mxu0 0.0
      %2058 = vmatmul.mubr.f32.gmra.mrb[0].mxu0 %v1729
      %v2059 = vpop.f32.mrb[0].mxu0
      %v2060 = vadd.f32 0.0, %v2059
      %v2061 = vpop.f32.mrb[0].mxu0
      %2062 = vmatprep.mubr.f32.mxu0 0.0
      %2063 = vmatmul.mubr.f32.gmra.mrb[0].mxu0 %v1732
      %v2064 = vpop.f32.mrb[0].mxu0
      %v2065 = vadd.f32 0.0, %v2064
      %v2066 = vpop.f32.mrb[0].mxu0
      %2067 = vmatprep.mubr.f32.mxu0 0.0
      %2068 = vmatmul.mubr.f32.gmra.mrb[0].mxu0 %v1735
      %v2069 = vpop.f32.mrb[0].mxu0
      %v2070 = vadd.f32 0.0, %v2069
      %v2071 = vpop.f32.mrb[0].mxu0
      %2072 = vmatprep.mubr.f32.mxu0 0.0
      %2073 = vmatmul.mubr.f32.gmra.mrb[0].mxu0 %v1738
      %v2074 = vpop.f32.mrb[0].mxu0
      %v2075 = vadd.f32 0.0, %v2074
      %v2076 = vpop.f32.mrb[0].mxu0
      %2077 = vmatprep.mubr.f32.mxu0 0.0
      %2078 = vmatmul.mubr.f32.gmra.mrb[0].mxu0 %v1741
      %v2079 = vpop.f32.mrb[0].mxu0
      %v2080 = vadd.f32 0.0, %v2079
      %v2081 = vpop.f32.mrb[0].mxu0
      %2082 = vmatprep.mubr.f32.mxu0 0.0
      %2083 = vmatmul.mubr.f32.gmra.mrb[0].mxu0 %v1744
      %v2084 = vpop.f32.mrb[0].mxu0
      %v2085 = vadd.f32 0.0, %v2084
      %v2086 = vpop.f32.mrb[0].mxu0
      %2087 = vmatprep.mubr.f32.mxu0 0.0
      %2088 = vmatmul.mubr.f32.gmra.mrb[0].mxu0 %v1747
      %v2089 = vpop.f32.mrb[0].mxu0
      %v2090 = vadd.f32 0.0, %v2089
      %v2091 = vpop.f32.mrb[0].mxu0
      %2092 = vmatprep.mubr.f32.mxu0 0.0
      %2093 = vmatmul.mubr.f32.gmra.mrb[0].mxu0 %v1750
      %v2094 = vpop.f32.mrb[0].mxu0
      %v2095 = vadd.f32 0.0, %v2094
      %v2096 = vpop.f32.mrb[0].mxu0
      %2097 = vdwg.mxu0
      %v2098 = vadd.f32 %v1932, %v2020
      %v2099 = vadd.f32 %v1933, %v2025
      %v2100 = vadd.f32 %v1934, %v2030
      %v2101 = vadd.f32 %v1935, %v2035
      %v2102 = vadd.f32 %v1936, %v2040
      %v2103 = vadd.f32 %v1937, %v2045
      %v2104 = vadd.f32 %v1938, %v2050
      %v2105 = vadd.f32 %v1939, %v2055
      %v2106 = vadd.f32 %v1940, %v2060
      %v2107 = vadd.f32 %v1941, %v2065
      %v2108 = vadd.f32 %v1942, %v2070
      %v2109 = vadd.f32 %v1943, %v2075
      %v2110 = vadd.f32 %v1944, %v2080
      %v2111 = vadd.f32 %v1945, %v2085
      %v2112 = vadd.f32 %v1946, %v2090
      %v2113 = vadd.f32 %v1947, %v2095
      %2114 = vst.msk [vmem:[#allocation4] sm:$0xff] %vm390, %v2098
      %2115 = vst.msk [vmem:[#allocation4 + $0x8] sm:$0xff] %vm390, %v2099
      %2116 = vst.msk [vmem:[#allocation4 + $0x10] sm:$0xff] %vm390, %v2100
      %2117 = vst.msk [vmem:[#allocation4 + $0x18] sm:$0xff] %vm390, %v2101
      %2118 = vst.msk [vmem:[#allocation4 + $0x20] sm:$0xff] %vm390, %v2102
      %2119 = vst.msk [vmem:[#allocation4 + $0x28] sm:$0xff] %vm390, %v2103
      %2120 = vst.msk [vmem:[#allocation4 + $0x30] sm:$0xff] %vm390, %v2104
      %2121 = vst.msk [vmem:[#allocation4 + $0x38] sm:$0xff] %vm390, %v2105
      %2122 = vst.msk [vmem:[#allocation4 + $0x40] sm:$0xff] %vm390, %v2106
      %2123 = vst.msk [vmem:[#allocation4 + $0x48] sm:$0xff] %vm390, %v2107
      %2124 = vst.msk [vmem:[#allocation4 + $0x50] sm:$0xff] %vm390, %v2108
      %2125 = vst.msk [vmem:[#allocation4 + $0x58] sm:$0xff] %vm390, %v2109
      %2126 = vst.msk [vmem:[#allocation4 + $0x60] sm:$0xff] %vm390, %v2110
      %2127 = vst.msk [vmem:[#allocation4 + $0x68] sm:$0xff] %vm390, %v2111
      %2128 = vst.msk [vmem:[#allocation4 + $0x70] sm:$0xff] %vm390, %v2112
      %2129 = vst.msk [vmem:[#allocation4 + $0x78] sm:$0xff] %vm390, %v2113
      %v2130 = vld [vmem:[%s1209 + $0x2] sm:$0xff]
      %v2131 = vld [vmem:[%s1209 + $0xa] sm:$0xff]
      %v2132 = vld [vmem:[%s1209 + $0x1a] sm:$0xff]
      %v2133 = vld [vmem:[%s1209 + $0x22] sm:$0xff]
      %v2134 = vld [vmem:[%s1209 + $0x32] sm:$0xff]
      %v2135 = vld [vmem:[%s1209 + $0x3a] sm:$0xff]
      %v2136 = vld [vmem:[%s1209 + $0x4a] sm:$0xff]
      %v2137 = vld [vmem:[%s1209 + $0x52] sm:$0xff]
      %v2138 = vld [vmem:[%s1209 + $0x62] sm:$0xff]
      %v2139 = vld [vmem:[%s1209 + $0x6a] sm:$0xff]
      %v2140 = vld [vmem:[%s1209 + $0x7a] sm:$0xff]
      %v2141 = vld [vmem:[%s1209 + $0x82] sm:$0xff]
      %v2142 = vld [vmem:[%s1209 + $0x92] sm:$0xff]
      %v2143 = vld [vmem:[%s1209 + $0x9a] sm:$0xff]
      %v2144 = vld [vmem:[%s1209 + $0xaa] sm:$0xff]
      %v2145 = vld [vmem:[%s1209 + $0xb2] sm:$0xff]
      %v2146 = vld [vmem:[#allocation3] sm:$0xff]
      %v2147 = vld [vmem:[#allocation3 + $0x8] sm:$0xff]
      %v2148 = vld [vmem:[#allocation3 + $0x10] sm:$0xff]
      %v2149 = vld [vmem:[#allocation3 + $0x18] sm:$0xff]
      %v2150 = vld [vmem:[#allocation3 + $0x20] sm:$0xff]
      %v2151 = vld [vmem:[#allocation3 + $0x28] sm:$0xff]
      %v2152 = vld [vmem:[#allocation3 + $0x30] sm:$0xff]
      %v2153 = vld [vmem:[#allocation3 + $0x38] sm:$0xff]
      %v2154 = vld [vmem:[#allocation3 + $0x40] sm:$0xff]
      %v2155 = vld [vmem:[#allocation3 + $0x48] sm:$0xff]
      %v2156 = vld [vmem:[#allocation3 + $0x50] sm:$0xff]
      %v2157 = vld [vmem:[#allocation3 + $0x58] sm:$0xff]
      %v2158 = vld [vmem:[#allocation3 + $0x60] sm:$0xff]
      %v2159 = vld [vmem:[#allocation3 + $0x68] sm:$0xff]
      %v2160 = vld [vmem:[#allocation3 + $0x70] sm:$0xff]
      %v2161 = vld [vmem:[#allocation3 + $0x78] sm:$0xff]
      %s2162 = scalar_lea.vmem %s2, 20
      %v2163 = vld [vmem:[%s2162] sm:$0xf]
      %v2165 = vsel %vm344, %v2130, 0
      %v2168 = vsel %vm344, %v2131, 0
      %v2171 = vsel %vm344, %v2132, 0
      %v2174 = vsel %vm344, %v2133, 0
      %v2177 = vsel %vm344, %v2134, 0
      %v2180 = vsel %vm344, %v2135, 0
      %v2183 = vsel %vm344, %v2136, 0
      %v2186 = vsel %vm344, %v2137, 0
      %v2189 = vsel %vm344, %v2138, 0
      %v2192 = vsel %vm344, %v2139, 0
      %v2195 = vsel %vm344, %v2140, 0
      %v2198 = vsel %vm344, %v2141, 0
      %v2201 = vsel %vm344, %v2142, 0
      %v2204 = vsel %vm344, %v2143, 0
      %v2207 = vsel %vm344, %v2144, 0
      %v2210 = vsel %vm344, %v2145, 0
      %v2213 = vsel %vm504, %v2163, 0
      %2215 = vmatprep.subr.mxu0 0.0
      %2216 = vmatpush1.msra.mxu0 %v2213
      %2217 = vmatprep.subr.mxu0 0.0
      %2218 = vmatpush1.msra.mxu0 0.0
      %2219 = vmatprep.subr.mxu0 0.0
      %2220 = vmatpush1.msra.mxu0 0.0
      %2221 = vmatprep.subr.mxu0 0.0
      %2222 = vmatpush1.msra.mxu0 0.0
      %2223 = vmatprep.subr.mxu0 0.0
      %2224 = vmatpush1.msra.mxu0 0.0
      %2225 = vmatprep.subr.mxu0 0.0
      %2226 = vmatpush1.msra.mxu0 0.0
      %2227 = vmatprep.subr.mxu0 0.0
      %2228 = vmatpush1.msra.mxu0 0.0
      %2229 = vmatprep.subr.mxu0 0.0
      %2230 = vmatpush1.msra.mxu0 0.0
      %2231 = vmatprep.subr.mxu0 0.0
      %2232 = vmatpush1.msra.mxu0 0.0
      %2233 = vmatprep.subr.mxu0 0.0
      %2234 = vmatpush1.msra.mxu0 0.0
      %2235 = vmatprep.subr.mxu0 0.0
      %2236 = vmatpush1.msra.mxu0 0.0
      %2237 = vmatprep.subr.mxu0 0.0
      %2238 = vmatpush1.msra.mxu0 0.0
      %2239 = vmatprep.subr.mxu0 0.0
      %2240 = vmatpush1.msra.mxu0 0.0
      %2241 = vmatprep.subr.mxu0 0.0
      %2242 = vmatpush1.msra.mxu0 0.0
      %2243 = vmatprep.subr.mxu0 0.0
      %2244 = vmatpush1.msra.mxu0 0.0
      %2245 = vmatprep.subr.mxu0 0.0
      %2246 = vmatpush1.msra.mxu0 0.0
      %2247 = vmatprep.subr.mxu0 0.0
      %2248 = vmatpush1.msra.mxu0 0.0
      %2249 = vmatprep.subr.mxu0 0.0
      %2250 = vmatpush1.msra.mxu0 0.0
      %2251 = vmatprep.subr.mxu0 0.0
      %2252 = vmatpush1.msra.mxu0 0.0
      %2253 = vmatprep.subr.mxu0 0.0
      %2254 = vmatpush1.msra.mxu0 0.0
      %2255 = vmatprep.subr.mxu0 0.0
      %2256 = vmatpush1.msra.mxu0 0.0
      %2257 = vmatprep.subr.mxu0 0.0
      %2258 = vmatpush1.msra.mxu0 0.0
      %2259 = vmatprep.subr.mxu0 0.0
      %2260 = vmatpush1.msra.mxu0 0.0
      %2261 = vmatprep.subr.mxu0 0.0
      %2262 = vmatpush1.msra.mxu0 0.0
      %2263 = vmatprep.subr.mxu0 0.0
      %2264 = vmatpush1.msra.mxu0 0.0
      %2265 = vmatprep.subr.mxu0 0.0
      %2266 = vmatpush1.msra.mxu0 0.0
      %2267 = vmatprep.subr.mxu0 0.0
      %2268 = vmatpush1.msra.mxu0 0.0
      %2269 = vmatprep.subr.mxu0 0.0
      %2270 = vmatpush1.msra.mxu0 0.0
      %2271 = vmatprep.subr.mxu0 0.0
      %2272 = vmatpush1.msra.mxu0 0.0
      %2273 = vmatprep.subr.mxu0 0.0
      %2274 = vmatpush1.msra.mxu0 0.0
      %2275 = vmatprep.subr.mxu0 0.0
      %2276 = vmatpush1.msra.mxu0 0.0
      %2277 = vmatprep.subr.mxu0 0.0
      %2278 = vmatpush1.msra.mxu0 0.0
      %2279 = vmatprep.mubr.f32.mxu0 0.0
      %2280 = vmatmul.mubr.f32.gmra.mrb[0].mxu0 %v2165
      %v2281 = vpop.f32.mrb[0].mxu0
      %v2282 = vadd.f32 0.0, %v2281
      %v2283 = vpop.f32.mrb[0].mxu0
      %2284 = vmatprep.mubr.f32.mxu0 0.0
      %2285 = vmatmul.mubr.f32.gmra.mrb[0].mxu0 %v2168
      %v2286 = vpop.f32.mrb[0].mxu0
      %v2287 = vadd.f32 0.0, %v2286
      %v2288 = vpop.f32.mrb[0].mxu0
      %2289 = vmatprep.mubr.f32.mxu0 0.0
      %2290 = vmatmul.mubr.f32.gmra.mrb[0].mxu0 %v2171
      %v2291 = vpop.f32.mrb[0].mxu0
      %v2292 = vadd.f32 0.0, %v2291
      %v2293 = vpop.f32.mrb[0].mxu0
      %2294 = vmatprep.mubr.f32.mxu0 0.0
      %2295 = vmatmul.mubr.f32.gmra.mrb[0].mxu0 %v2174
      %v2296 = vpop.f32.mrb[0].mxu0
      %v2297 = vadd.f32 0.0, %v2296
      %v2298 = vpop.f32.mrb[0].mxu0
      %2299 = vmatprep.mubr.f32.mxu0 0.0
      %2300 = vmatmul.mubr.f32.gmra.mrb[0].mxu0 %v2177
      %v2301 = vpop.f32.mrb[0].mxu0
      %v2302 = vadd.f32 0.0, %v2301
      %v2303 = vpop.f32.mrb[0].mxu0
      %2304 = vmatprep.mubr.f32.mxu0 0.0
      %2305 = vmatmul.mubr.f32.gmra.mrb[0].mxu0 %v2180
      %v2306 = vpop.f32.mrb[0].mxu0
      %v2307 = vadd.f32 0.0, %v2306
      %v2308 = vpop.f32.mrb[0].mxu0
      %2309 = vmatprep.mubr.f32.mxu0 0.0
      %2310 = vmatmul.mubr.f32.gmra.mrb[0].mxu0 %v2183
      %v2311 = vpop.f32.mrb[0].mxu0
      %v2312 = vadd.f32 0.0, %v2311
      %v2313 = vpop.f32.mrb[0].mxu0
      %2314 = vmatprep.mubr.f32.mxu0 0.0
      %2315 = vmatmul.mubr.f32.gmra.mrb[0].mxu0 %v2186
      %v2316 = vpop.f32.mrb[0].mxu0
      %v2317 = vadd.f32 0.0, %v2316
      %v2318 = vpop.f32.mrb[0].mxu0
      %2319 = vmatprep.mubr.f32.mxu0 0.0
      %2320 = vmatmul.mubr.f32.gmra.mrb[0].mxu0 %v2189
      %v2321 = vpop.f32.mrb[0].mxu0
      %v2322 = vadd.f32 0.0, %v2321
      %v2323 = vpop.f32.mrb[0].mxu0
      %2324 = vmatprep.mubr.f32.mxu0 0.0
      %2325 = vmatmul.mubr.f32.gmra.mrb[0].mxu0 %v2192
      %v2326 = vpop.f32.mrb[0].mxu0
      %v2327 = vadd.f32 0.0, %v2326
      %v2328 = vpop.f32.mrb[0].mxu0
      %2329 = vmatprep.mubr.f32.mxu0 0.0
      %2330 = vmatmul.mubr.f32.gmra.mrb[0].mxu0 %v2195
      %v2331 = vpop.f32.mrb[0].mxu0
      %v2332 = vadd.f32 0.0, %v2331
      %v2333 = vpop.f32.mrb[0].mxu0
      %2334 = vmatprep.mubr.f32.mxu0 0.0
      %2335 = vmatmul.mubr.f32.gmra.mrb[0].mxu0 %v2198
      %v2336 = vpop.f32.mrb[0].mxu0
      %v2337 = vadd.f32 0.0, %v2336
      %v2338 = vpop.f32.mrb[0].mxu0
      %2339 = vmatprep.mubr.f32.mxu0 0.0
      %2340 = vmatmul.mubr.f32.gmra.mrb[0].mxu0 %v2201
      %v2341 = vpop.f32.mrb[0].mxu0
      %v2342 = vadd.f32 0.0, %v2341
      %v2343 = vpop.f32.mrb[0].mxu0
      %2344 = vmatprep.mubr.f32.mxu0 0.0
      %2345 = vmatmul.mubr.f32.gmra.mrb[0].mxu0 %v2204
      %v2346 = vpop.f32.mrb[0].mxu0
      %v2347 = vadd.f32 0.0, %v2346
      %v2348 = vpop.f32.mrb[0].mxu0
      %2349 = vmatprep.mubr.f32.mxu0 0.0
      %2350 = vmatmul.mubr.f32.gmra.mrb[0].mxu0 %v2207
      %v2351 = vpop.f32.mrb[0].mxu0
      %v2352 = vadd.f32 0.0, %v2351
      %v2353 = vpop.f32.mrb[0].mxu0
      %2354 = vmatprep.mubr.f32.mxu0 0.0
      %2355 = vmatmul.mubr.f32.gmra.mrb[0].mxu0 %v2210
      %v2356 = vpop.f32.mrb[0].mxu0
      %v2357 = vadd.f32 0.0, %v2356
      %v2358 = vpop.f32.mrb[0].mxu0
      %2359 = vdwg.mxu0
      %v2360 = vadd.f32 %v2146, %v2282
      %v2361 = vadd.f32 %v2147, %v2287
      %v2362 = vadd.f32 %v2148, %v2292
      %v2363 = vadd.f32 %v2149, %v2297
      %v2364 = vadd.f32 %v2150, %v2302
      %v2365 = vadd.f32 %v2151, %v2307
      %v2366 = vadd.f32 %v2152, %v2312
      %v2367 = vadd.f32 %v2153, %v2317
      %v2368 = vadd.f32 %v2154, %v2322
      %v2369 = vadd.f32 %v2155, %v2327
      %v2370 = vadd.f32 %v2156, %v2332
      %v2371 = vadd.f32 %v2157, %v2337
      %v2372 = vadd.f32 %v2158, %v2342
      %v2373 = vadd.f32 %v2159, %v2347
      %v2374 = vadd.f32 %v2160, %v2352
      %v2375 = vadd.f32 %v2161, %v2357
      %2376 = vst.msk [vmem:[#allocation3] sm:$0xff] %vm390, %v2360
      %2377 = vst.msk [vmem:[#allocation3 + $0x8] sm:$0xff] %vm390, %v2361
      %2378 = vst.msk [vmem:[#allocation3 + $0x10] sm:$0xff] %vm390, %v2362
      %2379 = vst.msk [vmem:[#allocation3 + $0x18] sm:$0xff] %vm390, %v2363
      %2380 = vst.msk [vmem:[#allocation3 + $0x20] sm:$0xff] %vm390, %v2364
      %2381 = vst.msk [vmem:[#allocation3 + $0x28] sm:$0xff] %vm390, %v2365
      %2382 = vst.msk [vmem:[#allocation3 + $0x30] sm:$0xff] %vm390, %v2366
      %2383 = vst.msk [vmem:[#allocation3 + $0x38] sm:$0xff] %vm390, %v2367
      %2384 = vst.msk [vmem:[#allocation3 + $0x40] sm:$0xff] %vm390, %v2368
      %2385 = vst.msk [vmem:[#allocation3 + $0x48] sm:$0xff] %vm390, %v2369
      %2386 = vst.msk [vmem:[#allocation3 + $0x50] sm:$0xff] %vm390, %v2370
      %2387 = vst.msk [vmem:[#allocation3 + $0x58] sm:$0xff] %vm390, %v2371
      %2388 = vst.msk [vmem:[#allocation3 + $0x60] sm:$0xff] %vm390, %v2372
      %2389 = vst.msk [vmem:[#allocation3 + $0x68] sm:$0xff] %vm390, %v2373
      %2390 = vst.msk [vmem:[#allocation3 + $0x70] sm:$0xff] %vm390, %v2374
      %2391 = vst.msk [vmem:[#allocation3 + $0x78] sm:$0xff] %vm390, %v2375
      %v2392 = vld [vmem:[#allocation4] sm:$0xff]
      %v2393 = vld [vmem:[#allocation4 + $0x8] sm:$0xff]
      %v2394 = vld [vmem:[#allocation4 + $0x10] sm:$0xff]
      %v2395 = vld [vmem:[#allocation4 + $0x18] sm:$0xff]
      %v2396 = vld [vmem:[#allocation4 + $0x20] sm:$0xff]
      %v2397 = vld [vmem:[#allocation4 + $0x28] sm:$0xff]
      %v2398 = vld [vmem:[#allocation4 + $0x30] sm:$0xff]
      %v2399 = vld [vmem:[#allocation4 + $0x38] sm:$0xff]
      %v2400 = vld [vmem:[#allocation4 + $0x40] sm:$0xff]
      %v2401 = vld [vmem:[#allocation4 + $0x48] sm:$0xff]
      %v2402 = vld [vmem:[#allocation4 + $0x50] sm:$0xff]
      %v2403 = vld [vmem:[#allocation4 + $0x58] sm:$0xff]
      %v2404 = vld [vmem:[#allocation4 + $0x60] sm:$0xff]
      %v2405 = vld [vmem:[#allocation4 + $0x68] sm:$0xff]
      %v2406 = vld [vmem:[#allocation4 + $0x70] sm:$0xff]
      %v2407 = vld [vmem:[#allocation4 + $0x78] sm:$0xff]
      %s2408 = scalar_lea.vmem %s2, 56
      %v2409 = vld [vmem:[%s2408] sm:$0xf]
      %v2411 = vsel %vm504, %v2409, 0
      %2413 = vmatprep.subr.mxu0 0.0
      %2414 = vmatpush1.msra.mxu0 %v2411
      %2415 = vmatprep.subr.mxu0 0.0
      %2416 = vmatpush1.msra.mxu0 0.0
      %2417 = vmatprep.subr.mxu0 0.0
      %2418 = vmatpush1.msra.mxu0 0.0
      %2419 = vmatprep.subr.mxu0 0.0
      %2420 = vmatpush1.msra.mxu0 0.0
      %2421 = vmatprep.subr.mxu0 0.0
      %2422 = vmatpush1.msra.mxu0 0.0
      %2423 = vmatprep.subr.mxu0 0.0
      %2424 = vmatpush1.msra.mxu0 0.0
      %2425 = vmatprep.subr.mxu0 0.0
      %2426 = vmatpush1.msra.mxu0 0.0
      %2427 = vmatprep.subr.mxu0 0.0
      %2428 = vmatpush1.msra.mxu0 0.0
      %2429 = vmatprep.subr.mxu0 0.0
      %2430 = vmatpush1.msra.mxu0 0.0
      %2431 = vmatprep.subr.mxu0 0.0
      %2432 = vmatpush1.msra.mxu0 0.0
      %2433 = vmatprep.subr.mxu0 0.0
      %2434 = vmatpush1.msra.mxu0 0.0
      %2435 = vmatprep.subr.mxu0 0.0
      %2436 = vmatpush1.msra.mxu0 0.0
      %2437 = vmatprep.subr.mxu0 0.0
      %2438 = vmatpush1.msra.mxu0 0.0
      %2439 = vmatprep.subr.mxu0 0.0
      %2440 = vmatpush1.msra.mxu0 0.0
      %2441 = vmatprep.subr.mxu0 0.0
      %2442 = vmatpush1.msra.mxu0 0.0
      %2443 = vmatprep.subr.mxu0 0.0
      %2444 = vmatpush1.msra.mxu0 0.0
      %2445 = vmatprep.subr.mxu0 0.0
      %2446 = vmatpush1.msra.mxu0 0.0
      %2447 = vmatprep.subr.mxu0 0.0
      %2448 = vmatpush1.msra.mxu0 0.0
      %2449 = vmatprep.subr.mxu0 0.0
      %2450 = vmatpush1.msra.mxu0 0.0
      %2451 = vmatprep.subr.mxu0 0.0
      %2452 = vmatpush1.msra.mxu0 0.0
      %2453 = vmatprep.subr.mxu0 0.0
      %2454 = vmatpush1.msra.mxu0 0.0
      %2455 = vmatprep.subr.mxu0 0.0
      %2456 = vmatpush1.msra.mxu0 0.0
      %2457 = vmatprep.subr.mxu0 0.0
      %2458 = vmatpush1.msra.mxu0 0.0
      %2459 = vmatprep.subr.mxu0 0.0
      %2460 = vmatpush1.msra.mxu0 0.0
      %2461 = vmatprep.subr.mxu0 0.0
      %2462 = vmatpush1.msra.mxu0 0.0
      %2463 = vmatprep.subr.mxu0 0.0
      %2464 = vmatpush1.msra.mxu0 0.0
      %2465 = vmatprep.subr.mxu0 0.0
      %2466 = vmatpush1.msra.mxu0 0.0
      %2467 = vmatprep.subr.mxu0 0.0
      %2468 = vmatpush1.msra.mxu0 0.0
      %2469 = vmatprep.subr.mxu0 0.0
      %2470 = vmatpush1.msra.mxu0 0.0
      %2471 = vmatprep.subr.mxu0 0.0
      %2472 = vmatpush1.msra.mxu0 0.0
      %2473 = vmatprep.subr.mxu0 0.0
      %2474 = vmatpush1.msra.mxu0 0.0
      %2475 = vmatprep.subr.mxu0 0.0
      %2476 = vmatpush1.msra.mxu0 0.0
      %2477 = vmatprep.mubr.f32.mxu0 0.0
      %2478 = vmatmul.mubr.f32.gmra.mrb[0].mxu0 %v2165
      %v2479 = vpop.f32.mrb[0].mxu0
      %v2480 = vadd.f32 0.0, %v2479
      %v2481 = vpop.f32.mrb[0].mxu0
      %2482 = vmatprep.mubr.f32.mxu0 0.0
      %2483 = vmatmul.mubr.f32.gmra.mrb[0].mxu0 %v2168
      %v2484 = vpop.f32.mrb[0].mxu0
      %v2485 = vadd.f32 0.0, %v2484
      %v2486 = vpop.f32.mrb[0].mxu0
      %2487 = vmatprep.mubr.f32.mxu0 0.0
      %2488 = vmatmul.mubr.f32.gmra.mrb[0].mxu0 %v2171
      %v2489 = vpop.f32.mrb[0].mxu0
      %v2490 = vadd.f32 0.0, %v2489
      %v2491 = vpop.f32.mrb[0].mxu0
      %2492 = vmatprep.mubr.f32.mxu0 0.0
      %2493 = vmatmul.mubr.f32.gmra.mrb[0].mxu0 %v2174
      %v2494 = vpop.f32.mrb[0].mxu0
      %v2495 = vadd.f32 0.0, %v2494
      %v2496 = vpop.f32.mrb[0].mxu0
      %2497 = vmatprep.mubr.f32.mxu0 0.0
      %2498 = vmatmul.mubr.f32.gmra.mrb[0].mxu0 %v2177
      %v2499 = vpop.f32.mrb[0].mxu0
      %v2500 = vadd.f32 0.0, %v2499
      %v2501 = vpop.f32.mrb[0].mxu0
      %2502 = vmatprep.mubr.f32.mxu0 0.0
      %2503 = vmatmul.mubr.f32.gmra.mrb[0].mxu0 %v2180
      %v2504 = vpop.f32.mrb[0].mxu0
      %v2505 = vadd.f32 0.0, %v2504
      %v2506 = vpop.f32.mrb[0].mxu0
      %2507 = vmatprep.mubr.f32.mxu0 0.0
      %2508 = vmatmul.mubr.f32.gmra.mrb[0].mxu0 %v2183
      %v2509 = vpop.f32.mrb[0].mxu0
      %v2510 = vadd.f32 0.0, %v2509
      %v2511 = vpop.f32.mrb[0].mxu0
      %2512 = vmatprep.mubr.f32.mxu0 0.0
      %2513 = vmatmul.mubr.f32.gmra.mrb[0].mxu0 %v2186
      %v2514 = vpop.f32.mrb[0].mxu0
      %v2515 = vadd.f32 0.0, %v2514
      %v2516 = vpop.f32.mrb[0].mxu0
      %2517 = vmatprep.mubr.f32.mxu0 0.0
      %2518 = vmatmul.mubr.f32.gmra.mrb[0].mxu0 %v2189
      %v2519 = vpop.f32.mrb[0].mxu0
      %v2520 = vadd.f32 0.0, %v2519
      %v2521 = vpop.f32.mrb[0].mxu0
      %2522 = vmatprep.mubr.f32.mxu0 0.0
      %2523 = vmatmul.mubr.f32.gmra.mrb[0].mxu0 %v2192
      %v2524 = vpop.f32.mrb[0].mxu0
      %v2525 = vadd.f32 0.0, %v2524
      %v2526 = vpop.f32.mrb[0].mxu0
      %2527 = vmatprep.mubr.f32.mxu0 0.0
      %2528 = vmatmul.mubr.f32.gmra.mrb[0].mxu0 %v2195
      %v2529 = vpop.f32.mrb[0].mxu0
      %v2530 = vadd.f32 0.0, %v2529
      %v2531 = vpop.f32.mrb[0].mxu0
      %2532 = vmatprep.mubr.f32.mxu0 0.0
      %2533 = vmatmul.mubr.f32.gmra.mrb[0].mxu0 %v2198
      %v2534 = vpop.f32.mrb[0].mxu0
      %v2535 = vadd.f32 0.0, %v2534
      %v2536 = vpop.f32.mrb[0].mxu0
      %2537 = vmatprep.mubr.f32.mxu0 0.0
      %2538 = vmatmul.mubr.f32.gmra.mrb[0].mxu0 %v2201
      %v2539 = vpop.f32.mrb[0].mxu0
      %v2540 = vadd.f32 0.0, %v2539
      %v2541 = vpop.f32.mrb[0].mxu0
      %2542 = vmatprep.mubr.f32.mxu0 0.0
      %2543 = vmatmul.mubr.f32.gmra.mrb[0].mxu0 %v2204
      %v2544 = vpop.f32.mrb[0].mxu0
      %v2545 = vadd.f32 0.0, %v2544
      %v2546 = vpop.f32.mrb[0].mxu0
      %2547 = vmatprep.mubr.f32.mxu0 0.0
      %2548 = vmatmul.mubr.f32.gmra.mrb[0].mxu0 %v2207
      %v2549 = vpop.f32.mrb[0].mxu0
      %v2550 = vadd.f32 0.0, %v2549
      %v2551 = vpop.f32.mrb[0].mxu0
      %2552 = vmatprep.mubr.f32.mxu0 0.0
      %2553 = vmatmul.mubr.f32.gmra.mrb[0].mxu0 %v2210
      %v2554 = vpop.f32.mrb[0].mxu0
      %v2555 = vadd.f32 0.0, %v2554
      %v2556 = vpop.f32.mrb[0].mxu0
      %2557 = vdwg.mxu0
      %v2558 = vadd.f32 %v2392, %v2480
      %v2559 = vadd.f32 %v2393, %v2485
      %v2560 = vadd.f32 %v2394, %v2490
      %v2561 = vadd.f32 %v2395, %v2495
      %v2562 = vadd.f32 %v2396, %v2500
      %v2563 = vadd.f32 %v2397, %v2505
      %v2564 = vadd.f32 %v2398, %v2510
      %v2565 = vadd.f32 %v2399, %v2515
      %v2566 = vadd.f32 %v2400, %v2520
      %v2567 = vadd.f32 %v2401, %v2525
      %v2568 = vadd.f32 %v2402, %v2530
      %v2569 = vadd.f32 %v2403, %v2535
      %v2570 = vadd.f32 %v2404, %v2540
      %v2571 = vadd.f32 %v2405, %v2545
      %v2572 = vadd.f32 %v2406, %v2550
      %v2573 = vadd.f32 %v2407, %v2555
      %2574 = vst.msk [vmem:[#allocation4] sm:$0xff] %vm390, %v2558
      %2575 = vst.msk [vmem:[#allocation4 + $0x8] sm:$0xff] %vm390, %v2559
      %2576 = vst.msk [vmem:[#allocation4 + $0x10] sm:$0xff] %vm390, %v2560
      %2577 = vst.msk [vmem:[#allocation4 + $0x18] sm:$0xff] %vm390, %v2561
      %2578 = vst.msk [vmem:[#allocation4 + $0x20] sm:$0xff] %vm390, %v2562
      %2579 = vst.msk [vmem:[#allocation4 + $0x28] sm:$0xff] %vm390, %v2563
      %2580 = vst.msk [vmem:[#allocation4 + $0x30] sm:$0xff] %vm390, %v2564
      %2581 = vst.msk [vmem:[#allocation4 + $0x38] sm:$0xff] %vm390, %v2565
      %2582 = vst.msk [vmem:[#allocation4 + $0x40] sm:$0xff] %vm390, %v2566
      %2583 = vst.msk [vmem:[#allocation4 + $0x48] sm:$0xff] %vm390, %v2567
      %2584 = vst.msk [vmem:[#allocation4 + $0x50] sm:$0xff] %vm390, %v2568
      %2585 = vst.msk [vmem:[#allocation4 + $0x58] sm:$0xff] %vm390, %v2569
      %2586 = vst.msk [vmem:[#allocation4 + $0x60] sm:$0xff] %vm390, %v2570
      %2587 = vst.msk [vmem:[#allocation4 + $0x68] sm:$0xff] %vm390, %v2571
      %2588 = vst.msk [vmem:[#allocation4 + $0x70] sm:$0xff] %vm390, %v2572
      %2589 = vst.msk [vmem:[#allocation4 + $0x78] sm:$0xff] %vm390, %v2573
      %s2590 = scalar_lea.vmem [#allocation2], 48
      %v2591 = vld [vmem:[%s2590] sm:$0xff]
      %v2592 = vld [vmem:[%s2590 + $0x8] sm:$0xff]
      %v2593 = vld [vmem:[%s2590 + $0x18] sm:$0xff]
      %v2594 = vld [vmem:[%s2590 + $0x20] sm:$0xff]
      %v2595 = vld [vmem:[%s2590 + $0x30] sm:$0xff]
      %v2596 = vld [vmem:[%s2590 + $0x38] sm:$0xff]
      %v2597 = vld [vmem:[%s2590 + $0x48] sm:$0xff]
      %v2598 = vld [vmem:[%s2590 + $0x50] sm:$0xff]
      %v2599 = vld [vmem:[%s2590 + $0x60] sm:$0xff]
      %v2600 = vld [vmem:[%s2590 + $0x68] sm:$0xff]
      %v2601 = vld [vmem:[%s2590 + $0x78] sm:$0xff]
      %v2602 = vld [vmem:[%s2590 + $0x80] sm:$0xff]
      %v2603 = vld [vmem:[%s2590 + $0x90] sm:$0xff]
      %v2604 = vld [vmem:[%s2590 + $0x98] sm:$0xff]
      %v2605 = vld [vmem:[%s2590 + $0xa8] sm:$0xff]
      %v2606 = vld [vmem:[%s2590 + $0xb0] sm:$0xff]
      %v2607 = vld [vmem:[#allocation4] sm:$0xff]
      %v2608 = vld [vmem:[#allocation4 + $0x8] sm:$0xff]
      %v2609 = vld [vmem:[#allocation4 + $0x10] sm:$0xff]
      %v2610 = vld [vmem:[#allocation4 + $0x18] sm:$0xff]
      %v2611 = vld [vmem:[#allocation4 + $0x20] sm:$0xff]
      %v2612 = vld [vmem:[#allocation4 + $0x28] sm:$0xff]
      %v2613 = vld [vmem:[#allocation4 + $0x30] sm:$0xff]
      %v2614 = vld [vmem:[#allocation4 + $0x38] sm:$0xff]
      %v2615 = vld [vmem:[#allocation4 + $0x40] sm:$0xff]
      %v2616 = vld [vmem:[#allocation4 + $0x48] sm:$0xff]
      %v2617 = vld [vmem:[#allocation4 + $0x50] sm:$0xff]
      %v2618 = vld [vmem:[#allocation4 + $0x58] sm:$0xff]
      %v2619 = vld [vmem:[#allocation4 + $0x60] sm:$0xff]
      %v2620 = vld [vmem:[#allocation4 + $0x68] sm:$0xff]
      %v2621 = vld [vmem:[#allocation4 + $0x70] sm:$0xff]
      %v2622 = vld [vmem:[#allocation4 + $0x78] sm:$0xff]
      %s2623 = scalar_lea.vmem %s2, 60
      %v2624 = vld [vmem:[%s2623] sm:$0xf]
      %v2626 = vsel %vm344, %v2591, 0
      %v2629 = vsel %vm344, %v2592, 0
      %v2632 = vsel %vm344, %v2593, 0
      %v2635 = vsel %vm344, %v2594, 0
      %v2638 = vsel %vm344, %v2595, 0
      %v2641 = vsel %vm344, %v2596, 0
      %v2644 = vsel %vm344, %v2597, 0
      %v2647 = vsel %vm344, %v2598, 0
      %v2650 = vsel %vm344, %v2599, 0
      %v2653 = vsel %vm344, %v2600, 0
      %v2656 = vsel %vm344, %v2601, 0
      %v2659 = vsel %vm344, %v2602, 0
      %v2662 = vsel %vm344, %v2603, 0
      %v2665 = vsel %vm344, %v2604, 0
      %v2668 = vsel %vm344, %v2605, 0
      %v2671 = vsel %vm344, %v2606, 0
      %v2674 = vsel %vm504, %v2624, 0
      %2676 = vmatprep.subr.mxu0 0.0
      %2677 = vmatpush1.msra.mxu0 %v2674
      %2678 = vmatprep.subr.mxu0 0.0
      %2679 = vmatpush1.msra.mxu0 0.0
      %2680 = vmatprep.subr.mxu0 0.0
      %2681 = vmatpush1.msra.mxu0 0.0
      %2682 = vmatprep.subr.mxu0 0.0
      %2683 = vmatpush1.msra.mxu0 0.0
      %2684 = vmatprep.subr.mxu0 0.0
      %2685 = vmatpush1.msra.mxu0 0.0
      %2686 = vmatprep.subr.mxu0 0.0
      %2687 = vmatpush1.msra.mxu0 0.0
      %2688 = vmatprep.subr.mxu0 0.0
      %2689 = vmatpush1.msra.mxu0 0.0
      %2690 = vmatprep.subr.mxu0 0.0
      %2691 = vmatpush1.msra.mxu0 0.0
      %2692 = vmatprep.subr.mxu0 0.0
      %2693 = vmatpush1.msra.mxu0 0.0
      %2694 = vmatprep.subr.mxu0 0.0
      %2695 = vmatpush1.msra.mxu0 0.0
      %2696 = vmatprep.subr.mxu0 0.0
      %2697 = vmatpush1.msra.mxu0 0.0
      %2698 = vmatprep.subr.mxu0 0.0
      %2699 = vmatpush1.msra.mxu0 0.0
      %2700 = vmatprep.subr.mxu0 0.0
      %2701 = vmatpush1.msra.mxu0 0.0
      %2702 = vmatprep.subr.mxu0 0.0
      %2703 = vmatpush1.msra.mxu0 0.0
      %2704 = vmatprep.subr.mxu0 0.0
      %2705 = vmatpush1.msra.mxu0 0.0
      %2706 = vmatprep.subr.mxu0 0.0
      %2707 = vmatpush1.msra.mxu0 0.0
      %2708 = vmatprep.subr.mxu0 0.0
      %2709 = vmatpush1.msra.mxu0 0.0
      %2710 = vmatprep.subr.mxu0 0.0
      %2711 = vmatpush1.msra.mxu0 0.0
      %2712 = vmatprep.subr.mxu0 0.0
      %2713 = vmatpush1.msra.mxu0 0.0
      %2714 = vmatprep.subr.mxu0 0.0
      %2715 = vmatpush1.msra.mxu0 0.0
      %2716 = vmatprep.subr.mxu0 0.0
      %2717 = vmatpush1.msra.mxu0 0.0
      %2718 = vmatprep.subr.mxu0 0.0
      %2719 = vmatpush1.msra.mxu0 0.0
      %2720 = vmatprep.subr.mxu0 0.0
      %2721 = vmatpush1.msra.mxu0 0.0
      %2722 = vmatprep.subr.mxu0 0.0
      %2723 = vmatpush1.msra.mxu0 0.0
      %2724 = vmatprep.subr.mxu0 0.0
      %2725 = vmatpush1.msra.mxu0 0.0
      %2726 = vmatprep.subr.mxu0 0.0
      %2727 = vmatpush1.msra.mxu0 0.0
      %2728 = vmatprep.subr.mxu0 0.0
      %2729 = vmatpush1.msra.mxu0 0.0
      %2730 = vmatprep.subr.mxu0 0.0
      %2731 = vmatpush1.msra.mxu0 0.0
      %2732 = vmatprep.subr.mxu0 0.0
      %2733 = vmatpush1.msra.mxu0 0.0
      %2734 = vmatprep.subr.mxu0 0.0
      %2735 = vmatpush1.msra.mxu0 0.0
      %2736 = vmatprep.subr.mxu0 0.0
      %2737 = vmatpush1.msra.mxu0 0.0
      %2738 = vmatprep.subr.mxu0 0.0
      %2739 = vmatpush1.msra.mxu0 0.0
      %2740 = vmatprep.mubr.f32.mxu0 0.0
      %2741 = vmatmul.mubr.f32.gmra.mrb[0].mxu0 %v2626
      %v2742 = vpop.f32.mrb[0].mxu0
      %v2743 = vadd.f32 0.0, %v2742
      %v2744 = vpop.f32.mrb[0].mxu0
      %2745 = vmatprep.mubr.f32.mxu0 0.0
      %2746 = vmatmul.mubr.f32.gmra.mrb[0].mxu0 %v2629
      %v2747 = vpop.f32.mrb[0].mxu0
      %v2748 = vadd.f32 0.0, %v2747
      %v2749 = vpop.f32.mrb[0].mxu0
      %2750 = vmatprep.mubr.f32.mxu0 0.0
      %2751 = vmatmul.mubr.f32.gmra.mrb[0].mxu0 %v2632
      %v2752 = vpop.f32.mrb[0].mxu0
      %v2753 = vadd.f32 0.0, %v2752
      %v2754 = vpop.f32.mrb[0].mxu0
      %2755 = vmatprep.mubr.f32.mxu0 0.0
      %2756 = vmatmul.mubr.f32.gmra.mrb[0].mxu0 %v2635
      %v2757 = vpop.f32.mrb[0].mxu0
      %v2758 = vadd.f32 0.0, %v2757
      %v2759 = vpop.f32.mrb[0].mxu0
      %2760 = vmatprep.mubr.f32.mxu0 0.0
      %2761 = vmatmul.mubr.f32.gmra.mrb[0].mxu0 %v2638
      %v2762 = vpop.f32.mrb[0].mxu0
      %v2763 = vadd.f32 0.0, %v2762
      %v2764 = vpop.f32.mrb[0].mxu0
      %2765 = vmatprep.mubr.f32.mxu0 0.0
      %2766 = vmatmul.mubr.f32.gmra.mrb[0].mxu0 %v2641
      %v2767 = vpop.f32.mrb[0].mxu0
      %v2768 = vadd.f32 0.0, %v2767
      %v2769 = vpop.f32.mrb[0].mxu0
      %2770 = vmatprep.mubr.f32.mxu0 0.0
      %2771 = vmatmul.mubr.f32.gmra.mrb[0].mxu0 %v2644
      %v2772 = vpop.f32.mrb[0].mxu0
      %v2773 = vadd.f32 0.0, %v2772
      %v2774 = vpop.f32.mrb[0].mxu0
      %2775 = vmatprep.mubr.f32.mxu0 0.0
      %2776 = vmatmul.mubr.f32.gmra.mrb[0].mxu0 %v2647
      %v2777 = vpop.f32.mrb[0].mxu0
      %v2778 = vadd.f32 0.0, %v2777
      %v2779 = vpop.f32.mrb[0].mxu0
      %2780 = vmatprep.mubr.f32.mxu0 0.0
      %2781 = vmatmul.mubr.f32.gmra.mrb[0].mxu0 %v2650
      %v2782 = vpop.f32.mrb[0].mxu0
      %v2783 = vadd.f32 0.0, %v2782
      %v2784 = vpop.f32.mrb[0].mxu0
      %2785 = vmatprep.mubr.f32.mxu0 0.0
      %2786 = vmatmul.mubr.f32.gmra.mrb[0].mxu0 %v2653
      %v2787 = vpop.f32.mrb[0].mxu0
      %v2788 = vadd.f32 0.0, %v2787
      %v2789 = vpop.f32.mrb[0].mxu0
      %2790 = vmatprep.mubr.f32.mxu0 0.0
      %2791 = vmatmul.mubr.f32.gmra.mrb[0].mxu0 %v2656
      %v2792 = vpop.f32.mrb[0].mxu0
      %v2793 = vadd.f32 0.0, %v2792
      %v2794 = vpop.f32.mrb[0].mxu0
      %2795 = vmatprep.mubr.f32.mxu0 0.0
      %2796 = vmatmul.mubr.f32.gmra.mrb[0].mxu0 %v2659
      %v2797 = vpop.f32.mrb[0].mxu0
      %v2798 = vadd.f32 0.0, %v2797
      %v2799 = vpop.f32.mrb[0].mxu0
      %2800 = vmatprep.mubr.f32.mxu0 0.0
      %2801 = vmatmul.mubr.f32.gmra.mrb[0].mxu0 %v2662
      %v2802 = vpop.f32.mrb[0].mxu0
      %v2803 = vadd.f32 0.0, %v2802
      %v2804 = vpop.f32.mrb[0].mxu0
      %2805 = vmatprep.mubr.f32.mxu0 0.0
      %2806 = vmatmul.mubr.f32.gmra.mrb[0].mxu0 %v2665
      %v2807 = vpop.f32.mrb[0].mxu0
      %v2808 = vadd.f32 0.0, %v2807
      %v2809 = vpop.f32.mrb[0].mxu0
      %2810 = vmatprep.mubr.f32.mxu0 0.0
      %2811 = vmatmul.mubr.f32.gmra.mrb[0].mxu0 %v2668
      %v2812 = vpop.f32.mrb[0].mxu0
      %v2813 = vadd.f32 0.0, %v2812
      %v2814 = vpop.f32.mrb[0].mxu0
      %2815 = vmatprep.mubr.f32.mxu0 0.0
      %2816 = vmatmul.mubr.f32.gmra.mrb[0].mxu0 %v2671
      %v2817 = vpop.f32.mrb[0].mxu0
      %v2818 = vadd.f32 0.0, %v2817
      %v2819 = vpop.f32.mrb[0].mxu0
      %2820 = vdwg.mxu0
      %v2821 = vadd.f32 %v2607, %v2743
      %v2822 = vadd.f32 %v2608, %v2748
      %v2823 = vadd.f32 %v2609, %v2753
      %v2824 = vadd.f32 %v2610, %v2758
      %v2825 = vadd.f32 %v2611, %v2763
      %v2826 = vadd.f32 %v2612, %v2768
      %v2827 = vadd.f32 %v2613, %v2773
      %v2828 = vadd.f32 %v2614, %v2778
      %v2829 = vadd.f32 %v2615, %v2783
      %v2830 = vadd.f32 %v2616, %v2788
      %v2831 = vadd.f32 %v2617, %v2793
      %v2832 = vadd.f32 %v2618, %v2798
      %v2833 = vadd.f32 %v2619, %v2803
      %v2834 = vadd.f32 %v2620, %v2808
      %v2835 = vadd.f32 %v2621, %v2813
      %v2836 = vadd.f32 %v2622, %v2818
      %2837 = vst.msk [vmem:[#allocation4] sm:$0xff] %vm390, %v2821
      %2838 = vst.msk [vmem:[#allocation4 + $0x8] sm:$0xff] %vm390, %v2822
      %2839 = vst.msk [vmem:[#allocation4 + $0x10] sm:$0xff] %vm390, %v2823
      %2840 = vst.msk [vmem:[#allocation4 + $0x18] sm:$0xff] %vm390, %v2824
      %2841 = vst.msk [vmem:[#allocation4 + $0x20] sm:$0xff] %vm390, %v2825
      %2842 = vst.msk [vmem:[#allocation4 + $0x28] sm:$0xff] %vm390, %v2826
      %2843 = vst.msk [vmem:[#allocation4 + $0x30] sm:$0xff] %vm390, %v2827
      %2844 = vst.msk [vmem:[#allocation4 + $0x38] sm:$0xff] %vm390, %v2828
      %2845 = vst.msk [vmem:[#allocation4 + $0x40] sm:$0xff] %vm390, %v2829
      %2846 = vst.msk [vmem:[#allocation4 + $0x48] sm:$0xff] %vm390, %v2830
      %2847 = vst.msk [vmem:[#allocation4 + $0x50] sm:$0xff] %vm390, %v2831
      %2848 = vst.msk [vmem:[#allocation4 + $0x58] sm:$0xff] %vm390, %v2832
      %2849 = vst.msk [vmem:[#allocation4 + $0x60] sm:$0xff] %vm390, %v2833
      %2850 = vst.msk [vmem:[#allocation4 + $0x68] sm:$0xff] %vm390, %v2834
      %2851 = vst.msk [vmem:[#allocation4 + $0x70] sm:$0xff] %vm390, %v2835
      %2852 = vst.msk [vmem:[#allocation4 + $0x78] sm:$0xff] %vm390, %v2836
      %v2853 = vld [vmem:[%s2590 + $0x1] sm:$0xff]
      %v2854 = vld [vmem:[%s2590 + $0x9] sm:$0xff]
      %v2855 = vld [vmem:[%s2590 + $0x19] sm:$0xff]
      %v2856 = vld [vmem:[%s2590 + $0x21] sm:$0xff]
      %v2857 = vld [vmem:[%s2590 + $0x31] sm:$0xff]
      %v2858 = vld [vmem:[%s2590 + $0x39] sm:$0xff]
      %v2859 = vld [vmem:[%s2590 + $0x49] sm:$0xff]
      %v2860 = vld [vmem:[%s2590 + $0x51] sm:$0xff]
      %v2861 = vld [vmem:[%s2590 + $0x61] sm:$0xff]
      %v2862 = vld [vmem:[%s2590 + $0x69] sm:$0xff]
      %v2863 = vld [vmem:[%s2590 + $0x79] sm:$0xff]
      %v2864 = vld [vmem:[%s2590 + $0x81] sm:$0xff]
      %v2865 = vld [vmem:[%s2590 + $0x91] sm:$0xff]
      %v2866 = vld [vmem:[%s2590 + $0x99] sm:$0xff]
      %v2867 = vld [vmem:[%s2590 + $0xa9] sm:$0xff]
      %v2868 = vld [vmem:[%s2590 + $0xb1] sm:$0xff]
      %v2869 = vld [vmem:[#allocation4] sm:$0xff]
      %v2870 = vld [vmem:[#allocation4 + $0x8] sm:$0xff]
      %v2871 = vld [vmem:[#allocation4 + $0x10] sm:$0xff]
      %v2872 = vld [vmem:[#allocation4 + $0x18] sm:$0xff]
      %v2873 = vld [vmem:[#allocation4 + $0x20] sm:$0xff]
      %v2874 = vld [vmem:[#allocation4 + $0x28] sm:$0xff]
      %v2875 = vld [vmem:[#allocation4 + $0x30] sm:$0xff]
      %v2876 = vld [vmem:[#allocation4 + $0x38] sm:$0xff]
      %v2877 = vld [vmem:[#allocation4 + $0x40] sm:$0xff]
      %v2878 = vld [vmem:[#allocation4 + $0x48] sm:$0xff]
      %v2879 = vld [vmem:[#allocation4 + $0x50] sm:$0xff]
      %v2880 = vld [vmem:[#allocation4 + $0x58] sm:$0xff]
      %v2881 = vld [vmem:[#allocation4 + $0x60] sm:$0xff]
      %v2882 = vld [vmem:[#allocation4 + $0x68] sm:$0xff]
      %v2883 = vld [vmem:[#allocation4 + $0x70] sm:$0xff]
      %v2884 = vld [vmem:[#allocation4 + $0x78] sm:$0xff]
      %s2885 = scalar_lea.vmem %s2, 64
      %v2886 = vld [vmem:[%s2885] sm:$0xf]
      %v2888 = vsel %vm344, %v2853, 0
      %v2891 = vsel %vm344, %v2854, 0
      %v2894 = vsel %vm344, %v2855, 0
      %v2897 = vsel %vm344, %v2856, 0
      %v2900 = vsel %vm344, %v2857, 0
      %v2903 = vsel %vm344, %v2858, 0
      %v2906 = vsel %vm344, %v2859, 0
      %v2909 = vsel %vm344, %v2860, 0
      %v2912 = vsel %vm344, %v2861, 0
      %v2915 = vsel %vm344, %v2862, 0
      %v2918 = vsel %vm344, %v2863, 0
      %v2921 = vsel %vm344, %v2864, 0
      %v2924 = vsel %vm344, %v2865, 0
      %v2927 = vsel %vm344, %v2866, 0
      %v2930 = vsel %vm344, %v2867, 0
      %v2933 = vsel %vm344, %v2868, 0
      %v2936 = vsel %vm504, %v2886, 0
      %2938 = vmatprep.subr.mxu0 0.0
      %2939 = vmatpush1.msra.mxu0 %v2936
      %2940 = vmatprep.subr.mxu0 0.0
      %2941 = vmatpush1.msra.mxu0 0.0
      %2942 = vmatprep.subr.mxu0 0.0
      %2943 = vmatpush1.msra.mxu0 0.0
      %2944 = vmatprep.subr.mxu0 0.0
      %2945 = vmatpush1.msra.mxu0 0.0
      %2946 = vmatprep.subr.mxu0 0.0
      %2947 = vmatpush1.msra.mxu0 0.0
      %2948 = vmatprep.subr.mxu0 0.0
      %2949 = vmatpush1.msra.mxu0 0.0
      %2950 = vmatprep.subr.mxu0 0.0
      %2951 = vmatpush1.msra.mxu0 0.0
      %2952 = vmatprep.subr.mxu0 0.0
      %2953 = vmatpush1.msra.mxu0 0.0
      %2954 = vmatprep.subr.mxu0 0.0
      %2955 = vmatpush1.msra.mxu0 0.0
      %2956 = vmatprep.subr.mxu0 0.0
      %2957 = vmatpush1.msra.mxu0 0.0
      %2958 = vmatprep.subr.mxu0 0.0
      %2959 = vmatpush1.msra.mxu0 0.0
      %2960 = vmatprep.subr.mxu0 0.0
      %2961 = vmatpush1.msra.mxu0 0.0
      %2962 = vmatprep.subr.mxu0 0.0
      %2963 = vmatpush1.msra.mxu0 0.0
      %2964 = vmatprep.subr.mxu0 0.0
      %2965 = vmatpush1.msra.mxu0 0.0
      %2966 = vmatprep.subr.mxu0 0.0
      %2967 = vmatpush1.msra.mxu0 0.0
      %2968 = vmatprep.subr.mxu0 0.0
      %2969 = vmatpush1.msra.mxu0 0.0
      %2970 = vmatprep.subr.mxu0 0.0
      %2971 = vmatpush1.msra.mxu0 0.0
      %2972 = vmatprep.subr.mxu0 0.0
      %2973 = vmatpush1.msra.mxu0 0.0
      %2974 = vmatprep.subr.mxu0 0.0
      %2975 = vmatpush1.msra.mxu0 0.0
      %2976 = vmatprep.subr.mxu0 0.0
      %2977 = vmatpush1.msra.mxu0 0.0
      %2978 = vmatprep.subr.mxu0 0.0
      %2979 = vmatpush1.msra.mxu0 0.0
      %2980 = vmatprep.subr.mxu0 0.0
      %2981 = vmatpush1.msra.mxu0 0.0
      %2982 = vmatprep.subr.mxu0 0.0
      %2983 = vmatpush1.msra.mxu0 0.0
      %2984 = vmatprep.subr.mxu0 0.0
      %2985 = vmatpush1.msra.mxu0 0.0
      %2986 = vmatprep.subr.mxu0 0.0
      %2987 = vmatpush1.msra.mxu0 0.0
      %2988 = vmatprep.subr.mxu0 0.0
      %2989 = vmatpush1.msra.mxu0 0.0
      %2990 = vmatprep.subr.mxu0 0.0
      %2991 = vmatpush1.msra.mxu0 0.0
      %2992 = vmatprep.subr.mxu0 0.0
      %2993 = vmatpush1.msra.mxu0 0.0
      %2994 = vmatprep.subr.mxu0 0.0
      %2995 = vmatpush1.msra.mxu0 0.0
      %2996 = vmatprep.subr.mxu0 0.0
      %2997 = vmatpush1.msra.mxu0 0.0
      %2998 = vmatprep.subr.mxu0 0.0
      %2999 = vmatpush1.msra.mxu0 0.0
      %3000 = vmatprep.subr.mxu0 0.0
      %3001 = vmatpush1.msra.mxu0 0.0
      %3002 = vmatprep.mubr.f32.mxu0 0.0
      %3003 = vmatmul.mubr.f32.gmra.mrb[0].mxu0 %v2888
      %v3004 = vpop.f32.mrb[0].mxu0
      %v3005 = vadd.f32 0.0, %v3004
      %v3006 = vpop.f32.mrb[0].mxu0
      %3007 = vmatprep.mubr.f32.mxu0 0.0
      %3008 = vmatmul.mubr.f32.gmra.mrb[0].mxu0 %v2891
      %v3009 = vpop.f32.mrb[0].mxu0
      %v3010 = vadd.f32 0.0, %v3009
      %v3011 = vpop.f32.mrb[0].mxu0
      %3012 = vmatprep.mubr.f32.mxu0 0.0
      %3013 = vmatmul.mubr.f32.gmra.mrb[0].mxu0 %v2894
      %v3014 = vpop.f32.mrb[0].mxu0
      %v3015 = vadd.f32 0.0, %v3014
      %v3016 = vpop.f32.mrb[0].mxu0
      %3017 = vmatprep.mubr.f32.mxu0 0.0
      %3018 = vmatmul.mubr.f32.gmra.mrb[0].mxu0 %v2897
      %v3019 = vpop.f32.mrb[0].mxu0
      %v3020 = vadd.f32 0.0, %v3019
      %v3021 = vpop.f32.mrb[0].mxu0
      %3022 = vmatprep.mubr.f32.mxu0 0.0
      %3023 = vmatmul.mubr.f32.gmra.mrb[0].mxu0 %v2900
      %v3024 = vpop.f32.mrb[0].mxu0
      %v3025 = vadd.f32 0.0, %v3024
      %v3026 = vpop.f32.mrb[0].mxu0
      %3027 = vmatprep.mubr.f32.mxu0 0.0
      %3028 = vmatmul.mubr.f32.gmra.mrb[0].mxu0 %v2903
      %v3029 = vpop.f32.mrb[0].mxu0
      %v3030 = vadd.f32 0.0, %v3029
      %v3031 = vpop.f32.mrb[0].mxu0
      %3032 = vmatprep.mubr.f32.mxu0 0.0
      %3033 = vmatmul.mubr.f32.gmra.mrb[0].mxu0 %v2906
      %v3034 = vpop.f32.mrb[0].mxu0
      %v3035 = vadd.f32 0.0, %v3034
      %v3036 = vpop.f32.mrb[0].mxu0
      %3037 = vmatprep.mubr.f32.mxu0 0.0
      %3038 = vmatmul.mubr.f32.gmra.mrb[0].mxu0 %v2909
      %v3039 = vpop.f32.mrb[0].mxu0
      %v3040 = vadd.f32 0.0, %v3039
      %v3041 = vpop.f32.mrb[0].mxu0
      %3042 = vmatprep.mubr.f32.mxu0 0.0
      %3043 = vmatmul.mubr.f32.gmra.mrb[0].mxu0 %v2912
      %v3044 = vpop.f32.mrb[0].mxu0
      %v3045 = vadd.f32 0.0, %v3044
      %v3046 = vpop.f32.mrb[0].mxu0
      %3047 = vmatprep.mubr.f32.mxu0 0.0
      %3048 = vmatmul.mubr.f32.gmra.mrb[0].mxu0 %v2915
      %v3049 = vpop.f32.mrb[0].mxu0
      %v3050 = vadd.f32 0.0, %v3049
      %v3051 = vpop.f32.mrb[0].mxu0
      %3052 = vmatprep.mubr.f32.mxu0 0.0
      %3053 = vmatmul.mubr.f32.gmra.mrb[0].mxu0 %v2918
      %v3054 = vpop.f32.mrb[0].mxu0
      %v3055 = vadd.f32 0.0, %v3054
      %v3056 = vpop.f32.mrb[0].mxu0
      %3057 = vmatprep.mubr.f32.mxu0 0.0
      %3058 = vmatmul.mubr.f32.gmra.mrb[0].mxu0 %v2921
      %v3059 = vpop.f32.mrb[0].mxu0
      %v3060 = vadd.f32 0.0, %v3059
      %v3061 = vpop.f32.mrb[0].mxu0
      %3062 = vmatprep.mubr.f32.mxu0 0.0
      %3063 = vmatmul.mubr.f32.gmra.mrb[0].mxu0 %v2924
      %v3064 = vpop.f32.mrb[0].mxu0
      %v3065 = vadd.f32 0.0, %v3064
      %v3066 = vpop.f32.mrb[0].mxu0
      %3067 = vmatprep.mubr.f32.mxu0 0.0
      %3068 = vmatmul.mubr.f32.gmra.mrb[0].mxu0 %v2927
      %v3069 = vpop.f32.mrb[0].mxu0
      %v3070 = vadd.f32 0.0, %v3069
      %v3071 = vpop.f32.mrb[0].mxu0
      %3072 = vmatprep.mubr.f32.mxu0 0.0
      %3073 = vmatmul.mubr.f32.gmra.mrb[0].mxu0 %v2930
      %v3074 = vpop.f32.mrb[0].mxu0
      %v3075 = vadd.f32 0.0, %v3074
      %v3076 = vpop.f32.mrb[0].mxu0
      %3077 = vmatprep.mubr.f32.mxu0 0.0
      %3078 = vmatmul.mubr.f32.gmra.mrb[0].mxu0 %v2933
      %v3079 = vpop.f32.mrb[0].mxu0
      %v3080 = vadd.f32 0.0, %v3079
      %v3081 = vpop.f32.mrb[0].mxu0
      %3082 = vdwg.mxu0
      %v3083 = vadd.f32 %v2869, %v3005
      %v3084 = vadd.f32 %v2870, %v3010
      %v3085 = vadd.f32 %v2871, %v3015
      %v3086 = vadd.f32 %v2872, %v3020
      %v3087 = vadd.f32 %v2873, %v3025
      %v3088 = vadd.f32 %v2874, %v3030
      %v3089 = vadd.f32 %v2875, %v3035
      %v3090 = vadd.f32 %v2876, %v3040
      %v3091 = vadd.f32 %v2877, %v3045
      %v3092 = vadd.f32 %v2878, %v3050
      %v3093 = vadd.f32 %v2879, %v3055
      %v3094 = vadd.f32 %v2880, %v3060
      %v3095 = vadd.f32 %v2881, %v3065
      %v3096 = vadd.f32 %v2882, %v3070
      %v3097 = vadd.f32 %v2883, %v3075
      %v3098 = vadd.f32 %v2884, %v3080
      %3099 = vst.msk [vmem:[#allocation4] sm:$0xff] %vm390, %v3083
      %3100 = vst.msk [vmem:[#allocation4 + $0x8] sm:$0xff] %vm390, %v3084
      %3101 = vst.msk [vmem:[#allocation4 + $0x10] sm:$0xff] %vm390, %v3085
      %3102 = vst.msk [vmem:[#allocation4 + $0x18] sm:$0xff] %vm390, %v3086
      %3103 = vst.msk [vmem:[#allocation4 + $0x20] sm:$0xff] %vm390, %v3087
      %3104 = vst.msk [vmem:[#allocation4 + $0x28] sm:$0xff] %vm390, %v3088
      %3105 = vst.msk [vmem:[#allocation4 + $0x30] sm:$0xff] %vm390, %v3089
      %3106 = vst.msk [vmem:[#allocation4 + $0x38] sm:$0xff] %vm390, %v3090
      %3107 = vst.msk [vmem:[#allocation4 + $0x40] sm:$0xff] %vm390, %v3091
      %3108 = vst.msk [vmem:[#allocation4 + $0x48] sm:$0xff] %vm390, %v3092
      %3109 = vst.msk [vmem:[#allocation4 + $0x50] sm:$0xff] %vm390, %v3093
      %3110 = vst.msk [vmem:[#allocation4 + $0x58] sm:$0xff] %vm390, %v3094
      %3111 = vst.msk [vmem:[#allocation4 + $0x60] sm:$0xff] %vm390, %v3095
      %3112 = vst.msk [vmem:[#allocation4 + $0x68] sm:$0xff] %vm390, %v3096
      %3113 = vst.msk [vmem:[#allocation4 + $0x70] sm:$0xff] %vm390, %v3097
      %3114 = vst.msk [vmem:[#allocation4 + $0x78] sm:$0xff] %vm390, %v3098
      %v3115 = vld [vmem:[%s2590 + $0x2] sm:$0xff]
      %v3116 = vld [vmem:[%s2590 + $0xa] sm:$0xff]
      %v3117 = vld [vmem:[%s2590 + $0x1a] sm:$0xff]
      %v3118 = vld [vmem:[%s2590 + $0x22] sm:$0xff]
      %v3119 = vld [vmem:[%s2590 + $0x32] sm:$0xff]
      %v3120 = vld [vmem:[%s2590 + $0x3a] sm:$0xff]
      %v3121 = vld [vmem:[%s2590 + $0x4a] sm:$0xff]
      %v3122 = vld [vmem:[%s2590 + $0x52] sm:$0xff]
      %v3123 = vld [vmem:[%s2590 + $0x62] sm:$0xff]
      %v3124 = vld [vmem:[%s2590 + $0x6a] sm:$0xff]
      %v3125 = vld [vmem:[%s2590 + $0x7a] sm:$0xff]
      %v3126 = vld [vmem:[%s2590 + $0x82] sm:$0xff]
      %v3127 = vld [vmem:[%s2590 + $0x92] sm:$0xff]
      %v3128 = vld [vmem:[%s2590 + $0x9a] sm:$0xff]
      %v3129 = vld [vmem:[%s2590 + $0xaa] sm:$0xff]
      %v3130 = vld [vmem:[%s2590 + $0xb2] sm:$0xff]
      %v3131 = vld [vmem:[#allocation4] sm:$0xff]
      %v3132 = vld [vmem:[#allocation4 + $0x8] sm:$0xff]
      %v3133 = vld [vmem:[#allocation4 + $0x10] sm:$0xff]
      %v3134 = vld [vmem:[#allocation4 + $0x18] sm:$0xff]
      %v3135 = vld [vmem:[#allocation4 + $0x20] sm:$0xff]
      %v3136 = vld [vmem:[#allocation4 + $0x28] sm:$0xff]
      %v3137 = vld [vmem:[#allocation4 + $0x30] sm:$0xff]
      %v3138 = vld [vmem:[#allocation4 + $0x38] sm:$0xff]
      %v3139 = vld [vmem:[#allocation4 + $0x40] sm:$0xff]
      %v3140 = vld [vmem:[#allocation4 + $0x48] sm:$0xff]
      %v3141 = vld [vmem:[#allocation4 + $0x50] sm:$0xff]
      %v3142 = vld [vmem:[#allocation4 + $0x58] sm:$0xff]
      %v3143 = vld [vmem:[#allocation4 + $0x60] sm:$0xff]
      %v3144 = vld [vmem:[#allocation4 + $0x68] sm:$0xff]
      %v3145 = vld [vmem:[#allocation4 + $0x70] sm:$0xff]
      %v3146 = vld [vmem:[#allocation4 + $0x78] sm:$0xff]
      %s3147 = scalar_lea.vmem %s2, 68
      %v3148 = vld [vmem:[%s3147] sm:$0xf]
      %v3150 = vsel %vm344, %v3115, 0
      %v3153 = vsel %vm344, %v3116, 0
      %v3156 = vsel %vm344, %v3117, 0
      %v3159 = vsel %vm344, %v3118, 0
      %v3162 = vsel %vm344, %v3119, 0
      %v3165 = vsel %vm344, %v3120, 0
      %v3168 = vsel %vm344, %v3121, 0
      %v3171 = vsel %vm344, %v3122, 0
      %v3174 = vsel %vm344, %v3123, 0
      %v3177 = vsel %vm344, %v3124, 0
      %v3180 = vsel %vm344, %v3125, 0
      %v3183 = vsel %vm344, %v3126, 0
      %v3186 = vsel %vm344, %v3127, 0
      %v3189 = vsel %vm344, %v3128, 0
      %v3192 = vsel %vm344, %v3129, 0
      %v3195 = vsel %vm344, %v3130, 0
      %v3198 = vsel %vm504, %v3148, 0
      %3200 = vmatprep.subr.mxu0 0.0
      %3201 = vmatpush1.msra.mxu0 %v3198
      %3202 = vmatprep.subr.mxu0 0.0
      %3203 = vmatpush1.msra.mxu0 0.0
      %3204 = vmatprep.subr.mxu0 0.0
      %3205 = vmatpush1.msra.mxu0 0.0
      %3206 = vmatprep.subr.mxu0 0.0
      %3207 = vmatpush1.msra.mxu0 0.0
      %3208 = vmatprep.subr.mxu0 0.0
      %3209 = vmatpush1.msra.mxu0 0.0
      %3210 = vmatprep.subr.mxu0 0.0
      %3211 = vmatpush1.msra.mxu0 0.0
      %3212 = vmatprep.subr.mxu0 0.0
      %3213 = vmatpush1.msra.mxu0 0.0
      %3214 = vmatprep.subr.mxu0 0.0
      %3215 = vmatpush1.msra.mxu0 0.0
      %3216 = vmatprep.subr.mxu0 0.0
      %3217 = vmatpush1.msra.mxu0 0.0
      %3218 = vmatprep.subr.mxu0 0.0
      %3219 = vmatpush1.msra.mxu0 0.0
      %3220 = vmatprep.subr.mxu0 0.0
      %3221 = vmatpush1.msra.mxu0 0.0
      %3222 = vmatprep.subr.mxu0 0.0
      %3223 = vmatpush1.msra.mxu0 0.0
      %3224 = vmatprep.subr.mxu0 0.0
      %3225 = vmatpush1.msra.mxu0 0.0
      %3226 = vmatprep.subr.mxu0 0.0
      %3227 = vmatpush1.msra.mxu0 0.0
      %3228 = vmatprep.subr.mxu0 0.0
      %3229 = vmatpush1.msra.mxu0 0.0
      %3230 = vmatprep.subr.mxu0 0.0
      %3231 = vmatpush1.msra.mxu0 0.0
      %3232 = vmatprep.subr.mxu0 0.0
      %3233 = vmatpush1.msra.mxu0 0.0
      %3234 = vmatprep.subr.mxu0 0.0
      %3235 = vmatpush1.msra.mxu0 0.0
      %3236 = vmatprep.subr.mxu0 0.0
      %3237 = vmatpush1.msra.mxu0 0.0
      %3238 = vmatprep.subr.mxu0 0.0
      %3239 = vmatpush1.msra.mxu0 0.0
      %3240 = vmatprep.subr.mxu0 0.0
      %3241 = vmatpush1.msra.mxu0 0.0
      %3242 = vmatprep.subr.mxu0 0.0
      %3243 = vmatpush1.msra.mxu0 0.0
      %3244 = vmatprep.subr.mxu0 0.0
      %3245 = vmatpush1.msra.mxu0 0.0
      %3246 = vmatprep.subr.mxu0 0.0
      %3247 = vmatpush1.msra.mxu0 0.0
      %3248 = vmatprep.subr.mxu0 0.0
      %3249 = vmatpush1.msra.mxu0 0.0
      %3250 = vmatprep.subr.mxu0 0.0
      %3251 = vmatpush1.msra.mxu0 0.0
      %3252 = vmatprep.subr.mxu0 0.0
      %3253 = vmatpush1.msra.mxu0 0.0
      %3254 = vmatprep.subr.mxu0 0.0
      %3255 = vmatpush1.msra.mxu0 0.0
      %3256 = vmatprep.subr.mxu0 0.0
      %3257 = vmatpush1.msra.mxu0 0.0
      %3258 = vmatprep.subr.mxu0 0.0
      %3259 = vmatpush1.msra.mxu0 0.0
      %3260 = vmatprep.subr.mxu0 0.0
      %3261 = vmatpush1.msra.mxu0 0.0
      %3262 = vmatprep.subr.mxu0 0.0
      %3263 = vmatpush1.msra.mxu0 0.0
      %3264 = vmatprep.mubr.f32.mxu0 0.0
      %3265 = vmatmul.mubr.f32.gmra.mrb[0].mxu0 %v3150
      %v3266 = vpop.f32.mrb[0].mxu0
      %v3267 = vadd.f32 0.0, %v3266
      %v3268 = vpop.f32.mrb[0].mxu0
      %3269 = vmatprep.mubr.f32.mxu0 0.0
      %3270 = vmatmul.mubr.f32.gmra.mrb[0].mxu0 %v3153
      %v3271 = vpop.f32.mrb[0].mxu0
      %v3272 = vadd.f32 0.0, %v3271
      %v3273 = vpop.f32.mrb[0].mxu0
      %3274 = vmatprep.mubr.f32.mxu0 0.0
      %3275 = vmatmul.mubr.f32.gmra.mrb[0].mxu0 %v3156
      %v3276 = vpop.f32.mrb[0].mxu0
      %v3277 = vadd.f32 0.0, %v3276
      %v3278 = vpop.f32.mrb[0].mxu0
      %3279 = vmatprep.mubr.f32.mxu0 0.0
      %3280 = vmatmul.mubr.f32.gmra.mrb[0].mxu0 %v3159
      %v3281 = vpop.f32.mrb[0].mxu0
      %v3282 = vadd.f32 0.0, %v3281
      %v3283 = vpop.f32.mrb[0].mxu0
      %3284 = vmatprep.mubr.f32.mxu0 0.0
      %3285 = vmatmul.mubr.f32.gmra.mrb[0].mxu0 %v3162
      %v3286 = vpop.f32.mrb[0].mxu0
      %v3287 = vadd.f32 0.0, %v3286
      %v3288 = vpop.f32.mrb[0].mxu0
      %3289 = vmatprep.mubr.f32.mxu0 0.0
      %3290 = vmatmul.mubr.f32.gmra.mrb[0].mxu0 %v3165
      %v3291 = vpop.f32.mrb[0].mxu0
      %v3292 = vadd.f32 0.0, %v3291
      %v3293 = vpop.f32.mrb[0].mxu0
      %3294 = vmatprep.mubr.f32.mxu0 0.0
      %3295 = vmatmul.mubr.f32.gmra.mrb[0].mxu0 %v3168
      %v3296 = vpop.f32.mrb[0].mxu0
      %v3297 = vadd.f32 0.0, %v3296
      %v3298 = vpop.f32.mrb[0].mxu0
      %3299 = vmatprep.mubr.f32.mxu0 0.0
      %3300 = vmatmul.mubr.f32.gmra.mrb[0].mxu0 %v3171
      %v3301 = vpop.f32.mrb[0].mxu0
      %v3302 = vadd.f32 0.0, %v3301
      %v3303 = vpop.f32.mrb[0].mxu0
      %3304 = vmatprep.mubr.f32.mxu0 0.0
      %3305 = vmatmul.mubr.f32.gmra.mrb[0].mxu0 %v3174
      %v3306 = vpop.f32.mrb[0].mxu0
      %v3307 = vadd.f32 0.0, %v3306
      %v3308 = vpop.f32.mrb[0].mxu0
      %3309 = vmatprep.mubr.f32.mxu0 0.0
      %3310 = vmatmul.mubr.f32.gmra.mrb[0].mxu0 %v3177
      %v3311 = vpop.f32.mrb[0].mxu0
      %v3312 = vadd.f32 0.0, %v3311
      %v3313 = vpop.f32.mrb[0].mxu0
      %3314 = vmatprep.mubr.f32.mxu0 0.0
      %3315 = vmatmul.mubr.f32.gmra.mrb[0].mxu0 %v3180
      %v3316 = vpop.f32.mrb[0].mxu0
      %v3317 = vadd.f32 0.0, %v3316
      %v3318 = vpop.f32.mrb[0].mxu0
      %3319 = vmatprep.mubr.f32.mxu0 0.0
      %3320 = vmatmul.mubr.f32.gmra.mrb[0].mxu0 %v3183
      %v3321 = vpop.f32.mrb[0].mxu0
      %v3322 = vadd.f32 0.0, %v3321
      %v3323 = vpop.f32.mrb[0].mxu0
      %3324 = vmatprep.mubr.f32.mxu0 0.0
      %3325 = vmatmul.mubr.f32.gmra.mrb[0].mxu0 %v3186
      %v3326 = vpop.f32.mrb[0].mxu0
      %v3327 = vadd.f32 0.0, %v3326
      %v3328 = vpop.f32.mrb[0].mxu0
      %3329 = vmatprep.mubr.f32.mxu0 0.0
      %3330 = vmatmul.mubr.f32.gmra.mrb[0].mxu0 %v3189
      %v3331 = vpop.f32.mrb[0].mxu0
      %v3332 = vadd.f32 0.0, %v3331
      %v3333 = vpop.f32.mrb[0].mxu0
      %3334 = vmatprep.mubr.f32.mxu0 0.0
      %3335 = vmatmul.mubr.f32.gmra.mrb[0].mxu0 %v3192
      %v3336 = vpop.f32.mrb[0].mxu0
      %v3337 = vadd.f32 0.0, %v3336
      %v3338 = vpop.f32.mrb[0].mxu0
      %3339 = vmatprep.mubr.f32.mxu0 0.0
      %3340 = vmatmul.mubr.f32.gmra.mrb[0].mxu0 %v3195
      %v3341 = vpop.f32.mrb[0].mxu0
      %v3342 = vadd.f32 0.0, %v3341
      %v3343 = vpop.f32.mrb[0].mxu0
      %3344 = vdwg.mxu0
      %v3345 = vadd.f32 %v3131, %v3267
      %v3346 = vadd.f32 %v3132, %v3272
      %v3347 = vadd.f32 %v3133, %v3277
      %v3348 = vadd.f32 %v3134, %v3282
      %v3349 = vadd.f32 %v3135, %v3287
      %v3350 = vadd.f32 %v3136, %v3292
      %v3351 = vadd.f32 %v3137, %v3297
      %v3352 = vadd.f32 %v3138, %v3302
      %v3353 = vadd.f32 %v3139, %v3307
      %v3354 = vadd.f32 %v3140, %v3312
      %v3355 = vadd.f32 %v3141, %v3317
      %v3356 = vadd.f32 %v3142, %v3322
      %v3357 = vadd.f32 %v3143, %v3327
      %v3358 = vadd.f32 %v3144, %v3332
      %v3359 = vadd.f32 %v3145, %v3337
      %v3360 = vadd.f32 %v3146, %v3342
      %3361 = vst.msk [vmem:[#allocation4] sm:$0xff] %vm390, %v3345
      %3362 = vst.msk [vmem:[#allocation4 + $0x8] sm:$0xff] %vm390, %v3346
      %3363 = vst.msk [vmem:[#allocation4 + $0x10] sm:$0xff] %vm390, %v3347
      %3364 = vst.msk [vmem:[#allocation4 + $0x18] sm:$0xff] %vm390, %v3348
      %3365 = vst.msk [vmem:[#allocation4 + $0x20] sm:$0xff] %vm390, %v3349
      %3366 = vst.msk [vmem:[#allocation4 + $0x28] sm:$0xff] %vm390, %v3350
      %3367 = vst.msk [vmem:[#allocation4 + $0x30] sm:$0xff] %vm390, %v3351
      %3368 = vst.msk [vmem:[#allocation4 + $0x38] sm:$0xff] %vm390, %v3352
      %3369 = vst.msk [vmem:[#allocation4 + $0x40] sm:$0xff] %vm390, %v3353
      %3370 = vst.msk [vmem:[#allocation4 + $0x48] sm:$0xff] %vm390, %v3354
      %3371 = vst.msk [vmem:[#allocation4 + $0x50] sm:$0xff] %vm390, %v3355
      %3372 = vst.msk [vmem:[#allocation4 + $0x58] sm:$0xff] %vm390, %v3356
      %3373 = vst.msk [vmem:[#allocation4 + $0x60] sm:$0xff] %vm390, %v3357
      %3374 = vst.msk [vmem:[#allocation4 + $0x68] sm:$0xff] %vm390, %v3358
      %3375 = vst.msk [vmem:[#allocation4 + $0x70] sm:$0xff] %vm390, %v3359
      %3376 = vst.msk [vmem:[#allocation4 + $0x78] sm:$0xff] %vm390, %v3360
      %v3377 = vld [vmem:[#allocation3] sm:$0xff]
      %v3378 = vld [vmem:[#allocation3 + $0x8] sm:$0xff]
      %v3379 = vld [vmem:[#allocation3 + $0x10] sm:$0xff]
      %v3380 = vld [vmem:[#allocation3 + $0x18] sm:$0xff]
      %v3381 = vld [vmem:[#allocation3 + $0x20] sm:$0xff]
      %v3382 = vld [vmem:[#allocation3 + $0x28] sm:$0xff]
      %v3383 = vld [vmem:[#allocation3 + $0x30] sm:$0xff]
      %v3384 = vld [vmem:[#allocation3 + $0x38] sm:$0xff]
      %v3385 = vld [vmem:[#allocation3 + $0x40] sm:$0xff]
      %v3386 = vld [vmem:[#allocation3 + $0x48] sm:$0xff]
      %v3387 = vld [vmem:[#allocation3 + $0x50] sm:$0xff]
      %v3388 = vld [vmem:[#allocation3 + $0x58] sm:$0xff]
      %v3389 = vld [vmem:[#allocation3 + $0x60] sm:$0xff]
      %v3390 = vld [vmem:[#allocation3 + $0x68] sm:$0xff]
      %v3391 = vld [vmem:[#allocation3 + $0x70] sm:$0xff]
      %v3392 = vld [vmem:[#allocation3 + $0x78] sm:$0xff]
      %3393 = vst.msk [vmem:[%s318] sm:$0xff] %vm390, %v3377
      %3394 = vst.msk [vmem:[%s318 + $0x8] sm:$0xff] %vm390, %v3378
      %3395 = vst.msk [vmem:[%s318 + $0x20] sm:$0xff] %vm390, %v3379
      %3396 = vst.msk [vmem:[%s318 + $0x28] sm:$0xff] %vm390, %v3380
      %3397 = vst.msk [vmem:[%s318 + $0x40] sm:$0xff] %vm390, %v3381
      %3398 = vst.msk [vmem:[%s318 + $0x48] sm:$0xff] %vm390, %v3382
      %3399 = vst.msk [vmem:[%s318 + $0x60] sm:$0xff] %vm390, %v3383
      %3400 = vst.msk [vmem:[%s318 + $0x68] sm:$0xff] %vm390, %v3384
      %3401 = vst.msk [vmem:[%s318 + $0x80] sm:$0xff] %vm390, %v3385
      %3402 = vst.msk [vmem:[%s318 + $0x88] sm:$0xff] %vm390, %v3386
      %3403 = vst.msk [vmem:[%s318 + $0xa0] sm:$0xff] %vm390, %v3387
      %3404 = vst.msk [vmem:[%s318 + $0xa8] sm:$0xff] %vm390, %v3388
      %3405 = vst.msk [vmem:[%s318 + $0xc0] sm:$0xff] %vm390, %v3389
      %3406 = vst.msk [vmem:[%s318 + $0xc8] sm:$0xff] %vm390, %v3390
      %3407 = vst.msk [vmem:[%s318 + $0xe0] sm:$0xff] %vm390, %v3391
      %3408 = vst.msk [vmem:[%s318 + $0xe8] sm:$0xff] %vm390, %v3392
      %v3409 = vld [vmem:[#allocation4] sm:$0xff]
      %v3410 = vld [vmem:[#allocation4 + $0x8] sm:$0xff]
      %v3411 = vld [vmem:[#allocation4 + $0x10] sm:$0xff]
      %v3412 = vld [vmem:[#allocation4 + $0x18] sm:$0xff]
      %v3413 = vld [vmem:[#allocation4 + $0x20] sm:$0xff]
      %v3414 = vld [vmem:[#allocation4 + $0x28] sm:$0xff]
      %v3415 = vld [vmem:[#allocation4 + $0x30] sm:$0xff]
      %v3416 = vld [vmem:[#allocation4 + $0x38] sm:$0xff]
      %v3417 = vld [vmem:[#allocation4 + $0x40] sm:$0xff]
      %v3418 = vld [vmem:[#allocation4 + $0x48] sm:$0xff]
      %v3419 = vld [vmem:[#allocation4 + $0x50] sm:$0xff]
      %v3420 = vld [vmem:[#allocation4 + $0x58] sm:$0xff]
      %v3421 = vld [vmem:[#allocation4 + $0x60] sm:$0xff]
      %v3422 = vld [vmem:[#allocation4 + $0x68] sm:$0xff]
      %v3423 = vld [vmem:[#allocation4 + $0x70] sm:$0xff]
      %v3424 = vld [vmem:[#allocation4 + $0x78] sm:$0xff]
      %s3425 = scalar_lea.vmem %s318, 16
      %3426 = vst.msk [vmem:[%s3425] sm:$0xff] %vm390, %v3409
      %3427 = vst.msk [vmem:[%s3425 + $0x8] sm:$0xff] %vm390, %v3410
      %3428 = vst.msk [vmem:[%s3425 + $0x20] sm:$0xff] %vm390, %v3411
      %3429 = vst.msk [vmem:[%s3425 + $0x28] sm:$0xff] %vm390, %v3412
      %3430 = vst.msk [vmem:[%s3425 + $0x40] sm:$0xff] %vm390, %v3413
      %3431 = vst.msk [vmem:[%s3425 + $0x48] sm:$0xff] %vm390, %v3414
      %3432 = vst.msk [vmem:[%s3425 + $0x60] sm:$0xff] %vm390, %v3415
      %3433 = vst.msk [vmem:[%s3425 + $0x68] sm:$0xff] %vm390, %v3416
      %3434 = vst.msk [vmem:[%s3425 + $0x80] sm:$0xff] %vm390, %v3417
      %3435 = vst.msk [vmem:[%s3425 + $0x88] sm:$0xff] %vm390, %v3418
      %3436 = vst.msk [vmem:[%s3425 + $0xa0] sm:$0xff] %vm390, %v3419
      %3437 = vst.msk [vmem:[%s3425 + $0xa8] sm:$0xff] %vm390, %v3420
      %3438 = vst.msk [vmem:[%s3425 + $0xc0] sm:$0xff] %vm390, %v3421
      %3439 = vst.msk [vmem:[%s3425 + $0xc8] sm:$0xff] %vm390, %v3422
      %3440 = vst.msk [vmem:[%s3425 + $0xe0] sm:$0xff] %vm390, %v3423
      %3441 = vst.msk [vmem:[%s3425 + $0xe8] sm:$0xff] %vm390, %v3424
      %s3442 = smul.u32 8, %s20
      %p3443 = scmp.lt.s32.totalorder %s19, 1
      %s3444 = scalar_select %p3443, %s19, 1
      %p3445 = scmp.lt.s32.totalorder %s3442, 15
      %s3446 = scalar_select %p3445, %s3442, 15
      %s3447 = smul.addr %s3446, 4
      %s3448 = smul.addr %s3444, 64
      %s3449 = sadd.s32 %s3447, %s3448
      %s3450 = smul.addr %s3449, 8
      %s3451 = scalar_lea.vmem %s4, %s3450
      // Predicated region
      $region37: #{upsample_forward.1} parent=35 // pred_check
        %p3452 = pneg %p149
      $region38: #{upsample_forward.1} parent=35 // pred_check_branch
        %3454 = sbr.rel (%p3452) target = $region40
      $region39: #{upsample_forward.1} parent=35 // pred_region
        %s3455 = smul.u32 8, %s20
      $region40: #{upsample_forward.1} parent=35 // pred_fallthru
        _
    $region36: #{upsample_forward.1} parent=5 // pred_fallthru
      _
    %p3456 = scmp.le.s32.totalorder 2, %s10
    // Predicated region
    $region41: #{upsample_forward.1} parent=5 // pred_check
      %p3457 = pneg %p3456
    $region42: #{upsample_forward.1} parent=5 // pred_check_branch
      %3459 = sbr.rel (%p3457) target = $region44
    $region43: #{upsample_forward.1} parent=5 // pred_region
      %s3460 = ssub.s32 %s10, 2
      // Predicated region
      $region45: #{upsample_forward.1} parent=43 // pred_check
        %p3461 = pneg %p155
      $region46: #{upsample_forward.1} parent=43 // pred_check_branch
        %3463 = sbr.rel (%p3461) target = $region48
      $region47: #{upsample_forward.1} parent=43 // pred_region
        %s3464 = smul.u32 8, %s22
        %p3465 = scmp.lt.s32.totalorder %s21, 1
        %s3466 = scalar_select %p3465, %s21, 1
        %p3467 = scmp.lt.s32.totalorder %s3464, 15
        %s3468 = scalar_select %p3467, %s3464, 15
        %s3469 = smul.addr %s3468, 4
        %s3470 = smul.addr %s3466, 64
        %s3471 = sadd.s32 %s3469, %s3470
        %s3472 = smul.addr %s3471, 8
        %s3473 = scalar_lea.vmem %s4, %s3472
      $region48: #{upsample_forward.1} parent=43 // pred_fallthru
        _
    $region44: #{upsample_forward.1} parent=5 // pred_fallthru
      _
  $region6: #{upsample_forward.1} parent=0 // loop_footer
    %s14 = sadd.s32 1, %s10
  $region7: #{upsample_forward.1} parent=0 // loop_footer_branch
    %9 = sbr.rel target = $region3
  $region8: #{upsample_forward.1} parent=0 // loop_exit
    _

</llo_original>
